<compile_context>
chip_gen: v6e
topology: v6e:2x2x1
jax: 0.10.0
libtpu: 0.0.40
codegen_flags: <defaults>
</compile_context>

<pallas_src>
import math

import jax
import jax.numpy as jnp
from jax import lax
from jax.experimental import pallas as pl
from jax.experimental.pallas import tpu as pltpu

# ----------------------------- module config ------------------------------- #
IN_CHANNELS = 41
OUT_CHANNELS = 128
KERNEL_SIZE = 10
STRIDE = 2
PADDING = 5
BN_EPS = 1e-5
K_HALF = (KERNEL_SIZE + 1) // 2          # taps per phase for stride 2 -> 5
HALO = K_HALF - 1                        # extra phase columns per tile   -> 4
SUB = 128                                # compute sub-tile width (16-vreg acc)
INV_SQRT2 = 1.0 / math.sqrt(2.0)


def _round_up(v, m):
    return -(-v // m) * m


def _subtiles(t):
    subs, s = [], 0
    while s < t:
        subs.append((s, min(SUB, t - s)))
        s += SUB
    return tuple(subs)


# ------------------------------ forward pass -------------------------------- #
def cnn_block_forward(x, weight, bias, gamma, beta, *, tile_cols=512):
    """x: (N, C_in, L) f32 -> (N, C_out, L_out) f32 (PyTorch NCL layout)."""
    del bias  # cancels exactly under training-mode BatchNorm (see header note)

    n, c_in, l = x.shape
    c_out = weight.shape[0]
    assert c_in == IN_CHANNELS and c_out == OUT_CHANNELS
    assert tile_cols % SUB == 0 and tile_cols >= SUB

    l_out = (l + 2 * PADDING - KERNEL_SIZE) // STRIDE + 1
    t = tile_cols if l_out >= tile_cols else l_out    # output cols per grid step
    g = -(-l_out // t)                                # tiles per batch element
    subs = _subtiles(t)
    use_halo = g > 1                                  # then t % 128 == 0
    cur_w = t if use_halo else _round_up(t + HALO, SUB)
    src_len = g * t + SUB if use_halo else cur_w
    nblk = t // SUB if use_halo else 0

    # Even/odd phase split of the zero-padded input, channel-major, stacked as
    # (N, 2, C_in, src_len) so both phases ride one BlockSpec/DMA.
    x_pad = jnp.pad(x.astype(jnp.float32), ((0, 0), (0, 0), (PADDING, PADDING)))

    def _fit(a):
        cur = a.shape[2]
        if cur < src_len:
            return jnp.pad(a, ((0, 0), (0, 0), (0, src_len - cur)))
        return a[:, :, :src_len]

    xph = jnp.stack([_fit(x_pad[:, :, 0::2]), _fit(x_pad[:, :, 1::2])], axis=1)

    # (C_out, C_in, Kw) -> (Kw, C_out, C_in): one resident matrix per tap.
    w_taps = jnp.transpose(weight, (2, 0, 1)).astype(jnp.float32)

    # ---------------- shared in-kernel conv (static indexing only) ---------- #
    def phase_slab(xcur, xhalo, ph, s0, sz):
        """(C_in, >= sz + HALO) input slab of phase `ph` for output cols
        [j*t + s0, j*t + s0 + sz); loaded once, taps slice it statically."""
        hi = s0 + sz + HALO
        if hi <= cur_w:
            return xcur[0, ph, :, s0:hi]
        # Crossing slab (last sub-tile when use_halo): stitch the lane-aligned
        # final 128 columns of the current block to the 128-column halo block
        # that starts one tile ahead.  Both pieces are 128-lane aligned.
        return jnp.concatenate(
            [xcur[0, ph, :, s0:cur_w], xhalo[0, ph, :, 0:SUB]], axis=1)

    def conv_subtile(xcur, xhalo, w_ref, s0, sz):
        acc = jnp.zeros((OUT_CHANNELS, sz), jnp.float32)
        for ph in range(2):                          # even / odd phase
            slab = phase_slab(xcur, xhalo, ph, s0, sz)
            for s in range(K_HALF):                  # static, unrolled taps
                acc = acc + jnp.dot(w_ref[2 * s + ph], slab[:, s:s + sz],
                                    preferred_element_type=jnp.float32)
        return acc

    # ---------------- pass 1: conv -> per-tile BN partial sums -------------- #
    def stats_kernel(*refs):
        if use_halo:
            xcur, xhalo, w_ref, stats_ref = refs
        else:
            xcur, w_ref, stats_ref = refs
            xhalo = None
        j = pl.program_id(1)
        n_valid = jnp.minimum(t, l_out - j * t)      # real columns in this tile
        tsum = jnp.zeros((1, OUT_CHANNELS), jnp.float32)
        tsq = jnp.zeros((1, OUT_CHANNELS), jnp.float32)
        for s0, sz in subs:                          # static 128-col sub-tiles
            acc = conv_subtile(xcur, xhalo, w_ref, s0, sz)
            lane = lax.broadcasted_iota(jnp.int32, (1, sz), 1)
            mask = (lane < (n_valid - s0)).astype(jnp.float32)
            am = acc * mask                          # keep stats global-exact
            tsum = tsum + jnp.sum(am, axis=1)[None, :]
            tsq = tsq + jnp.sum(am * acc, axis=1)[None, :]
        stats_ref[0, 0, 0:1, :] = tsum
        stats_ref[0, 0, 1:2, :] = tsq

    # ---------------- pass 2: conv recompute + BN affine + GELU ------------- #
    def fused_kernel(*refs):
        if use_halo:
            xcur, xhalo, w_ref, scale_ref, shift_ref, out_ref = refs
        else:
            xcur, w_ref, scale_ref, shift_ref, out_ref = refs
            xhalo = None
        scl = scale_ref[...]                         # (C_out, 1)
        sft = shift_ref[...]
        for s0, sz in subs:
            acc = conv_subtile(xcur, xhalo, w_ref, s0, sz)
            z = acc * scl + sft
            out_ref[0, :, s0:s0 + sz] = 0.5 * z * (1.0 + lax.erf(z * INV_SQRT2))
        # TODO(synk): Dropout(p=0.1) omitted (identity / eval semantics); a
        # training variant needs pltpu.prng_seed + pltpu.prng_random_bits.

    # ---------------- BlockSpecs & calls ------------------------------------ #
    if use_halo:
        x_specs = [
            pl.BlockSpec((1, 2, c_in, cur_w), lambda b, j: (b, 0, 0, j)),
            pl.BlockSpec((1, 2, c_in, SUB),
                         lambda b, j: (b, 0, 0, (j + 1) * nblk)),
        ]
        x_args = (xph, xph)
    else:
        x_specs = [pl.BlockSpec((1, 2, c_in, cur_w), lambda b, j: (b, 0, 0, 0))]
        x_args = (xph,)
    w_spec = pl.BlockSpec((KERNEL_SIZE, c_out, c_in), lambda b, j: (0, 0, 0))
    vec_spec = pl.BlockSpec((c_out, 1), lambda b, j: (0, 0))
    params = pltpu.CompilerParams(dimension_semantics=("parallel", "parallel"))

    stats = pl.pallas_call(
        stats_kernel,
        out_shape=jax.ShapeDtypeStruct((n, g, 2, c_out), jnp.float32),
        grid=(n, g),
        in_specs=x_specs + [w_spec],
        out_specs=pl.BlockSpec((1, 1, 2, c_out), lambda b, j: (b, j, 0, 0)),
        compiler_params=params,
    )(*x_args, w_taps)

    # Tiny global reduction + folded BN affine (once per channel, in JAX):
    #   scale = gamma * rsqrt(var + eps);  shift = beta - mean * scale.
    m_total = n * l_out
    mean = jnp.sum(stats[:, :, 0, :], axis=(0, 1)) / m_total
    var = jnp.sum(stats[:, :, 1, :], axis=(0, 1)) / m_total - mean * mean
    var = jnp.maximum(var, 0.0)                  # guard E[x^2]-E[x]^2 rounding
    inv = lax.rsqrt(var + BN_EPS)
    scale = (gamma * inv).astype(jnp.float32).reshape(c_out, 1)
    shift = (beta - mean * gamma * inv).astype(jnp.float32).reshape(c_out, 1)

    out = pl.pallas_call(
        fused_kernel,
        out_shape=jax.ShapeDtypeStruct((n, c_out, l_out), jnp.float32),
        grid=(n, g),
        in_specs=x_specs + [w_spec, vec_spec, vec_spec],
        out_specs=pl.BlockSpec((1, c_out, t), lambda b, j: (b, 0, j)),
        compiler_params=params,
    )(*x_args, w_taps, scale, shift)

    return out


# --------------------------- pure-JAX reference ----------------------------- #
def cnn_block_reference(x, weight, bias, gamma, beta):
    y = lax.conv_general_dilated(
        x, weight, window_strides=(STRIDE,), padding=[(PADDING, PADDING)],
        dimension_numbers=("NCH", "OIH", "NCH"),
        precision=lax.Precision.HIGHEST)
    y = y + bias[None, :, None]
    mean = jnp.mean(y, axis=(0, 2), keepdims=True)
    var = jnp.var(y, axis=(0, 2), keepdims=True)
    z = (y - mean) / jnp.sqrt(var + BN_EPS)
    z = z * gamma[None, :, None] + beta[None, :, None]
    return 0.5 * z * (1.0 + lax.erf(z / math.sqrt(2.0)))


# ----------------------------------- main ----------------------------------- #
if __name__ == "__main__":
    key = jax.random.PRNGKey(0)
    kx1, kx2, kx3, kw, kb, kg, kbe = jax.random.split(key, 7)

    fan_in = IN_CHANNELS * KERNEL_SIZE
    bound = 1.0 / math.sqrt(fan_in)
    weight = jax.random.uniform(
        kw, (OUT_CHANNELS, IN_CHANNELS, KERNEL_SIZE), jnp.float32, -bound, bound)
    bias = jax.random.uniform(kb, (OUT_CHANNELS,), jnp.float32, -bound, bound)
    gamma = 1.0 + 0.1 * jax.random.normal(kg, (OUT_CHANNELS,), jnp.float32)
    beta = 0.1 * jax.random.normal(kbe, (OUT_CHANNELS,), jnp.float32)

    fwd = jax.jit(cnn_block_forward, static_argnames=("tile_cols",))

    def run_case(xkey, shape, tile_cols):
        x = jax.random.normal(xkey, shape, dtype=jnp.float32)
        out = jax.block_until_ready(
            fwd(x, weight, bias, gamma, beta, tile_cols=tile_cols))
        ref = cnn_block_reference(x, weight, bias, gamma, beta)
        assert out.shape == ref.shape, (out.shape, ref.shape)
        err = jnp.max(jnp.abs(out - ref))
        assert jnp.allclose(out, ref, atol=2e-4, rtol=2e-4), f"mismatch {err}"

    # Case 1: batch=2, L=16 -> L_out=9 (single small tile per batch element).
    run_case(kx1, (2, IN_CHANNELS, 16), 512)
    # Case 2: batch=1, odd L=37 -> L_out=19.
    run_case(kx2, (1, IN_CHANNELS, 37), 512)
    # Case 3: batch=2, L=620 -> L_out=311 with tile_cols=256: multi-tile grid,
    # 128-col compute sub-tiles, halo stitching from the next block, masked
    # tail columns in the BN statistics, and a ragged final output block.
    run_case(kx3, (2, IN_CHANNELS, 620), 256)

    print("KERNEL_OK")
</pallas_src>

<mosaic_0001>
module attributes {stable_mosaic.version = 11 : i64} {
  func.func @stats_kernel(%arg0: i32, %arg1: i32, %arg2: memref<1x2x41x128xf32, #tpu.memory_space<vmem>>, %arg3: memref<10x128x41xf32, #tpu.memory_space<vmem>>, %arg4: memref<1x1x2x128xf32, #tpu.memory_space<vmem>>) attributes {dimension_semantics = [#tpu.dimension_semantics<parallel>, #tpu.dimension_semantics<parallel>], iteration_bounds = array<i64: 2, 1>, scalar_prefetch = 0 : i64, scratch_operands = 0 : i64, tpu.core_type = #tpu.core_type<tc>, window_params = [{transform_indices = @transform_0, window_bounds = array<i64: 1, 2, 41, 128>}, {pipeline_mode = #tpu.pipeline_mode<synchronous>, transform_indices = @transform_1, window_bounds = array<i64: 10, 128, 41>}, {transform_indices = @transform_2, window_bounds = array<i64: 1, 1, 2, 128>}]} {
    %c9_i32 = arith.constant 9 : i32
    %0 = arith.muli %arg1, %c9_i32 : i32
    %c9_i32_0 = arith.constant 9 : i32
    %1 = arith.subi %c9_i32_0, %0 : i32
    %c9_i32_1 = arith.constant 9 : i32
    %2 = arith.minsi %c9_i32_1, %1 : i32
    %cst = arith.constant 0.000000e+00 : f32
    %3 = vector.broadcast %cst : f32 to vector<1x128xf32>
    %cst_2 = arith.constant 0.000000e+00 : f32
    %4 = vector.broadcast %cst_2 : f32 to vector<1x128xf32>
    %cst_3 = arith.constant 0.000000e+00 : f32
    %5 = vector.broadcast %cst_3 : f32 to vector<128x9xf32>
    %c0 = arith.constant 0 : index
    %c0_4 = arith.constant 0 : index
    %c0_5 = arith.constant 0 : index
    %c0_6 = arith.constant 0 : index
    %6 = vector.load %arg2[%c0, %c0_4, %c0_5, %c0_6] : memref<1x2x41x128xf32, #tpu.memory_space<vmem>>, vector<1x1x41x13xf32>
    %7 = vector.shape_cast %6 : vector<1x1x41x13xf32> to vector<41x13xf32>
    %c0_7 = arith.constant 0 : index
    %c0_8 = arith.constant 0 : index
    %c0_9 = arith.constant 0 : index
    %8 = vector.load %arg3[%c0_7, %c0_8, %c0_9] : memref<10x128x41xf32, #tpu.memory_space<vmem>>, vector<1x128x41xf32>
    %9 = vector.shape_cast %8 : vector<1x128x41xf32> to vector<128x41xf32>
    %10 = vector.extract_strided_slice %7 {offsets = [0, 0], sizes = [41, 9], strides = [1, 1]} : vector<41x13xf32> to vector<41x9xf32>
    %cst_10 = arith.constant dense<0.000000e+00> : vector<128x9xf32>
    %11 = tpu.matmul %9, %10, %cst_10 {dimension_numbers = #tpu.dot_dimension_numbers<[1], [0], [0], [1], [0, 0, 1, 1], [], []>} : vector<128x41xf32>, vector<41x9xf32>, vector<128x9xf32> -> vector<128x9xf32>
    %12 = arith.addf %5, %11 : vector<128x9xf32>
    %c2 = arith.constant 2 : index
    %c0_11 = arith.constant 0 : index
    %c0_12 = arith.constant 0 : index
    %13 = vector.load %arg3[%c2, %c0_11, %c0_12] : memref<10x128x41xf32, #tpu.memory_space<vmem>>, vector<1x128x41xf32>
    %14 = vector.shape_cast %13 : vector<1x128x41xf32> to vector<128x41xf32>
    %15 = vector.extract_strided_slice %7 {offsets = [0, 1], sizes = [41, 9], strides = [1, 1]} : vector<41x13xf32> to vector<41x9xf32>
    %cst_13 = arith.constant dense<0.000000e+00> : vector<128x9xf32>
    %16 = tpu.matmul %14, %15, %cst_13 {dimension_numbers = #tpu.dot_dimension_numbers<[1], [0], [0], [1], [0, 0, 1, 1], [], []>} : vector<128x41xf32>, vector<41x9xf32>, vector<128x9xf32> -> vector<128x9xf32>
    %17 = arith.addf %12, %16 : vector<128x9xf32>
    %c4 = arith.constant 4 : index
    %c0_14 = arith.constant 0 : index
    %c0_15 = arith.constant 0 : index
    %18 = vector.load %arg3[%c4, %c0_14, %c0_15] : memref<10x128x41xf32, #tpu.memory_space<vmem>>, vector<1x128x41xf32>
    %19 = vector.shape_cast %18 : vector<1x128x41xf32> to vector<128x41xf32>
    %20 = vector.extract_strided_slice %7 {offsets = [0, 2], sizes = [41, 9], strides = [1, 1]} : vector<41x13xf32> to vector<41x9xf32>
    %cst_16 = arith.constant dense<0.000000e+00> : vector<128x9xf32>
    %21 = tpu.matmul %19, %20, %cst_16 {dimension_numbers = #tpu.dot_dimension_numbers<[1], [0], [0], [1], [0, 0, 1, 1], [], []>} : vector<128x41xf32>, vector<41x9xf32>, vector<128x9xf32> -> vector<128x9xf32>
    %22 = arith.addf %17, %21 : vector<128x9xf32>
    %c6 = arith.constant 6 : index
    %c0_17 = arith.constant 0 : index
    %c0_18 = arith.constant 0 : index
    %23 = vector.load %arg3[%c6, %c0_17, %c0_18] : memref<10x128x41xf32, #tpu.memory_space<vmem>>, vector<1x128x41xf32>
    %24 = vector.shape_cast %23 : vector<1x128x41xf32> to vector<128x41xf32>
    %25 = vector.extract_strided_slice %7 {offsets = [0, 3], sizes = [41, 9], strides = [1, 1]} : vector<41x13xf32> to vector<41x9xf32>
    %cst_19 = arith.constant dense<0.000000e+00> : vector<128x9xf32>
    %26 = tpu.matmul %24, %25, %cst_19 {dimension_numbers = #tpu.dot_dimension_numbers<[1], [0], [0], [1], [0, 0, 1, 1], [], []>} : vector<128x41xf32>, vector<41x9xf32>, vector<128x9xf32> -> vector<128x9xf32>
    %27 = arith.addf %22, %26 : vector<128x9xf32>
    %c8 = arith.constant 8 : index
    %c0_20 = arith.constant 0 : index
    %c0_21 = arith.constant 0 : index
    %28 = vector.load %arg3[%c8, %c0_20, %c0_21] : memref<10x128x41xf32, #tpu.memory_space<vmem>>, vector<1x128x41xf32>
    %29 = vector.shape_cast %28 : vector<1x128x41xf32> to vector<128x41xf32>
    %30 = vector.extract_strided_slice %7 {offsets = [0, 4], sizes = [41, 9], strides = [1, 1]} : vector<41x13xf32> to vector<41x9xf32>
    %cst_22 = arith.constant dense<0.000000e+00> : vector<128x9xf32>
    %31 = tpu.matmul %29, %30, %cst_22 {dimension_numbers = #tpu.dot_dimension_numbers<[1], [0], [0], [1], [0, 0, 1, 1], [], []>} : vector<128x41xf32>, vector<41x9xf32>, vector<128x9xf32> -> vector<128x9xf32>
    %32 = arith.addf %27, %31 : vector<128x9xf32>
    %c0_23 = arith.constant 0 : index
    %c1 = arith.constant 1 : index
    %c0_24 = arith.constant 0 : index
    %c0_25 = arith.constant 0 : index
    %33 = vector.load %arg2[%c0_23, %c1, %c0_24, %c0_25] : memref<1x2x41x128xf32, #tpu.memory_space<vmem>>, vector<1x1x41x13xf32>
    %34 = vector.shape_cast %33 : vector<1x1x41x13xf32> to vector<41x13xf32>
    %c1_26 = arith.constant 1 : index
    %c0_27 = arith.constant 0 : index
    %c0_28 = arith.constant 0 : index
    %35 = vector.load %arg3[%c1_26, %c0_27, %c0_28] : memref<10x128x41xf32, #tpu.memory_space<vmem>>, vector<1x128x41xf32>
    %36 = vector.shape_cast %35 : vector<1x128x41xf32> to vector<128x41xf32>
    %37 = vector.extract_strided_slice %34 {offsets = [0, 0], sizes = [41, 9], strides = [1, 1]} : vector<41x13xf32> to vector<41x9xf32>
    %cst_29 = arith.constant dense<0.000000e+00> : vector<128x9xf32>
    %38 = tpu.matmul %36, %37, %cst_29 {dimension_numbers = #tpu.dot_dimension_numbers<[1], [0], [0], [1], [0, 0, 1, 1], [], []>} : vector<128x41xf32>, vector<41x9xf32>, vector<128x9xf32> -> vector<128x9xf32>
    %39 = arith.addf %32, %38 : vector<128x9xf32>
    %c3 = arith.constant 3 : index
    %c0_30 = arith.constant 0 : index
    %c0_31 = arith.constant 0 : index
    %40 = vector.load %arg3[%c3, %c0_30, %c0_31] : memref<10x128x41xf32, #tpu.memory_space<vmem>>, vector<1x128x41xf32>
    %41 = vector.shape_cast %40 : vector<1x128x41xf32> to vector<128x41xf32>
    %42 = vector.extract_strided_slice %34 {offsets = [0, 1], sizes = [41, 9], strides = [1, 1]} : vector<41x13xf32> to vector<41x9xf32>
    %cst_32 = arith.constant dense<0.000000e+00> : vector<128x9xf32>
    %43 = tpu.matmul %41, %42, %cst_32 {dimension_numbers = #tpu.dot_dimension_numbers<[1], [0], [0], [1], [0, 0, 1, 1], [], []>} : vector<128x41xf32>, vector<41x9xf32>, vector<128x9xf32> -> vector<128x9xf32>
    %44 = arith.addf %39, %43 : vector<128x9xf32>
    %c5 = arith.constant 5 : index
    %c0_33 = arith.constant 0 : index
    %c0_34 = arith.constant 0 : index
    %45 = vector.load %arg3[%c5, %c0_33, %c0_34] : memref<10x128x41xf32, #tpu.memory_space<vmem>>, vector<1x128x41xf32>
    %46 = vector.shape_cast %45 : vector<1x128x41xf32> to vector<128x41xf32>
    %47 = vector.extract_strided_slice %34 {offsets = [0, 2], sizes = [41, 9], strides = [1, 1]} : vector<41x13xf32> to vector<41x9xf32>
    %cst_35 = arith.constant dense<0.000000e+00> : vector<128x9xf32>
    %48 = tpu.matmul %46, %47, %cst_35 {dimension_numbers = #tpu.dot_dimension_numbers<[1], [0], [0], [1], [0, 0, 1, 1], [], []>} : vector<128x41xf32>, vector<41x9xf32>, vector<128x9xf32> -> vector<128x9xf32>
    %49 = arith.addf %44, %48 : vector<128x9xf32>
    %c7 = arith.constant 7 : index
    %c0_36 = arith.constant 0 : index
    %c0_37 = arith.constant 0 : index
    %50 = vector.load %arg3[%c7, %c0_36, %c0_37] : memref<10x128x41xf32, #tpu.memory_space<vmem>>, vector<1x128x41xf32>
    %51 = vector.shape_cast %50 : vector<1x128x41xf32> to vector<128x41xf32>
    %52 = vector.extract_strided_slice %34 {offsets = [0, 3], sizes = [41, 9], strides = [1, 1]} : vector<41x13xf32> to vector<41x9xf32>
    %cst_38 = arith.constant dense<0.000000e+00> : vector<128x9xf32>
    %53 = tpu.matmul %51, %52, %cst_38 {dimension_numbers = #tpu.dot_dimension_numbers<[1], [0], [0], [1], [0, 0, 1, 1], [], []>} : vector<128x41xf32>, vector<41x9xf32>, vector<128x9xf32> -> vector<128x9xf32>
    %54 = arith.addf %49, %53 : vector<128x9xf32>
    %c9 = arith.constant 9 : index
    %c0_39 = arith.constant 0 : index
    %c0_40 = arith.constant 0 : index
    %55 = vector.load %arg3[%c9, %c0_39, %c0_40] : memref<10x128x41xf32, #tpu.memory_space<vmem>>, vector<1x128x41xf32>
    %56 = vector.shape_cast %55 : vector<1x128x41xf32> to vector<128x41xf32>
    %57 = vector.extract_strided_slice %34 {offsets = [0, 4], sizes = [41, 9], strides = [1, 1]} : vector<41x13xf32> to vector<41x9xf32>
    %cst_41 = arith.constant dense<0.000000e+00> : vector<128x9xf32>
    %58 = tpu.matmul %56, %57, %cst_41 {dimension_numbers = #tpu.dot_dimension_numbers<[1], [0], [0], [1], [0, 0, 1, 1], [], []>} : vector<128x41xf32>, vector<41x9xf32>, vector<128x9xf32> -> vector<128x9xf32>
    %59 = arith.addf %54, %58 : vector<128x9xf32>
    %60 = tpu.iota {dimensions = array<i32: 1>} : vector<1x9xi32>
    %c0_i32 = arith.constant 0 : i32
    %61 = arith.subi %2, %c0_i32 : i32
    %62 = vector.broadcast %61 : i32 to vector<1x9xi32>
    %63 = arith.cmpi slt, %60, %62 : vector<1x9xi32>
    %64 = arith.extui %63 : vector<1x9xi1> to vector<1x9xi32>
    %65 = arith.sitofp %64 : vector<1x9xi32> to vector<1x9xf32>
    %66 = vector.broadcast %65 : vector<1x9xf32> to vector<128x9xf32>
    %67 = arith.mulf %59, %66 : vector<128x9xf32>
    %cst_42 = arith.constant dense<0.000000e+00> : vector<128xf32>
    %68 = vector.multi_reduction <add>, %67, %cst_42 [1] : vector<128x9xf32> to vector<128xf32>
    %69 = vector.shape_cast %68 : vector<128xf32> to vector<1x128xf32>
    %70 = arith.addf %3, %69 : vector<1x128xf32>
    %71 = arith.mulf %67, %59 : vector<128x9xf32>
    %cst_43 = arith.constant dense<0.000000e+00> : vector<128xf32>
    %72 = vector.multi_reduction <add>, %71, %cst_43 [1] : vector<128x9xf32> to vector<128xf32>
    %73 = vector.shape_cast %72 : vector<128xf32> to vector<1x128xf32>
    %74 = arith.addf %4, %73 : vector<1x128xf32>
    %c0_44 = arith.constant 0 : index
    %c0_45 = arith.constant 0 : index
    %c0_46 = arith.constant 0 : index
    %c0_47 = arith.constant 0 : index
    %75 = vector.load %arg4[%c0_44, %c0_45, %c0_46, %c0_47] : memref<1x1x2x128xf32, #tpu.memory_space<vmem>>, vector<1x1x1x128xf32>
    %76 = vector.shape_cast %75 : vector<1x1x1x128xf32> to vector<1x128xf32>
    %77 = vector.shape_cast %70 : vector<1x128xf32> to vector<1x1x1x128xf32>
    tpu.vector_store %arg4[%c0_44, %c0_45, %c0_46, %c0_47], %77 {strides = array<i32>} : memref<1x1x2x128xf32, #tpu.memory_space<vmem>>, vector<1x1x1x128xf32>,
    %c0_48 = arith.constant 0 : index
    %c0_49 = arith.constant 0 : index
    %c1_50 = arith.constant 1 : index
    %c0_51 = arith.constant 0 : index
    %78 = vector.load %arg4[%c0_48, %c0_49, %c1_50, %c0_51] : memref<1x1x2x128xf32, #tpu.memory_space<vmem>>, vector<1x1x1x128xf32>
    %79 = vector.shape_cast %78 : vector<1x1x1x128xf32> to vector<1x128xf32>
    %80 = vector.shape_cast %74 : vector<1x128xf32> to vector<1x1x1x128xf32>
    tpu.vector_store %arg4[%c0_48, %c0_49, %c1_50, %c0_51], %80 {strides = array<i32>} : memref<1x1x2x128xf32, #tpu.memory_space<vmem>>, vector<1x1x1x128xf32>,
    return
  }
  func.func @transform_0(%arg0: i32, %arg1: i32) -> (i32, i32, i32, i32) {
    %c0_i32 = arith.constant 0 : i32
    %c0_i32_0 = arith.constant 0 : i32
    %c0_i32_1 = arith.constant 0 : i32
    %c0_i32_2 = arith.constant 0 : i32
    return %arg0, %c0_i32, %c0_i32_0, %c0_i32_1 : i32, i32, i32, i32
  }
  func.func @transform_1(%arg0: i32, %arg1: i32) -> (i32, i32, i32) {
    %c0_i32 = arith.constant 0 : i32
    %c0_i32_0 = arith.constant 0 : i32
    %c0_i32_1 = arith.constant 0 : i32
    %c0_i32_2 = arith.constant 0 : i32
    return %c0_i32, %c0_i32_0, %c0_i32_1 : i32, i32, i32
  }
  func.func @transform_2(%arg0: i32, %arg1: i32) -> (i32, i32, i32, i32) {
    %c0_i32 = arith.constant 0 : i32
    %c0_i32_0 = arith.constant 0 : i32
    %c0_i32_1 = arith.constant 0 : i32
    return %arg0, %arg1, %c0_i32, %c0_i32_0 : i32, i32, i32, i32
  }
}

module attributes {stable_mosaic.version = 11 : i64} {
  func.func @fused_kernel(%arg0: i32, %arg1: i32, %arg2: memref<1x2x41x128xf32, #tpu.memory_space<vmem>>, %arg3: memref<10x128x41xf32, #tpu.memory_space<vmem>>, %arg4: memref<128x1xf32, #tpu.memory_space<vmem>>, %arg5: memref<128x1xf32, #tpu.memory_space<vmem>>, %arg6: memref<1x128x9xf32, #tpu.memory_space<vmem>>) attributes {dimension_semantics = [#tpu.dimension_semantics<parallel>, #tpu.dimension_semantics<parallel>], iteration_bounds = array<i64: 2, 1>, scalar_prefetch = 0 : i64, scratch_operands = 0 : i64, tpu.core_type = #tpu.core_type<tc>, window_params = [{transform_indices = @transform_0, window_bounds = array<i64: 1, 2, 41, 128>}, {pipeline_mode = #tpu.pipeline_mode<synchronous>, transform_indices = @transform_1, window_bounds = array<i64: 10, 128, 41>}, {pipeline_mode = #tpu.pipeline_mode<synchronous>, transform_indices = @transform_2, window_bounds = array<i64: 128, 1>}, {pipeline_mode = #tpu.pipeline_mode<synchronous>, transform_indices = @transform_3, window_bounds = array<i64: 128, 1>}, {transform_indices = @transform_4, window_bounds = array<i64: 1, 128, 9>}]} {
    %c0 = arith.constant 0 : index
    %c0_0 = arith.constant 0 : index
    %0 = vector.load %arg4[%c0, %c0_0] : memref<128x1xf32, #tpu.memory_space<vmem>>, vector<128x1xf32>
    %c0_1 = arith.constant 0 : index
    %c0_2 = arith.constant 0 : index
    %1 = vector.load %arg5[%c0_1, %c0_2] : memref<128x1xf32, #tpu.memory_space<vmem>>, vector<128x1xf32>
    %cst = arith.constant 0.000000e+00 : f32
    %2 = vector.broadcast %cst : f32 to vector<128x9xf32>
    %c0_3 = arith.constant 0 : index
    %c0_4 = arith.constant 0 : index
    %c0_5 = arith.constant 0 : index
    %c0_6 = arith.constant 0 : index
    %3 = vector.load %arg2[%c0_3, %c0_4, %c0_5, %c0_6] : memref<1x2x41x128xf32, #tpu.memory_space<vmem>>, vector<1x1x41x13xf32>
    %4 = vector.shape_cast %3 : vector<1x1x41x13xf32> to vector<41x13xf32>
    %c0_7 = arith.constant 0 : index
    %c0_8 = arith.constant 0 : index
    %c0_9 = arith.constant 0 : index
    %5 = vector.load %arg3[%c0_7, %c0_8, %c0_9] : memref<10x128x41xf32, #tpu.memory_space<vmem>>, vector<1x128x41xf32>
    %6 = vector.shape_cast %5 : vector<1x128x41xf32> to vector<128x41xf32>
    %7 = vector.extract_strided_slice %4 {offsets = [0, 0], sizes = [41, 9], strides = [1, 1]} : vector<41x13xf32> to vector<41x9xf32>
    %cst_10 = arith.constant dense<0.000000e+00> : vector<128x9xf32>
    %8 = tpu.matmul %6, %7, %cst_10 {dimension_numbers = #tpu.dot_dimension_numbers<[1], [0], [0], [1], [0, 0, 1, 1], [], []>} : vector<128x41xf32>, vector<41x9xf32>, vector<128x9xf32> -> vector<128x9xf32>
    %9 = arith.addf %2, %8 : vector<128x9xf32>
    %c2 = arith.constant 2 : index
    %c0_11 = arith.constant 0 : index
    %c0_12 = arith.constant 0 : index
    %10 = vector.load %arg3[%c2, %c0_11, %c0_12] : memref<10x128x41xf32, #tpu.memory_space<vmem>>, vector<1x128x41xf32>
    %11 = vector.shape_cast %10 : vector<1x128x41xf32> to vector<128x41xf32>
    %12 = vector.extract_strided_slice %4 {offsets = [0, 1], sizes = [41, 9], strides = [1, 1]} : vector<41x13xf32> to vector<41x9xf32>
    %cst_13 = arith.constant dense<0.000000e+00> : vector<128x9xf32>
    %13 = tpu.matmul %11, %12, %cst_13 {dimension_numbers = #tpu.dot_dimension_numbers<[1], [0], [0], [1], [0, 0, 1, 1], [], []>} : vector<128x41xf32>, vector<41x9xf32>, vector<128x9xf32> -> vector<128x9xf32>
    %14 = arith.addf %9, %13 : vector<128x9xf32>
    %c4 = arith.constant 4 : index
    %c0_14 = arith.constant 0 : index
    %c0_15 = arith.constant 0 : index
    %15 = vector.load %arg3[%c4, %c0_14, %c0_15] : memref<10x128x41xf32, #tpu.memory_space<vmem>>, vector<1x128x41xf32>
    %16 = vector.shape_cast %15 : vector<1x128x41xf32> to vector<128x41xf32>
    %17 = vector.extract_strided_slice %4 {offsets = [0, 2], sizes = [41, 9], strides = [1, 1]} : vector<41x13xf32> to vector<41x9xf32>
    %cst_16 = arith.constant dense<0.000000e+00> : vector<128x9xf32>
    %18 = tpu.matmul %16, %17, %cst_16 {dimension_numbers = #tpu.dot_dimension_numbers<[1], [0], [0], [1], [0, 0, 1, 1], [], []>} : vector<128x41xf32>, vector<41x9xf32>, vector<128x9xf32> -> vector<128x9xf32>
    %19 = arith.addf %14, %18 : vector<128x9xf32>
    %c6 = arith.constant 6 : index
    %c0_17 = arith.constant 0 : index
    %c0_18 = arith.constant 0 : index
    %20 = vector.load %arg3[%c6, %c0_17, %c0_18] : memref<10x128x41xf32, #tpu.memory_space<vmem>>, vector<1x128x41xf32>
    %21 = vector.shape_cast %20 : vector<1x128x41xf32> to vector<128x41xf32>
    %22 = vector.extract_strided_slice %4 {offsets = [0, 3], sizes = [41, 9], strides = [1, 1]} : vector<41x13xf32> to vector<41x9xf32>
    %cst_19 = arith.constant dense<0.000000e+00> : vector<128x9xf32>
    %23 = tpu.matmul %21, %22, %cst_19 {dimension_numbers = #tpu.dot_dimension_numbers<[1], [0], [0], [1], [0, 0, 1, 1], [], []>} : vector<128x41xf32>, vector<41x9xf32>, vector<128x9xf32> -> vector<128x9xf32>
    %24 = arith.addf %19, %23 : vector<128x9xf32>
    %c8 = arith.constant 8 : index
    %c0_20 = arith.constant 0 : index
    %c0_21 = arith.constant 0 : index
    %25 = vector.load %arg3[%c8, %c0_20, %c0_21] : memref<10x128x41xf32, #tpu.memory_space<vmem>>, vector<1x128x41xf32>
    %26 = vector.shape_cast %25 : vector<1x128x41xf32> to vector<128x41xf32>
    %27 = vector.extract_strided_slice %4 {offsets = [0, 4], sizes = [41, 9], strides = [1, 1]} : vector<41x13xf32> to vector<41x9xf32>
    %cst_22 = arith.constant dense<0.000000e+00> : vector<128x9xf32>
    %28 = tpu.matmul %26, %27, %cst_22 {dimension_numbers = #tpu.dot_dimension_numbers<[1], [0], [0], [1], [0, 0, 1, 1], [], []>} : vector<128x41xf32>, vector<41x9xf32>, vector<128x9xf32> -> vector<128x9xf32>
    %29 = arith.addf %24, %28 : vector<128x9xf32>
    %c0_23 = arith.constant 0 : index
    %c1 = arith.constant 1 : index
    %c0_24 = arith.constant 0 : index
    %c0_25 = arith.constant 0 : index
    %30 = vector.load %arg2[%c0_23, %c1, %c0_24, %c0_25] : memref<1x2x41x128xf32, #tpu.memory_space<vmem>>, vector<1x1x41x13xf32>
    %31 = vector.shape_cast %30 : vector<1x1x41x13xf32> to vector<41x13xf32>
    %c1_26 = arith.constant 1 : index
    %c0_27 = arith.constant 0 : index
    %c0_28 = arith.constant 0 : index
    %32 = vector.load %arg3[%c1_26, %c0_27, %c0_28] : memref<10x128x41xf32, #tpu.memory_space<vmem>>, vector<1x128x41xf32>
    %33 = vector.shape_cast %32 : vector<1x128x41xf32> to vector<128x41xf32>
    %34 = vector.extract_strided_slice %31 {offsets = [0, 0], sizes = [41, 9], strides = [1, 1]} : vector<41x13xf32> to vector<41x9xf32>
    %cst_29 = arith.constant dense<0.000000e+00> : vector<128x9xf32>
    %35 = tpu.matmul %33, %34, %cst_29 {dimension_numbers = #tpu.dot_dimension_numbers<[1], [0], [0], [1], [0, 0, 1, 1], [], []>} : vector<128x41xf32>, vector<41x9xf32>, vector<128x9xf32> -> vector<128x9xf32>
    %36 = arith.addf %29, %35 : vector<128x9xf32>
    %c3 = arith.constant 3 : index
    %c0_30 = arith.constant 0 : index
    %c0_31 = arith.constant 0 : index
    %37 = vector.load %arg3[%c3, %c0_30, %c0_31] : memref<10x128x41xf32, #tpu.memory_space<vmem>>, vector<1x128x41xf32>
    %38 = vector.shape_cast %37 : vector<1x128x41xf32> to vector<128x41xf32>
    %39 = vector.extract_strided_slice %31 {offsets = [0, 1], sizes = [41, 9], strides = [1, 1]} : vector<41x13xf32> to vector<41x9xf32>
    %cst_32 = arith.constant dense<0.000000e+00> : vector<128x9xf32>
    %40 = tpu.matmul %38, %39, %cst_32 {dimension_numbers = #tpu.dot_dimension_numbers<[1], [0], [0], [1], [0, 0, 1, 1], [], []>} : vector<128x41xf32>, vector<41x9xf32>, vector<128x9xf32> -> vector<128x9xf32>
    %41 = arith.addf %36, %40 : vector<128x9xf32>
    %c5 = arith.constant 5 : index
    %c0_33 = arith.constant 0 : index
    %c0_34 = arith.constant 0 : index
    %42 = vector.load %arg3[%c5, %c0_33, %c0_34] : memref<10x128x41xf32, #tpu.memory_space<vmem>>, vector<1x128x41xf32>
    %43 = vector.shape_cast %42 : vector<1x128x41xf32> to vector<128x41xf32>
    %44 = vector.extract_strided_slice %31 {offsets = [0, 2], sizes = [41, 9], strides = [1, 1]} : vector<41x13xf32> to vector<41x9xf32>
    %cst_35 = arith.constant dense<0.000000e+00> : vector<128x9xf32>
    %45 = tpu.matmul %43, %44, %cst_35 {dimension_numbers = #tpu.dot_dimension_numbers<[1], [0], [0], [1], [0, 0, 1, 1], [], []>} : vector<128x41xf32>, vector<41x9xf32>, vector<128x9xf32> -> vector<128x9xf32>
    %46 = arith.addf %41, %45 : vector<128x9xf32>
    %c7 = arith.constant 7 : index
    %c0_36 = arith.constant 0 : index
    %c0_37 = arith.constant 0 : index
    %47 = vector.load %arg3[%c7, %c0_36, %c0_37] : memref<10x128x41xf32, #tpu.memory_space<vmem>>, vector<1x128x41xf32>
    %48 = vector.shape_cast %47 : vector<1x128x41xf32> to vector<128x41xf32>
    %49 = vector.extract_strided_slice %31 {offsets = [0, 3], sizes = [41, 9], strides = [1, 1]} : vector<41x13xf32> to vector<41x9xf32>
    %cst_38 = arith.constant dense<0.000000e+00> : vector<128x9xf32>
    %50 = tpu.matmul %48, %49, %cst_38 {dimension_numbers = #tpu.dot_dimension_numbers<[1], [0], [0], [1], [0, 0, 1, 1], [], []>} : vector<128x41xf32>, vector<41x9xf32>, vector<128x9xf32> -> vector<128x9xf32>
    %51 = arith.addf %46, %50 : vector<128x9xf32>
    %c9 = arith.constant 9 : index
    %c0_39 = arith.constant 0 : index
    %c0_40 = arith.constant 0 : index
    %52 = vector.load %arg3[%c9, %c0_39, %c0_40] : memref<10x128x41xf32, #tpu.memory_space<vmem>>, vector<1x128x41xf32>
    %53 = vector.shape_cast %52 : vector<1x128x41xf32> to vector<128x41xf32>
    %54 = vector.extract_strided_slice %31 {offsets = [0, 4], sizes = [41, 9], strides = [1, 1]} : vector<41x13xf32> to vector<41x9xf32>
    %cst_41 = arith.constant dense<0.000000e+00> : vector<128x9xf32>
    %55 = tpu.matmul %53, %54, %cst_41 {dimension_numbers = #tpu.dot_dimension_numbers<[1], [0], [0], [1], [0, 0, 1, 1], [], []>} : vector<128x41xf32>, vector<41x9xf32>, vector<128x9xf32> -> vector<128x9xf32>
    %56 = arith.addf %51, %55 : vector<128x9xf32>
    %57 = vector.broadcast %0 : vector<128x1xf32> to vector<128x9xf32>
    %58 = arith.mulf %56, %57 : vector<128x9xf32>
    %59 = vector.broadcast %1 : vector<128x1xf32> to vector<128x9xf32>
    %60 = arith.addf %58, %59 : vector<128x9xf32>
    %cst_42 = arith.constant 5.000000e-01 : f32
    %61 = vector.broadcast %cst_42 : f32 to vector<128x9xf32>
    %62 = arith.mulf %61, %60 : vector<128x9xf32>
    %cst_43 = arith.constant 0.707106769 : f32
    %63 = vector.broadcast %cst_43 : f32 to vector<128x9xf32>
    %64 = arith.mulf %60, %63 : vector<128x9xf32>
    %65 = math.erf %64 : vector<128x9xf32>
    %cst_44 = arith.constant 1.000000e+00 : f32
    %66 = vector.broadcast %cst_44 : f32 to vector<128x9xf32>
    %67 = arith.addf %66, %65 : vector<128x9xf32>
    %68 = arith.mulf %62, %67 : vector<128x9xf32>
    %c0_45 = arith.constant 0 : index
    %c0_46 = arith.constant 0 : index
    %c0_47 = arith.constant 0 : index
    %69 = vector.load %arg6[%c0_45, %c0_46, %c0_47] : memref<1x128x9xf32, #tpu.memory_space<vmem>>, vector<1x128x9xf32>
    %70 = vector.shape_cast %69 : vector<1x128x9xf32> to vector<128x9xf32>
    %71 = vector.shape_cast %68 : vector<128x9xf32> to vector<1x128x9xf32>
    tpu.vector_store %arg6[%c0_45, %c0_46, %c0_47], %71 {strides = array<i32>} : memref<1x128x9xf32, #tpu.memory_space<vmem>>, vector<1x128x9xf32>,
    return
  }
  func.func @transform_0(%arg0: i32, %arg1: i32) -> (i32, i32, i32, i32) {
    %c0_i32 = arith.constant 0 : i32
    %c0_i32_0 = arith.constant 0 : i32
    %c0_i32_1 = arith.constant 0 : i32
    %c0_i32_2 = arith.constant 0 : i32
    return %arg0, %c0_i32, %c0_i32_0, %c0_i32_1 : i32, i32, i32, i32
  }
  func.func @transform_1(%arg0: i32, %arg1: i32) -> (i32, i32, i32) {
    %c0_i32 = arith.constant 0 : i32
    %c0_i32_0 = arith.constant 0 : i32
    %c0_i32_1 = arith.constant 0 : i32
    %c0_i32_2 = arith.constant 0 : i32
    return %c0_i32, %c0_i32_0, %c0_i32_1 : i32, i32, i32
  }
  func.func @transform_2(%arg0: i32, %arg1: i32) -> (i32, i32) {
    %c0_i32 = arith.constant 0 : i32
    %c0_i32_0 = arith.constant 0 : i32
    %c0_i32_1 = arith.constant 0 : i32
    return %c0_i32, %c0_i32_0 : i32, i32
  }
  func.func @transform_3(%arg0: i32, %arg1: i32) -> (i32, i32) {
    %c0_i32 = arith.constant 0 : i32
    %c0_i32_0 = arith.constant 0 : i32
    %c0_i32_1 = arith.constant 0 : i32
    return %c0_i32, %c0_i32_0 : i32, i32
  }
  func.func @transform_4(%arg0: i32, %arg1: i32) -> (i32, i32, i32) {
    %c0_i32 = arith.constant 0 : i32
    %c0_i32_0 = arith.constant 0 : i32
    return %arg0, %c0_i32, %arg1 : i32, i32, i32
  }
}

</mosaic_0001>

<llo_original>
// kernel: cnn_block_forward.2
$region0: #{cnn_block_forward.2}
  #allocation0 [shape = 'u32[]', space=smem, size = 0x4, offset = 0x4, fixed_abs, tag = 'smem constant byte address 0x4 - core index']
  #allocation1 [shape = 'u32[144,128]{1,0:T(1,128)}', space=vmem, size = 0x12000, scoped, tag = 'internal scratch']
  %s0 = inlined_call_operand.vmem [shape: f32[2,2,41,128], index: 0, kind: input, shape index: {}]
  %s1 = inlined_call_operand.vmem [shape: f32[10,128,41], index: 1, kind: input, shape index: {}]
  %s2 = inlined_call_operand.vmem [shape: f32[2,1,2,128], index: 2, kind: output, shape index: {}]
  %s3 = sld [smem:[#allocation0]]
  $region41: #{cnn_block_forward.2} parent=0
    _
  %s5 = ssub.s32 1, %s3
  %s6 = scalar_select 0, %s5, %s3
  loop: start=0, step=1, limit=4
  $region2: #{cnn_block_forward.2} parent=0 // loop_pre_header
    _
  $region3: #{cnn_block_forward.2} parent=0 // loop_header
    %s8 = sphi 0, %s12
    %p9 = scmp.ge.s32.totalorder %s8, 4
    %s15 = sphi 0, %s27
    %s16 = sphi 0, %s23
    %s17 = sphi 0, %s15
    %s18 = sphi 0, %s16
    %s19 = sphi 0, %s17
    %s20 = sphi 0, %s18
    %s30 = sphi 0, %s32
    %s33 = sphi 0, %s30
    %s34 = sphi 0, %s33
    %s50 = sphi 0, %s34
    %s54 = sphi 0, %s54
    %s56 = sphi 0, %s54
    %s57 = sphi 0, %s56
    %s71 = sphi 0, %s57
    %s79 = sphi 0, %s81
    %s82 = sphi 0, %s79
    %s83 = sphi 0, %s82
    %s99 = sphi 0, %s83
  $region4: #{cnn_block_forward.2} parent=0 // loop_header_branch
    %11 = sbr.rel (%p9) target = $region8
  $region5: #{cnn_block_forward.2} parent=0 // loop_body
    %s13 = ssub.s32 %s8, 1
    %s14 = ssub.s32 %s8, 2
    %s21 = sadd.s32 1, %s16
    %p22 = scmp.ge.s32.totalorder %s21, 1
    %s23 = scalar_select %p22, 0, %s21
    %s24 = sadd.s32 1, %s15
    %s25 = scalar_select %p22, %s24, %s15
    %p26 = scmp.ge.s32.totalorder %s25, 2
    %s27 = scalar_select %p26, 0, %s25
    %s28 = ssub.s32 %s15, %s27
    %p29 = scmp.eq.s32.totalorder %s28, 0
    %s31 = sadd.s32 %s30, 1
    %s32 = scalar_select %p29, %s30, %s31
    %p35 = pneg %p29
    %p36 = scmp.eq.s32.totalorder %s8, 1
    %p37 = por %p35, %p36
    %p38 = scmp.ne.s32.totalorder %s30, %s33
    %p39 = scmp.eq.s32.totalorder %s8, 0
    %p40 = por %p38, %p39
    %p41 = scmp.ne.s32.totalorder %s30, %s33
    %p42 = scmp.eq.s32.totalorder %s13, 1
    %p43 = por %p41, %p42
    %p44 = scmp.ne.s32.totalorder %s33, %s34
    %p45 = scmp.eq.s32.totalorder %s13, 0
    %p46 = por %p44, %p45
    %p47 = scmp.ne.s32.totalorder %s33, %s34
    %p48 = scmp.eq.s32.totalorder %s14, 1
    %p49 = por %p47, %p48
    %p51 = scmp.ne.s32.totalorder %s34, %s50
    %p52 = scmp.eq.s32.totalorder %s14, 0
    %p53 = por %p51, %p52
    %s55 = sadd.s32 %s54, 1
    %p58 = scmp.eq.s32.totalorder %s8, 1
    %p59 = scmp.ne.s32.totalorder %s54, %s56
    %p60 = scmp.eq.s32.totalorder %s8, 0
    %p61 = por %p59, %p60
    %p62 = scmp.ne.s32.totalorder %s54, %s56
    %p63 = scmp.eq.s32.totalorder %s13, 1
    %p64 = por %p62, %p63
    %p65 = scmp.ne.s32.totalorder %s56, %s57
    %p66 = scmp.eq.s32.totalorder %s13, 0
    %p67 = por %p65, %p66
    %p68 = scmp.ne.s32.totalorder %s56, %s57
    %p69 = scmp.eq.s32.totalorder %s14, 1
    %p70 = por %p68, %p69
    %p72 = scmp.ne.s32.totalorder %s57, %s71
    %p73 = scmp.eq.s32.totalorder %s14, 0
    %p74 = por %p72, %p73
    %s75 = ssub.s32 %s15, %s27
    %s76 = ssub.s32 %s16, %s23
    %s77 = sor.u32 %s75, %s76
    %p78 = scmp.eq.s32.totalorder %s77, 0
    %s80 = sadd.s32 %s79, 1
    %s81 = scalar_select %p78, %s79, %s80
    %p84 = pneg %p78
    %p85 = scmp.eq.s32.totalorder %s8, 1
    %p86 = por %p84, %p85
    %p87 = scmp.ne.s32.totalorder %s79, %s82
    %p88 = scmp.eq.s32.totalorder %s8, 0
    %p89 = por %p87, %p88
    %p90 = scmp.ne.s32.totalorder %s79, %s82
    %p91 = scmp.eq.s32.totalorder %s13, 1
    %p92 = por %p90, %p91
    %p93 = scmp.ne.s32.totalorder %s82, %s83
    %p94 = scmp.eq.s32.totalorder %s13, 0
    %p95 = por %p93, %p94
    %p96 = scmp.ne.s32.totalorder %s82, %s83
    %p97 = scmp.eq.s32.totalorder %s14, 1
    %p98 = por %p96, %p97
    %p100 = scmp.ne.s32.totalorder %s83, %s99
    %p101 = scmp.eq.s32.totalorder %s14, 0
    %p102 = por %p100, %p101
    %p103 = scmp.le.s32.totalorder 1, %s8
    %p104 = scmp.lt.s32.totalorder %s8, 3
    %p105 = pnand %p103, %p104
    %p106 = pneg %p105
    // Predicated region
    $region9: #{cnn_block_forward.2} parent=5 // pred_check
      _
    $region10: #{cnn_block_forward.2} parent=5 // pred_check_branch
      %108 = sbr.rel (%p105) target = $region12
    $region11: #{cnn_block_forward.2} parent=5 // pred_region
      %s109 = ssub.s32 %s8, 1
      // Predicated region
      $region13: #{cnn_block_forward.2} parent=11 // pred_check
        %p110 = pneg %p67
      $region14: #{cnn_block_forward.2} parent=11 // pred_check_branch
        %112 = sbr.rel (%p110) target = $region16
      $region15: #{cnn_block_forward.2} parent=11 // pred_region
        _
      $region16: #{cnn_block_forward.2} parent=11 // pred_fallthru
        _
    $region12: #{cnn_block_forward.2} parent=5 // pred_fallthru
      _
    %p113 = scmp.lt.s32.totalorder %s8, 2
    // Predicated region
    $region17: #{cnn_block_forward.2} parent=5 // pred_check
      %p114 = pneg %p113
    $region18: #{cnn_block_forward.2} parent=5 // pred_check_branch
      %116 = sbr.rel (%p114) target = $region20
    $region19: #{cnn_block_forward.2} parent=5 // pred_region
      // Predicated region
      $region21: #{cnn_block_forward.2} parent=19 // pred_check
        %p117 = pneg %p40
      $region22: #{cnn_block_forward.2} parent=19 // pred_check_branch
        %119 = sbr.rel (%p117) target = $region24
      $region23: #{cnn_block_forward.2} parent=19 // pred_region
        %p120 = scmp.lt.s32.totalorder %s15, 1
        %s121 = scalar_select %p120, %s15, 1
        %s122 = smul.addr %s121, 12
        %s123 = smul.addr %s122, 8
        %s124 = scalar_lea.vmem %s0, %s123
      $region24: #{cnn_block_forward.2} parent=19 // pred_fallthru
        _
    $region20: #{cnn_block_forward.2} parent=5 // pred_fallthru
      _
    %p125 = scmp.le.s32.totalorder 1, %s8
    %p126 = scmp.lt.s32.totalorder %s8, 3
    %p127 = pnand %p125, %p126
    %p128 = pneg %p127
    // Predicated region
    $region25: #{cnn_block_forward.2} parent=5 // pred_check
      _
    $region26: #{cnn_block_forward.2} parent=5 // pred_check_branch
      %130 = sbr.rel (%p127) target = $region28
    $region27: #{cnn_block_forward.2} parent=5 // pred_region
      %s131 = ssub.s32 %s8, 1
      %p132 = scmp.lt.s32.totalorder %s17, 1
      %s133 = scalar_select %p132, %s17, 1
      %s134 = smul.addr %s133, 12
      %s135 = smul.addr %s134, 8
      %s136 = scalar_lea.vmem %s0, %s135
      %p137 = pneg %p46
      %p138 = pneg %p43
      %p139 = pneg %p67
      %p140 = pneg %p64
      %p141 = pneg %p95
      %p142 = pneg %p92
      %p143 = scmp.lt.s32.totalorder %s17, 1
      %s144 = scalar_select %p143, %s17, 1
      %p145 = scmp.lt.s32.totalorder %s18, 0
      %s146 = scalar_select %p145, %s18, 0
      %s147 = sadd.s32 %s146, %s144
      %s148 = smul.addr %s147, 2
      %s149 = scalar_lea.vmem %s2, %s148
      %p150 = scmp.lt.s32.totalorder %s17, 1
      %s151 = scalar_select %p150, %s17, 1
      %s152 = smul.addr %s151, 12
      %s153 = smul.addr %s152, 8
      %s154 = scalar_lea.vmem %s0, %s153
      %p155 = scmp.lt.s32.totalorder %s17, 1
      %s156 = scalar_select %p155, %s17, 1
      %p157 = scmp.lt.s32.totalorder %s18, 0
      %s158 = scalar_select %p157, %s18, 0
      %s159 = sadd.s32 %s158, %s156
      %s160 = smul.addr %s159, 2
      %s161 = scalar_lea.vmem %s2, %s160
      %s162 = smul.u32 %s18, 9
      %s163 = ssub.s32 9, %s162
      %p164 = scmp.lt.s32.totalorder %s163, 9
      %s165 = scalar_select %p164, %s163, 9
      %v166 = vld [vmem:[%s154] sm:$0xff]
      %v167 = vld [vmem:[%s154 + $0x8] sm:$0xff]
      %v168 = vld [vmem:[%s154 + $0x10] sm:$0xff]
      %v169 = vld [vmem:[%s154 + $0x18] sm:$0xff]
      %v170 = vld [vmem:[%s154 + $0x20] sm:$0xff]
      %v171 = vld [vmem:[%s154 + $0x28] sm:$0x1]
      %v172 = vld [vmem:[%s1] sm:$0xff]
      %v173 = vld [vmem:[%s1 + $0x8] sm:$0xff]
      %v174 = vld [vmem:[%s1 + $0x10] sm:$0xff]
      %v175 = vld [vmem:[%s1 + $0x18] sm:$0xff]
      %v176 = vld [vmem:[%s1 + $0x20] sm:$0xff]
      %v177 = vld [vmem:[%s1 + $0x28] sm:$0xff]
      %v178 = vld [vmem:[%s1 + $0x30] sm:$0xff]
      %v179 = vld [vmem:[%s1 + $0x38] sm:$0xff]
      %v180 = vld [vmem:[%s1 + $0x40] sm:$0xff]
      %v181 = vld [vmem:[%s1 + $0x48] sm:$0xff]
      %v182 = vld [vmem:[%s1 + $0x50] sm:$0xff]
      %v183 = vld [vmem:[%s1 + $0x58] sm:$0xff]
      %v184 = vld [vmem:[%s1 + $0x60] sm:$0xff]
      %v185 = vld [vmem:[%s1 + $0x68] sm:$0xff]
      %v186 = vld [vmem:[%s1 + $0x70] sm:$0xff]
      %v187 = vld [vmem:[%s1 + $0x78] sm:$0xff]
      %s188 = scalar_lea.vmem %s1, 256
      %v189 = vld [vmem:[%s188] sm:$0xff]
      %v190 = vld [vmem:[%s188 + $0x8] sm:$0xff]
      %v191 = vld [vmem:[%s188 + $0x10] sm:$0xff]
      %v192 = vld [vmem:[%s188 + $0x18] sm:$0xff]
      %v193 = vld [vmem:[%s188 + $0x20] sm:$0xff]
      %v194 = vld [vmem:[%s188 + $0x28] sm:$0xff]
      %v195 = vld [vmem:[%s188 + $0x30] sm:$0xff]
      %v196 = vld [vmem:[%s188 + $0x38] sm:$0xff]
      %v197 = vld [vmem:[%s188 + $0x40] sm:$0xff]
      %v198 = vld [vmem:[%s188 + $0x48] sm:$0xff]
      %v199 = vld [vmem:[%s188 + $0x50] sm:$0xff]
      %v200 = vld [vmem:[%s188 + $0x58] sm:$0xff]
      %v201 = vld [vmem:[%s188 + $0x60] sm:$0xff]
      %v202 = vld [vmem:[%s188 + $0x68] sm:$0xff]
      %v203 = vld [vmem:[%s188 + $0x70] sm:$0xff]
      %v204 = vld [vmem:[%s188 + $0x78] sm:$0xff]
      %211 = vrot.lane.b32.xlu0 %v166, 127
      %v212 = vpop.permute.xlu0 %211
      %213 = vrot.lane.b32.xlu0 %v167, 127
      %v214 = vpop.permute.xlu0 %213
      %215 = vrot.lane.b32.xlu0 %v168, 127
      %v216 = vpop.permute.xlu0 %215
      %217 = vrot.lane.b32.xlu0 %v169, 127
      %v218 = vpop.permute.xlu0 %217
      %219 = vrot.lane.b32.xlu0 %v170, 127
      %v220 = vpop.permute.xlu0 %219
      %221 = vrot.lane.b32.xlu0 %v171, 127
      %v222 = vpop.permute.xlu0 %221
      %vm228 = vcmask 334848
      %v230 = vsel %vm228, %v189, 0
      %v233 = vsel %vm228, %v190, 0
      %v236 = vsel %vm228, %v191, 0
      %v239 = vsel %vm228, %v192, 0
      %v242 = vsel %vm228, %v193, 0
      %v245 = vsel %vm228, %v194, 0
      %v248 = vsel %vm228, %v195, 0
      %v251 = vsel %vm228, %v196, 0
      %v254 = vsel %vm228, %v197, 0
      %v257 = vsel %vm228, %v198, 0
      %v260 = vsel %vm228, %v199, 0
      %v263 = vsel %vm228, %v200, 0
      %v266 = vsel %vm228, %v201, 0
      %v269 = vsel %vm228, %v202, 0
      %v272 = vsel %vm228, %v203, 0
      %v275 = vsel %vm228, %v204, 0
      %vm277 = vcmask 1040384
      %v278 = vsel %vm277, %v222, 0
      %280 = vmatprep.subr.mxu0 0.0
      %281 = vmatpush1.msra.mxu0 0.0
      %282 = vmatprep.subr.mxu0 0.0
      %283 = vmatpush1.msra.mxu0 0.0
      %284 = vmatprep.subr.mxu0 0.0
      %285 = vmatpush1.msra.mxu0 0.0
      %286 = vmatprep.subr.mxu0 0.0
      %287 = vmatpush1.msra.mxu0 0.0
      %288 = vmatprep.subr.mxu0 0.0
      %289 = vmatpush1.msra.mxu0 0.0
      %290 = vmatprep.subr.mxu0 0.0
      %291 = vmatpush1.msra.mxu0 0.0
      %292 = vmatprep.subr.mxu0 0.0
      %293 = vmatpush1.msra.mxu0 0.0
      %294 = vmatprep.subr.mxu0 0.0
      %295 = vmatpush1.msra.mxu0 0.0
      %296 = vmatprep.subr.mxu0 0.0
      %297 = vmatpush1.msra.mxu0 0.0
      %298 = vmatprep.subr.mxu0 0.0
      %299 = vmatpush1.msra.mxu0 0.0
      %300 = vmatprep.subr.mxu0 0.0
      %301 = vmatpush1.msra.mxu0 %v278
      %302 = vmatprep.subr.mxu0 0.0
      %303 = vmatpush1.msra.mxu0 %v220
      %304 = vmatprep.subr.mxu0 0.0
      %305 = vmatpush1.msra.mxu0 %v218
      %306 = vmatprep.subr.mxu0 0.0
      %307 = vmatpush1.msra.mxu0 %v216
      %308 = vmatprep.subr.mxu0 0.0
      %309 = vmatpush1.msra.mxu0 %v214
      %310 = vmatprep.subr.mxu0 0.0
      %311 = vmatpush1.msra.mxu0 %v212
      %312 = vmatprep.subr.mxu0 0.0
      %313 = vmatpush2.msra.mxu0 0.0
      %314 = vmatprep.subr.mxu0 0.0
      %315 = vmatpush2.msra.mxu0 0.0
      %316 = vmatprep.subr.mxu0 0.0
      %317 = vmatpush2.msra.mxu0 0.0
      %318 = vmatprep.subr.mxu0 0.0
      %319 = vmatpush2.msra.mxu0 0.0
      %320 = vmatprep.subr.mxu0 0.0
      %321 = vmatpush2.msra.mxu0 0.0
      %322 = vmatprep.subr.mxu0 0.0
      %323 = vmatpush2.msra.mxu0 0.0
      %324 = vmatprep.subr.mxu0 0.0
      %325 = vmatpush2.msra.mxu0 0.0
      %326 = vmatprep.subr.mxu0 0.0
      %327 = vmatpush2.msra.mxu0 0.0
      %328 = vmatprep.subr.mxu0 0.0
      %329 = vmatpush2.msra.mxu0 0.0
      %330 = vmatprep.subr.mxu0 0.0
      %331 = vmatpush2.msra.mxu0 0.0
      %332 = vmatprep.subr.mxu0 0.0
      %333 = vmatpush2.msra.mxu0 0.0
      %334 = vmatprep.subr.mxu0 0.0
      %335 = vmatpush2.msra.mxu0 0.0
      %336 = vmatprep.subr.mxu0 0.0
      %337 = vmatpush2.msra.mxu0 0.0
      %338 = vmatprep.subr.mxu0 0.0
      %339 = vmatpush2.msra.mxu0 0.0
      %340 = vmatprep.subr.mxu0 0.0
      %341 = vmatpush2.msra.mxu0 0.0
      %342 = vmatprep.subr.mxu0 0.0
      %343 = vmatpush2.msra.mxu0 0.0
      %344 = vmatprep.mubr.f32.mxu0 0.0
      %345 = vmatmul.mubr.f32.gmra.mxu0 %v230
      %v346 = vpop.f32.mrf.mxu0
      %v347 = vadd.f32 0.0, %v346
      %v348 = vpop.f32.mrf.mxu0
      %349 = vmatprep.mubr.f32.mxu0 0.0
      %350 = vmatmul.mubr.f32.gmra.mxu0 %v233
      %v351 = vpop.f32.mrf.mxu0
      %v352 = vadd.f32 0.0, %v351
      %v353 = vpop.f32.mrf.mxu0
      %354 = vmatprep.mubr.f32.mxu0 0.0
      %355 = vmatmul.mubr.f32.gmra.mxu0 %v236
      %v356 = vpop.f32.mrf.mxu0
      %v357 = vadd.f32 0.0, %v356
      %v358 = vpop.f32.mrf.mxu0
      %359 = vmatprep.mubr.f32.mxu0 0.0
      %360 = vmatmul.mubr.f32.gmra.mxu0 %v239
      %v361 = vpop.f32.mrf.mxu0
      %v362 = vadd.f32 0.0, %v361
      %v363 = vpop.f32.mrf.mxu0
      %364 = vmatprep.mubr.f32.mxu0 0.0
      %365 = vmatmul.mubr.f32.gmra.mxu0 %v242
      %v366 = vpop.f32.mrf.mxu0
      %v367 = vadd.f32 0.0, %v366
      %v368 = vpop.f32.mrf.mxu0
      %369 = vmatprep.mubr.f32.mxu0 0.0
      %370 = vmatmul.mubr.f32.gmra.mxu0 %v245
      %v371 = vpop.f32.mrf.mxu0
      %v372 = vadd.f32 0.0, %v371
      %v373 = vpop.f32.mrf.mxu0
      %374 = vmatprep.mubr.f32.mxu0 0.0
      %375 = vmatmul.mubr.f32.gmra.mxu0 %v248
      %v376 = vpop.f32.mrf.mxu0
      %v377 = vadd.f32 0.0, %v376
      %v378 = vpop.f32.mrf.mxu0
      %379 = vmatprep.mubr.f32.mxu0 0.0
      %380 = vmatmul.mubr.f32.gmra.mxu0 %v251
      %v381 = vpop.f32.mrf.mxu0
      %v382 = vadd.f32 0.0, %v381
      %v383 = vpop.f32.mrf.mxu0
      %384 = vmatprep.mubr.f32.mxu0 0.0
      %385 = vmatmul.mubr.f32.gmra.mxu0 %v254
      %v386 = vpop.f32.mrf.mxu0
      %v387 = vadd.f32 0.0, %v386
      %v388 = vpop.f32.mrf.mxu0
      %389 = vmatprep.mubr.f32.mxu0 0.0
      %390 = vmatmul.mubr.f32.gmra.mxu0 %v257
      %v391 = vpop.f32.mrf.mxu0
      %v392 = vadd.f32 0.0, %v391
      %v393 = vpop.f32.mrf.mxu0
      %394 = vmatprep.mubr.f32.mxu0 0.0
      %395 = vmatmul.mubr.f32.gmra.mxu0 %v260
      %v396 = vpop.f32.mrf.mxu0
      %v397 = vadd.f32 0.0, %v396
      %v398 = vpop.f32.mrf.mxu0
      %399 = vmatprep.mubr.f32.mxu0 0.0
      %400 = vmatmul.mubr.f32.gmra.mxu0 %v263
      %v401 = vpop.f32.mrf.mxu0
      %v402 = vadd.f32 0.0, %v401
      %v403 = vpop.f32.mrf.mxu0
      %404 = vmatprep.mubr.f32.mxu0 0.0
      %405 = vmatmul.mubr.f32.gmra.mxu0 %v266
      %v406 = vpop.f32.mrf.mxu0
      %v407 = vadd.f32 0.0, %v406
      %v408 = vpop.f32.mrf.mxu0
      %409 = vmatprep.mubr.f32.mxu0 0.0
      %410 = vmatmul.mubr.f32.gmra.mxu0 %v269
      %v411 = vpop.f32.mrf.mxu0
      %v412 = vadd.f32 0.0, %v411
      %v413 = vpop.f32.mrf.mxu0
      %414 = vmatprep.mubr.f32.mxu0 0.0
      %415 = vmatmul.mubr.f32.gmra.mxu0 %v272
      %v416 = vpop.f32.mrf.mxu0
      %v417 = vadd.f32 0.0, %v416
      %v418 = vpop.f32.mrf.mxu0
      %419 = vmatprep.mubr.f32.mxu0 0.0
      %420 = vmatmul.mubr.f32.gmra.mxu0 %v275
      %v421 = vpop.f32.mrf.mxu0
      %v422 = vadd.f32 0.0, %v421
      %v423 = vpop.f32.mrf.mxu0
      %424 = vdwg.mxu0
      %v426 = vsel %vm228, %v172, 0
      %v429 = vsel %vm228, %v173, 0
      %v432 = vsel %vm228, %v174, 0
      %v435 = vsel %vm228, %v175, 0
      %v438 = vsel %vm228, %v176, 0
      %v441 = vsel %vm228, %v177, 0
      %v444 = vsel %vm228, %v178, 0
      %v447 = vsel %vm228, %v179, 0
      %v450 = vsel %vm228, %v180, 0
      %v453 = vsel %vm228, %v181, 0
      %v456 = vsel %vm228, %v182, 0
      %v459 = vsel %vm228, %v183, 0
      %v462 = vsel %vm228, %v184, 0
      %v465 = vsel %vm228, %v185, 0
      %v468 = vsel %vm228, %v186, 0
      %v471 = vsel %vm228, %v187, 0
      %v473 = vsel %vm277, %v171, 0
      %475 = vmatprep.subr.mxu0 0.0
      %476 = vmatpush1.msra.mxu0 0.0
      %477 = vmatprep.subr.mxu0 0.0
      %478 = vmatpush1.msra.mxu0 0.0
      %479 = vmatprep.subr.mxu0 0.0
      %480 = vmatpush1.msra.mxu0 0.0
      %481 = vmatprep.subr.mxu0 0.0
      %482 = vmatpush1.msra.mxu0 0.0
      %483 = vmatprep.subr.mxu0 0.0
      %484 = vmatpush1.msra.mxu0 0.0
      %485 = vmatprep.subr.mxu0 0.0
      %486 = vmatpush1.msra.mxu0 0.0
      %487 = vmatprep.subr.mxu0 0.0
      %488 = vmatpush1.msra.mxu0 0.0
      %489 = vmatprep.subr.mxu0 0.0
      %490 = vmatpush1.msra.mxu0 0.0
      %491 = vmatprep.subr.mxu0 0.0
      %492 = vmatpush1.msra.mxu0 0.0
      %493 = vmatprep.subr.mxu0 0.0
      %494 = vmatpush1.msra.mxu0 0.0
      %495 = vmatprep.subr.mxu0 0.0
      %496 = vmatpush1.msra.mxu0 %v473
      %497 = vmatprep.subr.mxu0 0.0
      %498 = vmatpush1.msra.mxu0 %v170
      %499 = vmatprep.subr.mxu0 0.0
      %500 = vmatpush1.msra.mxu0 %v169
      %501 = vmatprep.subr.mxu0 0.0
      %502 = vmatpush1.msra.mxu0 %v168
      %503 = vmatprep.subr.mxu0 0.0
      %504 = vmatpush1.msra.mxu0 %v167
      %505 = vmatprep.subr.mxu0 0.0
      %506 = vmatpush1.msra.mxu0 %v166
      %507 = vmatprep.subr.mxu0 0.0
      %508 = vmatpush2.msra.mxu0 0.0
      %509 = vmatprep.subr.mxu0 0.0
      %510 = vmatpush2.msra.mxu0 0.0
      %511 = vmatprep.subr.mxu0 0.0
      %512 = vmatpush2.msra.mxu0 0.0
      %513 = vmatprep.subr.mxu0 0.0
      %514 = vmatpush2.msra.mxu0 0.0
      %515 = vmatprep.subr.mxu0 0.0
      %516 = vmatpush2.msra.mxu0 0.0
      %517 = vmatprep.subr.mxu0 0.0
      %518 = vmatpush2.msra.mxu0 0.0
      %519 = vmatprep.subr.mxu0 0.0
      %520 = vmatpush2.msra.mxu0 0.0
      %521 = vmatprep.subr.mxu0 0.0
      %522 = vmatpush2.msra.mxu0 0.0
      %523 = vmatprep.subr.mxu0 0.0
      %524 = vmatpush2.msra.mxu0 0.0
      %525 = vmatprep.subr.mxu0 0.0
      %526 = vmatpush2.msra.mxu0 0.0
      %527 = vmatprep.subr.mxu0 0.0
      %528 = vmatpush2.msra.mxu0 0.0
      %529 = vmatprep.subr.mxu0 0.0
      %530 = vmatpush2.msra.mxu0 0.0
      %531 = vmatprep.subr.mxu0 0.0
      %532 = vmatpush2.msra.mxu0 0.0
      %533 = vmatprep.subr.mxu0 0.0
      %534 = vmatpush2.msra.mxu0 0.0
      %535 = vmatprep.subr.mxu0 0.0
      %536 = vmatpush2.msra.mxu0 0.0
      %537 = vmatprep.subr.mxu0 0.0
      %538 = vmatpush2.msra.mxu0 0.0
      %539 = vmatprep.mubr.f32.mxu0 0.0
      %540 = vmatmul.mubr.f32.gmra.mxu0 %v426
      %v541 = vpop.f32.mrf.mxu0
      %v542 = vadd.f32 %v347, %v541
      %v543 = vpop.f32.mrf.mxu0
      %544 = vmatprep.mubr.f32.mxu0 0.0
      %545 = vmatmul.mubr.f32.gmra.mxu0 %v429
      %v546 = vpop.f32.mrf.mxu0
      %v547 = vadd.f32 %v352, %v546
      %v548 = vpop.f32.mrf.mxu0
      %549 = vmatprep.mubr.f32.mxu0 0.0
      %550 = vmatmul.mubr.f32.gmra.mxu0 %v432
      %v551 = vpop.f32.mrf.mxu0
      %v552 = vadd.f32 %v357, %v551
      %v553 = vpop.f32.mrf.mxu0
      %554 = vmatprep.mubr.f32.mxu0 0.0
      %555 = vmatmul.mubr.f32.gmra.mxu0 %v435
      %v556 = vpop.f32.mrf.mxu0
      %v557 = vadd.f32 %v362, %v556
      %v558 = vpop.f32.mrf.mxu0
      %559 = vmatprep.mubr.f32.mxu0 0.0
      %560 = vmatmul.mubr.f32.gmra.mxu0 %v438
      %v561 = vpop.f32.mrf.mxu0
      %v562 = vadd.f32 %v367, %v561
      %v563 = vpop.f32.mrf.mxu0
      %564 = vmatprep.mubr.f32.mxu0 0.0
      %565 = vmatmul.mubr.f32.gmra.mxu0 %v441
      %v566 = vpop.f32.mrf.mxu0
      %v567 = vadd.f32 %v372, %v566
      %v568 = vpop.f32.mrf.mxu0
      %569 = vmatprep.mubr.f32.mxu0 0.0
      %570 = vmatmul.mubr.f32.gmra.mxu0 %v444
      %v571 = vpop.f32.mrf.mxu0
      %v572 = vadd.f32 %v377, %v571
      %v573 = vpop.f32.mrf.mxu0
      %574 = vmatprep.mubr.f32.mxu0 0.0
      %575 = vmatmul.mubr.f32.gmra.mxu0 %v447
      %v576 = vpop.f32.mrf.mxu0
      %v577 = vadd.f32 %v382, %v576
      %v578 = vpop.f32.mrf.mxu0
      %579 = vmatprep.mubr.f32.mxu0 0.0
      %580 = vmatmul.mubr.f32.gmra.mxu0 %v450
      %v581 = vpop.f32.mrf.mxu0
      %v582 = vadd.f32 %v387, %v581
      %v583 = vpop.f32.mrf.mxu0
      %584 = vmatprep.mubr.f32.mxu0 0.0
      %585 = vmatmul.mubr.f32.gmra.mxu0 %v453
      %v586 = vpop.f32.mrf.mxu0
      %v587 = vadd.f32 %v392, %v586
      %v588 = vpop.f32.mrf.mxu0
      %589 = vmatprep.mubr.f32.mxu0 0.0
      %590 = vmatmul.mubr.f32.gmra.mxu0 %v456
      %v591 = vpop.f32.mrf.mxu0
      %v592 = vadd.f32 %v397, %v591
      %v593 = vpop.f32.mrf.mxu0
      %594 = vmatprep.mubr.f32.mxu0 0.0
      %595 = vmatmul.mubr.f32.gmra.mxu0 %v459
      %v596 = vpop.f32.mrf.mxu0
      %v597 = vadd.f32 %v402, %v596
      %v598 = vpop.f32.mrf.mxu0
      %599 = vmatprep.mubr.f32.mxu0 0.0
      %600 = vmatmul.mubr.f32.gmra.mxu0 %v462
      %v601 = vpop.f32.mrf.mxu0
      %v602 = vadd.f32 %v407, %v601
      %v603 = vpop.f32.mrf.mxu0
      %604 = vmatprep.mubr.f32.mxu0 0.0
      %605 = vmatmul.mubr.f32.gmra.mxu0 %v465
      %v606 = vpop.f32.mrf.mxu0
      %v607 = vadd.f32 %v412, %v606
      %v608 = vpop.f32.mrf.mxu0
      %609 = vmatprep.mubr.f32.mxu0 0.0
      %610 = vmatmul.mubr.f32.gmra.mxu0 %v468
      %v611 = vpop.f32.mrf.mxu0
      %v612 = vadd.f32 %v417, %v611
      %v613 = vpop.f32.mrf.mxu0
      %614 = vmatprep.mubr.f32.mxu0 0.0
      %615 = vmatmul.mubr.f32.gmra.mxu0 %v471
      %v616 = vpop.f32.mrf.mxu0
      %v617 = vadd.f32 %v422, %v616
      %v618 = vpop.f32.mrf.mxu0
      %619 = vdwg.mxu0
      %s620 = scalar_lea.vmem %s1, 512
      %v621 = vld [vmem:[%s620] sm:$0xff]
      %v622 = vld [vmem:[%s620 + $0x8] sm:$0xff]
      %v623 = vld [vmem:[%s620 + $0x10] sm:$0xff]
      %v624 = vld [vmem:[%s620 + $0x18] sm:$0xff]
      %v625 = vld [vmem:[%s620 + $0x20] sm:$0xff]
      %v626 = vld [vmem:[%s620 + $0x28] sm:$0xff]
      %v627 = vld [vmem:[%s620 + $0x30] sm:$0xff]
      %v628 = vld [vmem:[%s620 + $0x38] sm:$0xff]
      %v629 = vld [vmem:[%s620 + $0x40] sm:$0xff]
      %v630 = vld [vmem:[%s620 + $0x48] sm:$0xff]
      %v631 = vld [vmem:[%s620 + $0x50] sm:$0xff]
      %v632 = vld [vmem:[%s620 + $0x58] sm:$0xff]
      %v633 = vld [vmem:[%s620 + $0x60] sm:$0xff]
      %v634 = vld [vmem:[%s620 + $0x68] sm:$0xff]
      %v635 = vld [vmem:[%s620 + $0x70] sm:$0xff]
      %v636 = vld [vmem:[%s620 + $0x78] sm:$0xff]
      %637 = vrot.lane.b32.xlu0 %v166, 126
      %v638 = vpop.permute.xlu0 %637
      %639 = vrot.lane.b32.xlu0 %v167, 126
      %v640 = vpop.permute.xlu0 %639
      %641 = vrot.lane.b32.xlu0 %v168, 126
      %v642 = vpop.permute.xlu0 %641
      %643 = vrot.lane.b32.xlu0 %v169, 126
      %v644 = vpop.permute.xlu0 %643
      %645 = vrot.lane.b32.xlu0 %v170, 126
      %v646 = vpop.permute.xlu0 %645
      %647 = vrot.lane.b32.xlu0 %v171, 126
      %v648 = vpop.permute.xlu0 %647
      %v655 = vsel %vm228, %v621, 0
      %v658 = vsel %vm228, %v622, 0
      %v661 = vsel %vm228, %v623, 0
      %v664 = vsel %vm228, %v624, 0
      %v667 = vsel %vm228, %v625, 0
      %v670 = vsel %vm228, %v626, 0
      %v673 = vsel %vm228, %v627, 0
      %v676 = vsel %vm228, %v628, 0
      %v679 = vsel %vm228, %v629, 0
      %v682 = vsel %vm228, %v630, 0
      %v685 = vsel %vm228, %v631, 0
      %v688 = vsel %vm228, %v632, 0
      %v691 = vsel %vm228, %v633, 0
      %v694 = vsel %vm228, %v634, 0
      %v697 = vsel %vm228, %v635, 0
      %v700 = vsel %vm228, %v636, 0
      %v702 = vsel %vm277, %v648, 0
      %704 = vmatprep.subr.mxu0 0.0
      %705 = vmatpush1.msra.mxu0 0.0
      %706 = vmatprep.subr.mxu0 0.0
      %707 = vmatpush1.msra.mxu0 0.0
      %708 = vmatprep.subr.mxu0 0.0
      %709 = vmatpush1.msra.mxu0 0.0
      %710 = vmatprep.subr.mxu0 0.0
      %711 = vmatpush1.msra.mxu0 0.0
      %712 = vmatprep.subr.mxu0 0.0
      %713 = vmatpush1.msra.mxu0 0.0
      %714 = vmatprep.subr.mxu0 0.0
      %715 = vmatpush1.msra.mxu0 0.0
      %716 = vmatprep.subr.mxu0 0.0
      %717 = vmatpush1.msra.mxu0 0.0
      %718 = vmatprep.subr.mxu0 0.0
      %719 = vmatpush1.msra.mxu0 0.0
      %720 = vmatprep.subr.mxu0 0.0
      %721 = vmatpush1.msra.mxu0 0.0
      %722 = vmatprep.subr.mxu0 0.0
      %723 = vmatpush1.msra.mxu0 0.0
      %724 = vmatprep.subr.mxu0 0.0
      %725 = vmatpush1.msra.mxu0 %v702
      %726 = vmatprep.subr.mxu0 0.0
      %727 = vmatpush1.msra.mxu0 %v646
      %728 = vmatprep.subr.mxu0 0.0
      %729 = vmatpush1.msra.mxu0 %v644
      %730 = vmatprep.subr.mxu0 0.0
      %731 = vmatpush1.msra.mxu0 %v642
      %732 = vmatprep.subr.mxu0 0.0
      %733 = vmatpush1.msra.mxu0 %v640
      %734 = vmatprep.subr.mxu0 0.0
      %735 = vmatpush1.msra.mxu0 %v638
      %736 = vmatprep.subr.mxu0 0.0
      %737 = vmatpush2.msra.mxu0 0.0
      %738 = vmatprep.subr.mxu0 0.0
      %739 = vmatpush2.msra.mxu0 0.0
      %740 = vmatprep.subr.mxu0 0.0
      %741 = vmatpush2.msra.mxu0 0.0
      %742 = vmatprep.subr.mxu0 0.0
      %743 = vmatpush2.msra.mxu0 0.0
      %744 = vmatprep.subr.mxu0 0.0
      %745 = vmatpush2.msra.mxu0 0.0
      %746 = vmatprep.subr.mxu0 0.0
      %747 = vmatpush2.msra.mxu0 0.0
      %748 = vmatprep.subr.mxu0 0.0
      %749 = vmatpush2.msra.mxu0 0.0
      %750 = vmatprep.subr.mxu0 0.0
      %751 = vmatpush2.msra.mxu0 0.0
      %752 = vmatprep.subr.mxu0 0.0
      %753 = vmatpush2.msra.mxu0 0.0
      %754 = vmatprep.subr.mxu0 0.0
      %755 = vmatpush2.msra.mxu0 0.0
      %756 = vmatprep.subr.mxu0 0.0
      %757 = vmatpush2.msra.mxu0 0.0
      %758 = vmatprep.subr.mxu0 0.0
      %759 = vmatpush2.msra.mxu0 0.0
      %760 = vmatprep.subr.mxu0 0.0
      %761 = vmatpush2.msra.mxu0 0.0
      %762 = vmatprep.subr.mxu0 0.0
      %763 = vmatpush2.msra.mxu0 0.0
      %764 = vmatprep.subr.mxu0 0.0
      %765 = vmatpush2.msra.mxu0 0.0
      %766 = vmatprep.subr.mxu0 0.0
      %767 = vmatpush2.msra.mxu0 0.0
      %768 = vmatprep.mubr.f32.mxu0 0.0
      %769 = vmatmul.mubr.f32.gmra.mxu0 %v655
      %v770 = vpop.f32.mrf.mxu0
      %v771 = vadd.f32 0.0, %v770
      %v772 = vpop.f32.mrf.mxu0
      %773 = vmatprep.mubr.f32.mxu0 0.0
      %774 = vmatmul.mubr.f32.gmra.mxu0 %v658
      %v775 = vpop.f32.mrf.mxu0
      %v776 = vadd.f32 0.0, %v775
      %v777 = vpop.f32.mrf.mxu0
      %778 = vmatprep.mubr.f32.mxu0 0.0
      %779 = vmatmul.mubr.f32.gmra.mxu0 %v661
      %v780 = vpop.f32.mrf.mxu0
      %v781 = vadd.f32 0.0, %v780
      %v782 = vpop.f32.mrf.mxu0
      %783 = vmatprep.mubr.f32.mxu0 0.0
      %784 = vmatmul.mubr.f32.gmra.mxu0 %v664
      %v785 = vpop.f32.mrf.mxu0
      %v786 = vadd.f32 0.0, %v785
      %v787 = vpop.f32.mrf.mxu0
      %788 = vmatprep.mubr.f32.mxu0 0.0
      %789 = vmatmul.mubr.f32.gmra.mxu0 %v667
      %v790 = vpop.f32.mrf.mxu0
      %v791 = vadd.f32 0.0, %v790
      %v792 = vpop.f32.mrf.mxu0
      %793 = vmatprep.mubr.f32.mxu0 0.0
      %794 = vmatmul.mubr.f32.gmra.mxu0 %v670
      %v795 = vpop.f32.mrf.mxu0
      %v796 = vadd.f32 0.0, %v795
      %v797 = vpop.f32.mrf.mxu0
      %798 = vmatprep.mubr.f32.mxu0 0.0
      %799 = vmatmul.mubr.f32.gmra.mxu0 %v673
      %v800 = vpop.f32.mrf.mxu0
      %v801 = vadd.f32 0.0, %v800
      %v802 = vpop.f32.mrf.mxu0
      %803 = vmatprep.mubr.f32.mxu0 0.0
      %804 = vmatmul.mubr.f32.gmra.mxu0 %v676
      %v805 = vpop.f32.mrf.mxu0
      %v806 = vadd.f32 0.0, %v805
      %v807 = vpop.f32.mrf.mxu0
      %808 = vmatprep.mubr.f32.mxu0 0.0
      %809 = vmatmul.mubr.f32.gmra.mxu0 %v679
      %v810 = vpop.f32.mrf.mxu0
      %v811 = vadd.f32 0.0, %v810
      %v812 = vpop.f32.mrf.mxu0
      %813 = vmatprep.mubr.f32.mxu0 0.0
      %814 = vmatmul.mubr.f32.gmra.mxu0 %v682
      %v815 = vpop.f32.mrf.mxu0
      %v816 = vadd.f32 0.0, %v815
      %v817 = vpop.f32.mrf.mxu0
      %818 = vmatprep.mubr.f32.mxu0 0.0
      %819 = vmatmul.mubr.f32.gmra.mxu0 %v685
      %v820 = vpop.f32.mrf.mxu0
      %v821 = vadd.f32 0.0, %v820
      %v822 = vpop.f32.mrf.mxu0
      %823 = vmatprep.mubr.f32.mxu0 0.0
      %824 = vmatmul.mubr.f32.gmra.mxu0 %v688
      %v825 = vpop.f32.mrf.mxu0
      %v826 = vadd.f32 0.0, %v825
      %v827 = vpop.f32.mrf.mxu0
      %828 = vmatprep.mubr.f32.mxu0 0.0
      %829 = vmatmul.mubr.f32.gmra.mxu0 %v691
      %v830 = vpop.f32.mrf.mxu0
      %v831 = vadd.f32 0.0, %v830
      %v832 = vpop.f32.mrf.mxu0
      %833 = vmatprep.mubr.f32.mxu0 0.0
      %834 = vmatmul.mubr.f32.gmra.mxu0 %v694
      %v835 = vpop.f32.mrf.mxu0
      %v836 = vadd.f32 0.0, %v835
      %v837 = vpop.f32.mrf.mxu0
      %838 = vmatprep.mubr.f32.mxu0 0.0
      %839 = vmatmul.mubr.f32.gmra.mxu0 %v697
      %v840 = vpop.f32.mrf.mxu0
      %v841 = vadd.f32 0.0, %v840
      %v842 = vpop.f32.mrf.mxu0
      %843 = vmatprep.mubr.f32.mxu0 0.0
      %844 = vmatmul.mubr.f32.gmra.mxu0 %v700
      %v845 = vpop.f32.mrf.mxu0
      %v846 = vadd.f32 0.0, %v845
      %v847 = vpop.f32.mrf.mxu0
      %848 = vdwg.mxu0
      %v849 = vadd.f32 %v542, %v771
      %v850 = vadd.f32 %v547, %v776
      %v851 = vadd.f32 %v552, %v781
      %v852 = vadd.f32 %v557, %v786
      %v853 = vadd.f32 %v562, %v791
      %v854 = vadd.f32 %v567, %v796
      %v855 = vadd.f32 %v572, %v801
      %v856 = vadd.f32 %v577, %v806
      %v857 = vadd.f32 %v582, %v811
      %v858 = vadd.f32 %v587, %v816
      %v859 = vadd.f32 %v592, %v821
      %v860 = vadd.f32 %v597, %v826
      %v861 = vadd.f32 %v602, %v831
      %v862 = vadd.f32 %v607, %v836
      %v863 = vadd.f32 %v612, %v841
      %v864 = vadd.f32 %v617, %v846
      %s865 = scalar_lea.vmem %s1, 768
      %v866 = vld [vmem:[%s865] sm:$0xff]
      %v867 = vld [vmem:[%s865 + $0x8] sm:$0xff]
      %v868 = vld [vmem:[%s865 + $0x10] sm:$0xff]
      %v869 = vld [vmem:[%s865 + $0x18] sm:$0xff]
      %v870 = vld [vmem:[%s865 + $0x20] sm:$0xff]
      %v871 = vld [vmem:[%s865 + $0x28] sm:$0xff]
      %v872 = vld [vmem:[%s865 + $0x30] sm:$0xff]
      %v873 = vld [vmem:[%s865 + $0x38] sm:$0xff]
      %v874 = vld [vmem:[%s865 + $0x40] sm:$0xff]
      %v875 = vld [vmem:[%s865 + $0x48] sm:$0xff]
      %v876 = vld [vmem:[%s865 + $0x50] sm:$0xff]
      %v877 = vld [vmem:[%s865 + $0x58] sm:$0xff]
      %v878 = vld [vmem:[%s865 + $0x60] sm:$0xff]
      %v879 = vld [vmem:[%s865 + $0x68] sm:$0xff]
      %v880 = vld [vmem:[%s865 + $0x70] sm:$0xff]
      %v881 = vld [vmem:[%s865 + $0x78] sm:$0xff]
      %882 = vrot.lane.b32.xlu0 %v166, 125
      %v883 = vpop.permute.xlu0 %882
      %884 = vrot.lane.b32.xlu0 %v167, 125
      %v885 = vpop.permute.xlu0 %884
      %886 = vrot.lane.b32.xlu0 %v168, 125
      %v887 = vpop.permute.xlu0 %886
      %888 = vrot.lane.b32.xlu0 %v169, 125
      %v889 = vpop.permute.xlu0 %888
      %890 = vrot.lane.b32.xlu0 %v170, 125
      %v891 = vpop.permute.xlu0 %890
      %892 = vrot.lane.b32.xlu0 %v171, 125
      %v893 = vpop.permute.xlu0 %892
      %v900 = vsel %vm228, %v866, 0
      %v903 = vsel %vm228, %v867, 0
      %v906 = vsel %vm228, %v868, 0
      %v909 = vsel %vm228, %v869, 0
      %v912 = vsel %vm228, %v870, 0
      %v915 = vsel %vm228, %v871, 0
      %v918 = vsel %vm228, %v872, 0
      %v921 = vsel %vm228, %v873, 0
      %v924 = vsel %vm228, %v874, 0
      %v927 = vsel %vm228, %v875, 0
      %v930 = vsel %vm228, %v876, 0
      %v933 = vsel %vm228, %v877, 0
      %v936 = vsel %vm228, %v878, 0
      %v939 = vsel %vm228, %v879, 0
      %v942 = vsel %vm228, %v880, 0
      %v945 = vsel %vm228, %v881, 0
      %v947 = vsel %vm277, %v893, 0
      %949 = vmatprep.subr.mxu0 0.0
      %950 = vmatpush1.msra.mxu0 0.0
      %951 = vmatprep.subr.mxu0 0.0
      %952 = vmatpush1.msra.mxu0 0.0
      %953 = vmatprep.subr.mxu0 0.0
      %954 = vmatpush1.msra.mxu0 0.0
      %955 = vmatprep.subr.mxu0 0.0
      %956 = vmatpush1.msra.mxu0 0.0
      %957 = vmatprep.subr.mxu0 0.0
      %958 = vmatpush1.msra.mxu0 0.0
      %959 = vmatprep.subr.mxu0 0.0
      %960 = vmatpush1.msra.mxu0 0.0
      %961 = vmatprep.subr.mxu0 0.0
      %962 = vmatpush1.msra.mxu0 0.0
      %963 = vmatprep.subr.mxu0 0.0
      %964 = vmatpush1.msra.mxu0 0.0
      %965 = vmatprep.subr.mxu0 0.0
      %966 = vmatpush1.msra.mxu0 0.0
      %967 = vmatprep.subr.mxu0 0.0
      %968 = vmatpush1.msra.mxu0 0.0
      %969 = vmatprep.subr.mxu0 0.0
      %970 = vmatpush1.msra.mxu0 %v947
      %971 = vmatprep.subr.mxu0 0.0
      %972 = vmatpush1.msra.mxu0 %v891
      %973 = vmatprep.subr.mxu0 0.0
      %974 = vmatpush1.msra.mxu0 %v889
      %975 = vmatprep.subr.mxu0 0.0
      %976 = vmatpush1.msra.mxu0 %v887
      %977 = vmatprep.subr.mxu0 0.0
      %978 = vmatpush1.msra.mxu0 %v885
      %979 = vmatprep.subr.mxu0 0.0
      %980 = vmatpush1.msra.mxu0 %v883
      %981 = vmatprep.subr.mxu0 0.0
      %982 = vmatpush2.msra.mxu0 0.0
      %983 = vmatprep.subr.mxu0 0.0
      %984 = vmatpush2.msra.mxu0 0.0
      %985 = vmatprep.subr.mxu0 0.0
      %986 = vmatpush2.msra.mxu0 0.0
      %987 = vmatprep.subr.mxu0 0.0
      %988 = vmatpush2.msra.mxu0 0.0
      %989 = vmatprep.subr.mxu0 0.0
      %990 = vmatpush2.msra.mxu0 0.0
      %991 = vmatprep.subr.mxu0 0.0
      %992 = vmatpush2.msra.mxu0 0.0
      %993 = vmatprep.subr.mxu0 0.0
      %994 = vmatpush2.msra.mxu0 0.0
      %995 = vmatprep.subr.mxu0 0.0
      %996 = vmatpush2.msra.mxu0 0.0
      %997 = vmatprep.subr.mxu0 0.0
      %998 = vmatpush2.msra.mxu0 0.0
      %999 = vmatprep.subr.mxu0 0.0
      %1000 = vmatpush2.msra.mxu0 0.0
      %1001 = vmatprep.subr.mxu0 0.0
      %1002 = vmatpush2.msra.mxu0 0.0
      %1003 = vmatprep.subr.mxu0 0.0
      %1004 = vmatpush2.msra.mxu0 0.0
      %1005 = vmatprep.subr.mxu0 0.0
      %1006 = vmatpush2.msra.mxu0 0.0
      %1007 = vmatprep.subr.mxu0 0.0
      %1008 = vmatpush2.msra.mxu0 0.0
      %1009 = vmatprep.subr.mxu0 0.0
      %1010 = vmatpush2.msra.mxu0 0.0
      %1011 = vmatprep.subr.mxu0 0.0
      %1012 = vmatpush2.msra.mxu0 0.0
      %1013 = vmatprep.mubr.f32.mxu0 0.0
      %1014 = vmatmul.mubr.f32.gmra.mxu0 %v900
      %v1015 = vpop.f32.mrf.mxu0
      %v1016 = vadd.f32 0.0, %v1015
      %v1017 = vpop.f32.mrf.mxu0
      %1018 = vmatprep.mubr.f32.mxu0 0.0
      %1019 = vmatmul.mubr.f32.gmra.mxu0 %v903
      %v1020 = vpop.f32.mrf.mxu0
      %v1021 = vadd.f32 0.0, %v1020
      %v1022 = vpop.f32.mrf.mxu0
      %1023 = vmatprep.mubr.f32.mxu0 0.0
      %1024 = vmatmul.mubr.f32.gmra.mxu0 %v906
      %v1025 = vpop.f32.mrf.mxu0
      %v1026 = vadd.f32 0.0, %v1025
      %v1027 = vpop.f32.mrf.mxu0
      %1028 = vmatprep.mubr.f32.mxu0 0.0
      %1029 = vmatmul.mubr.f32.gmra.mxu0 %v909
      %v1030 = vpop.f32.mrf.mxu0
      %v1031 = vadd.f32 0.0, %v1030
      %v1032 = vpop.f32.mrf.mxu0
      %1033 = vmatprep.mubr.f32.mxu0 0.0
      %1034 = vmatmul.mubr.f32.gmra.mxu0 %v912
      %v1035 = vpop.f32.mrf.mxu0
      %v1036 = vadd.f32 0.0, %v1035
      %v1037 = vpop.f32.mrf.mxu0
      %1038 = vmatprep.mubr.f32.mxu0 0.0
      %1039 = vmatmul.mubr.f32.gmra.mxu0 %v915
      %v1040 = vpop.f32.mrf.mxu0
      %v1041 = vadd.f32 0.0, %v1040
      %v1042 = vpop.f32.mrf.mxu0
      %1043 = vmatprep.mubr.f32.mxu0 0.0
      %1044 = vmatmul.mubr.f32.gmra.mxu0 %v918
      %v1045 = vpop.f32.mrf.mxu0
      %v1046 = vadd.f32 0.0, %v1045
      %v1047 = vpop.f32.mrf.mxu0
      %1048 = vmatprep.mubr.f32.mxu0 0.0
      %1049 = vmatmul.mubr.f32.gmra.mxu0 %v921
      %v1050 = vpop.f32.mrf.mxu0
      %v1051 = vadd.f32 0.0, %v1050
      %v1052 = vpop.f32.mrf.mxu0
      %1053 = vmatprep.mubr.f32.mxu0 0.0
      %1054 = vmatmul.mubr.f32.gmra.mxu0 %v924
      %v1055 = vpop.f32.mrf.mxu0
      %v1056 = vadd.f32 0.0, %v1055
      %v1057 = vpop.f32.mrf.mxu0
      %1058 = vmatprep.mubr.f32.mxu0 0.0
      %1059 = vmatmul.mubr.f32.gmra.mxu0 %v927
      %v1060 = vpop.f32.mrf.mxu0
      %v1061 = vadd.f32 0.0, %v1060
      %v1062 = vpop.f32.mrf.mxu0
      %1063 = vmatprep.mubr.f32.mxu0 0.0
      %1064 = vmatmul.mubr.f32.gmra.mxu0 %v930
      %v1065 = vpop.f32.mrf.mxu0
      %v1066 = vadd.f32 0.0, %v1065
      %v1067 = vpop.f32.mrf.mxu0
      %1068 = vmatprep.mubr.f32.mxu0 0.0
      %1069 = vmatmul.mubr.f32.gmra.mxu0 %v933
      %v1070 = vpop.f32.mrf.mxu0
      %v1071 = vadd.f32 0.0, %v1070
      %v1072 = vpop.f32.mrf.mxu0
      %1073 = vmatprep.mubr.f32.mxu0 0.0
      %1074 = vmatmul.mubr.f32.gmra.mxu0 %v936
      %v1075 = vpop.f32.mrf.mxu0
      %v1076 = vadd.f32 0.0, %v1075
      %v1077 = vpop.f32.mrf.mxu0
      %1078 = vmatprep.mubr.f32.mxu0 0.0
      %1079 = vmatmul.mubr.f32.gmra.mxu0 %v939
      %v1080 = vpop.f32.mrf.mxu0
      %v1081 = vadd.f32 0.0, %v1080
      %v1082 = vpop.f32.mrf.mxu0
      %1083 = vmatprep.mubr.f32.mxu0 0.0
      %1084 = vmatmul.mubr.f32.gmra.mxu0 %v942
      %v1085 = vpop.f32.mrf.mxu0
      %v1086 = vadd.f32 0.0, %v1085
      %v1087 = vpop.f32.mrf.mxu0
      %1088 = vmatprep.mubr.f32.mxu0 0.0
      %1089 = vmatmul.mubr.f32.gmra.mxu0 %v945
      %v1090 = vpop.f32.mrf.mxu0
      %v1091 = vadd.f32 0.0, %v1090
      %v1092 = vpop.f32.mrf.mxu0
      %1093 = vdwg.mxu0
      %v1094 = vadd.f32 %v849, %v1016
      %v1095 = vadd.f32 %v850, %v1021
      %v1096 = vadd.f32 %v851, %v1026
      %v1097 = vadd.f32 %v852, %v1031
      %v1098 = vadd.f32 %v853, %v1036
      %v1099 = vadd.f32 %v854, %v1041
      %v1100 = vadd.f32 %v855, %v1046
      %v1101 = vadd.f32 %v856, %v1051
      %v1102 = vadd.f32 %v857, %v1056
      %v1103 = vadd.f32 %v858, %v1061
      %v1104 = vadd.f32 %v859, %v1066
      %v1105 = vadd.f32 %v860, %v1071
      %v1106 = vadd.f32 %v861, %v1076
      %v1107 = vadd.f32 %v862, %v1081
      %v1108 = vadd.f32 %v863, %v1086
      %v1109 = vadd.f32 %v864, %v1091
      %s1110 = scalar_lea.vmem %s1, 1024
      %v1111 = vld [vmem:[%s1110] sm:$0xff]
      %v1112 = vld [vmem:[%s1110 + $0x8] sm:$0xff]
      %v1113 = vld [vmem:[%s1110 + $0x10] sm:$0xff]
      %v1114 = vld [vmem:[%s1110 + $0x18] sm:$0xff]
      %v1115 = vld [vmem:[%s1110 + $0x20] sm:$0xff]
      %v1116 = vld [vmem:[%s1110 + $0x28] sm:$0xff]
      %v1117 = vld [vmem:[%s1110 + $0x30] sm:$0xff]
      %v1118 = vld [vmem:[%s1110 + $0x38] sm:$0xff]
      %v1119 = vld [vmem:[%s1110 + $0x40] sm:$0xff]
      %v1120 = vld [vmem:[%s1110 + $0x48] sm:$0xff]
      %v1121 = vld [vmem:[%s1110 + $0x50] sm:$0xff]
      %v1122 = vld [vmem:[%s1110 + $0x58] sm:$0xff]
      %v1123 = vld [vmem:[%s1110 + $0x60] sm:$0xff]
      %v1124 = vld [vmem:[%s1110 + $0x68] sm:$0xff]
      %v1125 = vld [vmem:[%s1110 + $0x70] sm:$0xff]
      %v1126 = vld [vmem:[%s1110 + $0x78] sm:$0xff]
      %1127 = vrot.lane.b32.xlu0 %v166, 124
      %v1128 = vpop.permute.xlu0 %1127
      %1129 = vrot.lane.b32.xlu0 %v167, 124
      %v1130 = vpop.permute.xlu0 %1129
      %1131 = vrot.lane.b32.xlu0 %v168, 124
      %v1132 = vpop.permute.xlu0 %1131
      %1133 = vrot.lane.b32.xlu0 %v169, 124
      %v1134 = vpop.permute.xlu0 %1133
      %1135 = vrot.lane.b32.xlu0 %v170, 124
      %v1136 = vpop.permute.xlu0 %1135
      %1137 = vrot.lane.b32.xlu0 %v171, 124
      %v1138 = vpop.permute.xlu0 %1137
      %v1145 = vsel %vm228, %v1111, 0
      %v1148 = vsel %vm228, %v1112, 0
      %v1151 = vsel %vm228, %v1113, 0
      %v1154 = vsel %vm228, %v1114, 0
      %v1157 = vsel %vm228, %v1115, 0
      %v1160 = vsel %vm228, %v1116, 0
      %v1163 = vsel %vm228, %v1117, 0
      %v1166 = vsel %vm228, %v1118, 0
      %v1169 = vsel %vm228, %v1119, 0
      %v1172 = vsel %vm228, %v1120, 0
      %v1175 = vsel %vm228, %v1121, 0
      %v1178 = vsel %vm228, %v1122, 0
      %v1181 = vsel %vm228, %v1123, 0
      %v1184 = vsel %vm228, %v1124, 0
      %v1187 = vsel %vm228, %v1125, 0
      %v1190 = vsel %vm228, %v1126, 0
      %v1192 = vsel %vm277, %v1138, 0
      %1194 = vmatprep.subr.mxu0 0.0
      %1195 = vmatpush1.msra.mxu0 0.0
      %1196 = vmatprep.subr.mxu0 0.0
      %1197 = vmatpush1.msra.mxu0 0.0
      %1198 = vmatprep.subr.mxu0 0.0
      %1199 = vmatpush1.msra.mxu0 0.0
      %1200 = vmatprep.subr.mxu0 0.0
      %1201 = vmatpush1.msra.mxu0 0.0
      %1202 = vmatprep.subr.mxu0 0.0
      %1203 = vmatpush1.msra.mxu0 0.0
      %1204 = vmatprep.subr.mxu0 0.0
      %1205 = vmatpush1.msra.mxu0 0.0
      %1206 = vmatprep.subr.mxu0 0.0
      %1207 = vmatpush1.msra.mxu0 0.0
      %1208 = vmatprep.subr.mxu0 0.0
      %1209 = vmatpush1.msra.mxu0 0.0
      %1210 = vmatprep.subr.mxu0 0.0
      %1211 = vmatpush1.msra.mxu0 0.0
      %1212 = vmatprep.subr.mxu0 0.0
      %1213 = vmatpush1.msra.mxu0 0.0
      %1214 = vmatprep.subr.mxu0 0.0
      %1215 = vmatpush1.msra.mxu0 %v1192
      %1216 = vmatprep.subr.mxu0 0.0
      %1217 = vmatpush1.msra.mxu0 %v1136
      %1218 = vmatprep.subr.mxu0 0.0
      %1219 = vmatpush1.msra.mxu0 %v1134
      %1220 = vmatprep.subr.mxu0 0.0
      %1221 = vmatpush1.msra.mxu0 %v1132
      %1222 = vmatprep.subr.mxu0 0.0
      %1223 = vmatpush1.msra.mxu0 %v1130
      %1224 = vmatprep.subr.mxu0 0.0
      %1225 = vmatpush1.msra.mxu0 %v1128
      %1226 = vmatprep.subr.mxu0 0.0
      %1227 = vmatpush2.msra.mxu0 0.0
      %1228 = vmatprep.subr.mxu0 0.0
      %1229 = vmatpush2.msra.mxu0 0.0
      %1230 = vmatprep.subr.mxu0 0.0
      %1231 = vmatpush2.msra.mxu0 0.0
      %1232 = vmatprep.subr.mxu0 0.0
      %1233 = vmatpush2.msra.mxu0 0.0
      %1234 = vmatprep.subr.mxu0 0.0
      %1235 = vmatpush2.msra.mxu0 0.0
      %1236 = vmatprep.subr.mxu0 0.0
      %1237 = vmatpush2.msra.mxu0 0.0
      %1238 = vmatprep.subr.mxu0 0.0
      %1239 = vmatpush2.msra.mxu0 0.0
      %1240 = vmatprep.subr.mxu0 0.0
      %1241 = vmatpush2.msra.mxu0 0.0
      %1242 = vmatprep.subr.mxu0 0.0
      %1243 = vmatpush2.msra.mxu0 0.0
      %1244 = vmatprep.subr.mxu0 0.0
      %1245 = vmatpush2.msra.mxu0 0.0
      %1246 = vmatprep.subr.mxu0 0.0
      %1247 = vmatpush2.msra.mxu0 0.0
      %1248 = vmatprep.subr.mxu0 0.0
      %1249 = vmatpush2.msra.mxu0 0.0
      %1250 = vmatprep.subr.mxu0 0.0
      %1251 = vmatpush2.msra.mxu0 0.0
      %1252 = vmatprep.subr.mxu0 0.0
      %1253 = vmatpush2.msra.mxu0 0.0
      %1254 = vmatprep.subr.mxu0 0.0
      %1255 = vmatpush2.msra.mxu0 0.0
      %1256 = vmatprep.subr.mxu0 0.0
      %1257 = vmatpush2.msra.mxu0 0.0
      %1258 = vmatprep.mubr.f32.mxu0 0.0
      %1259 = vmatmul.mubr.f32.gmra.mxu0 %v1145
      %v1260 = vpop.f32.mrf.mxu0
      %v1261 = vadd.f32 0.0, %v1260
      %v1262 = vpop.f32.mrf.mxu0
      %1263 = vmatprep.mubr.f32.mxu0 0.0
      %1264 = vmatmul.mubr.f32.gmra.mxu0 %v1148
      %v1265 = vpop.f32.mrf.mxu0
      %v1266 = vadd.f32 0.0, %v1265
      %v1267 = vpop.f32.mrf.mxu0
      %1268 = vmatprep.mubr.f32.mxu0 0.0
      %1269 = vmatmul.mubr.f32.gmra.mxu0 %v1151
      %v1270 = vpop.f32.mrf.mxu0
      %v1271 = vadd.f32 0.0, %v1270
      %v1272 = vpop.f32.mrf.mxu0
      %1273 = vmatprep.mubr.f32.mxu0 0.0
      %1274 = vmatmul.mubr.f32.gmra.mxu0 %v1154
      %v1275 = vpop.f32.mrf.mxu0
      %v1276 = vadd.f32 0.0, %v1275
      %v1277 = vpop.f32.mrf.mxu0
      %1278 = vmatprep.mubr.f32.mxu0 0.0
      %1279 = vmatmul.mubr.f32.gmra.mxu0 %v1157
      %v1280 = vpop.f32.mrf.mxu0
      %v1281 = vadd.f32 0.0, %v1280
      %v1282 = vpop.f32.mrf.mxu0
      %1283 = vmatprep.mubr.f32.mxu0 0.0
      %1284 = vmatmul.mubr.f32.gmra.mxu0 %v1160
      %v1285 = vpop.f32.mrf.mxu0
      %v1286 = vadd.f32 0.0, %v1285
      %v1287 = vpop.f32.mrf.mxu0
      %1288 = vmatprep.mubr.f32.mxu0 0.0
      %1289 = vmatmul.mubr.f32.gmra.mxu0 %v1163
      %v1290 = vpop.f32.mrf.mxu0
      %v1291 = vadd.f32 0.0, %v1290
      %v1292 = vpop.f32.mrf.mxu0
      %1293 = vmatprep.mubr.f32.mxu0 0.0
      %1294 = vmatmul.mubr.f32.gmra.mxu0 %v1166
      %v1295 = vpop.f32.mrf.mxu0
      %v1296 = vadd.f32 0.0, %v1295
      %v1297 = vpop.f32.mrf.mxu0
      %1298 = vmatprep.mubr.f32.mxu0 0.0
      %1299 = vmatmul.mubr.f32.gmra.mxu0 %v1169
      %v1300 = vpop.f32.mrf.mxu0
      %v1301 = vadd.f32 0.0, %v1300
      %v1302 = vpop.f32.mrf.mxu0
      %1303 = vmatprep.mubr.f32.mxu0 0.0
      %1304 = vmatmul.mubr.f32.gmra.mxu0 %v1172
      %v1305 = vpop.f32.mrf.mxu0
      %v1306 = vadd.f32 0.0, %v1305
      %v1307 = vpop.f32.mrf.mxu0
      %1308 = vmatprep.mubr.f32.mxu0 0.0
      %1309 = vmatmul.mubr.f32.gmra.mxu0 %v1175
      %v1310 = vpop.f32.mrf.mxu0
      %v1311 = vadd.f32 0.0, %v1310
      %v1312 = vpop.f32.mrf.mxu0
      %1313 = vmatprep.mubr.f32.mxu0 0.0
      %1314 = vmatmul.mubr.f32.gmra.mxu0 %v1178
      %v1315 = vpop.f32.mrf.mxu0
      %v1316 = vadd.f32 0.0, %v1315
      %v1317 = vpop.f32.mrf.mxu0
      %1318 = vmatprep.mubr.f32.mxu0 0.0
      %1319 = vmatmul.mubr.f32.gmra.mxu0 %v1181
      %v1320 = vpop.f32.mrf.mxu0
      %v1321 = vadd.f32 0.0, %v1320
      %v1322 = vpop.f32.mrf.mxu0
      %1323 = vmatprep.mubr.f32.mxu0 0.0
      %1324 = vmatmul.mubr.f32.gmra.mxu0 %v1184
      %v1325 = vpop.f32.mrf.mxu0
      %v1326 = vadd.f32 0.0, %v1325
      %v1327 = vpop.f32.mrf.mxu0
      %1328 = vmatprep.mubr.f32.mxu0 0.0
      %1329 = vmatmul.mubr.f32.gmra.mxu0 %v1187
      %v1330 = vpop.f32.mrf.mxu0
      %v1331 = vadd.f32 0.0, %v1330
      %v1332 = vpop.f32.mrf.mxu0
      %1333 = vmatprep.mubr.f32.mxu0 0.0
      %1334 = vmatmul.mubr.f32.gmra.mxu0 %v1190
      %v1335 = vpop.f32.mrf.mxu0
      %v1336 = vadd.f32 0.0, %v1335
      %v1337 = vpop.f32.mrf.mxu0
      %1338 = vdwg.mxu0
      %v1339 = vadd.f32 %v1094, %v1261
      %v1340 = vadd.f32 %v1095, %v1266
      %v1341 = vadd.f32 %v1096, %v1271
      %v1342 = vadd.f32 %v1097, %v1276
      %v1343 = vadd.f32 %v1098, %v1281
      %v1344 = vadd.f32 %v1099, %v1286
      %v1345 = vadd.f32 %v1100, %v1291
      %v1346 = vadd.f32 %v1101, %v1296
      %v1347 = vadd.f32 %v1102, %v1301
      %v1348 = vadd.f32 %v1103, %v1306
      %v1349 = vadd.f32 %v1104, %v1311
      %v1350 = vadd.f32 %v1105, %v1316
      %v1351 = vadd.f32 %v1106, %v1321
      %v1352 = vadd.f32 %v1107, %v1326
      %v1353 = vadd.f32 %v1108, %v1331
      %v1354 = vadd.f32 %v1109, %v1336
      %s1355 = scalar_lea.vmem %s154, 48
      %v1356 = vld [vmem:[%s1355] sm:$0xff]
      %v1357 = vld [vmem:[%s1355 + $0x8] sm:$0xff]
      %v1358 = vld [vmem:[%s1355 + $0x10] sm:$0xff]
      %v1359 = vld [vmem:[%s1355 + $0x18] sm:$0xff]
      %v1360 = vld [vmem:[%s1355 + $0x20] sm:$0xff]
      %v1361 = vld [vmem:[%s1355 + $0x28] sm:$0x1]
      %s1362 = scalar_lea.vmem %s1, 128
      %v1363 = vld [vmem:[%s1362] sm:$0xff]
      %v1364 = vld [vmem:[%s1362 + $0x8] sm:$0xff]
      %v1365 = vld [vmem:[%s1362 + $0x10] sm:$0xff]
      %v1366 = vld [vmem:[%s1362 + $0x18] sm:$0xff]
      %v1367 = vld [vmem:[%s1362 + $0x20] sm:$0xff]
      %v1368 = vld [vmem:[%s1362 + $0x28] sm:$0xff]
      %v1369 = vld [vmem:[%s1362 + $0x30] sm:$0xff]
      %v1370 = vld [vmem:[%s1362 + $0x38] sm:$0xff]
      %v1371 = vld [vmem:[%s1362 + $0x40] sm:$0xff]
      %v1372 = vld [vmem:[%s1362 + $0x48] sm:$0xff]
      %v1373 = vld [vmem:[%s1362 + $0x50] sm:$0xff]
      %v1374 = vld [vmem:[%s1362 + $0x58] sm:$0xff]
      %v1375 = vld [vmem:[%s1362 + $0x60] sm:$0xff]
      %v1376 = vld [vmem:[%s1362 + $0x68] sm:$0xff]
      %v1377 = vld [vmem:[%s1362 + $0x70] sm:$0xff]
      %v1378 = vld [vmem:[%s1362 + $0x78] sm:$0xff]
      %v1380 = vsel %vm228, %v1363, 0
      %v1383 = vsel %vm228, %v1364, 0
      %v1386 = vsel %vm228, %v1365, 0
      %v1389 = vsel %vm228, %v1366, 0
      %v1392 = vsel %vm228, %v1367, 0
      %v1395 = vsel %vm228, %v1368, 0
      %v1398 = vsel %vm228, %v1369, 0
      %v1401 = vsel %vm228, %v1370, 0
      %v1404 = vsel %vm228, %v1371, 0
      %v1407 = vsel %vm228, %v1372, 0
      %v1410 = vsel %vm228, %v1373, 0
      %v1413 = vsel %vm228, %v1374, 0
      %v1416 = vsel %vm228, %v1375, 0
      %v1419 = vsel %vm228, %v1376, 0
      %v1422 = vsel %vm228, %v1377, 0
      %v1425 = vsel %vm228, %v1378, 0
      %v1428 = vsel %vm277, %v1361, 0
      %1430 = vmatprep.subr.mxu0 0.0
      %1431 = vmatpush1.msra.mxu0 0.0
      %1432 = vmatprep.subr.mxu0 0.0
      %1433 = vmatpush1.msra.mxu0 0.0
      %1434 = vmatprep.subr.mxu0 0.0
      %1435 = vmatpush1.msra.mxu0 0.0
      %1436 = vmatprep.subr.mxu0 0.0
      %1437 = vmatpush1.msra.mxu0 0.0
      %1438 = vmatprep.subr.mxu0 0.0
      %1439 = vmatpush1.msra.mxu0 0.0
      %1440 = vmatprep.subr.mxu0 0.0
      %1441 = vmatpush1.msra.mxu0 0.0
      %1442 = vmatprep.subr.mxu0 0.0
      %1443 = vmatpush1.msra.mxu0 0.0
      %1444 = vmatprep.subr.mxu0 0.0
      %1445 = vmatpush1.msra.mxu0 0.0
      %1446 = vmatprep.subr.mxu0 0.0
      %1447 = vmatpush1.msra.mxu0 0.0
      %1448 = vmatprep.subr.mxu0 0.0
      %1449 = vmatpush1.msra.mxu0 0.0
      %1450 = vmatprep.subr.mxu0 0.0
      %1451 = vmatpush1.msra.mxu0 %v1428
      %1452 = vmatprep.subr.mxu0 0.0
      %1453 = vmatpush1.msra.mxu0 %v1360
      %1454 = vmatprep.subr.mxu0 0.0
      %1455 = vmatpush1.msra.mxu0 %v1359
      %1456 = vmatprep.subr.mxu0 0.0
      %1457 = vmatpush1.msra.mxu0 %v1358
      %1458 = vmatprep.subr.mxu0 0.0
      %1459 = vmatpush1.msra.mxu0 %v1357
      %1460 = vmatprep.subr.mxu0 0.0
      %1461 = vmatpush1.msra.mxu0 %v1356
      %1462 = vmatprep.subr.mxu0 0.0
      %1463 = vmatpush2.msra.mxu0 0.0
      %1464 = vmatprep.subr.mxu0 0.0
      %1465 = vmatpush2.msra.mxu0 0.0
      %1466 = vmatprep.subr.mxu0 0.0
      %1467 = vmatpush2.msra.mxu0 0.0
      %1468 = vmatprep.subr.mxu0 0.0
      %1469 = vmatpush2.msra.mxu0 0.0
      %1470 = vmatprep.subr.mxu0 0.0
      %1471 = vmatpush2.msra.mxu0 0.0
      %1472 = vmatprep.subr.mxu0 0.0
      %1473 = vmatpush2.msra.mxu0 0.0
      %1474 = vmatprep.subr.mxu0 0.0
      %1475 = vmatpush2.msra.mxu0 0.0
      %1476 = vmatprep.subr.mxu0 0.0
      %1477 = vmatpush2.msra.mxu0 0.0
      %1478 = vmatprep.subr.mxu0 0.0
      %1479 = vmatpush2.msra.mxu0 0.0
      %1480 = vmatprep.subr.mxu0 0.0
      %1481 = vmatpush2.msra.mxu0 0.0
      %1482 = vmatprep.subr.mxu0 0.0
      %1483 = vmatpush2.msra.mxu0 0.0
      %1484 = vmatprep.subr.mxu0 0.0
      %1485 = vmatpush2.msra.mxu0 0.0
      %1486 = vmatprep.subr.mxu0 0.0
      %1487 = vmatpush2.msra.mxu0 0.0
      %1488 = vmatprep.subr.mxu0 0.0
      %1489 = vmatpush2.msra.mxu0 0.0
      %1490 = vmatprep.subr.mxu0 0.0
      %1491 = vmatpush2.msra.mxu0 0.0
      %1492 = vmatprep.subr.mxu0 0.0
      %1493 = vmatpush2.msra.mxu0 0.0
      %1494 = vmatprep.mubr.f32.mxu0 0.0
      %1495 = vmatmul.mubr.f32.gmra.mxu0 %v1380
      %v1496 = vpop.f32.mrf.mxu0
      %v1497 = vadd.f32 0.0, %v1496
      %v1498 = vpop.f32.mrf.mxu0
      %1499 = vmatprep.mubr.f32.mxu0 0.0
      %1500 = vmatmul.mubr.f32.gmra.mxu0 %v1383
      %v1501 = vpop.f32.mrf.mxu0
      %v1502 = vadd.f32 0.0, %v1501
      %v1503 = vpop.f32.mrf.mxu0
      %1504 = vmatprep.mubr.f32.mxu0 0.0
      %1505 = vmatmul.mubr.f32.gmra.mxu0 %v1386
      %v1506 = vpop.f32.mrf.mxu0
      %v1507 = vadd.f32 0.0, %v1506
      %v1508 = vpop.f32.mrf.mxu0
      %1509 = vmatprep.mubr.f32.mxu0 0.0
      %1510 = vmatmul.mubr.f32.gmra.mxu0 %v1389
      %v1511 = vpop.f32.mrf.mxu0
      %v1512 = vadd.f32 0.0, %v1511
      %v1513 = vpop.f32.mrf.mxu0
      %1514 = vmatprep.mubr.f32.mxu0 0.0
      %1515 = vmatmul.mubr.f32.gmra.mxu0 %v1392
      %v1516 = vpop.f32.mrf.mxu0
      %v1517 = vadd.f32 0.0, %v1516
      %v1518 = vpop.f32.mrf.mxu0
      %1519 = vmatprep.mubr.f32.mxu0 0.0
      %1520 = vmatmul.mubr.f32.gmra.mxu0 %v1395
      %v1521 = vpop.f32.mrf.mxu0
      %v1522 = vadd.f32 0.0, %v1521
      %v1523 = vpop.f32.mrf.mxu0
      %1524 = vmatprep.mubr.f32.mxu0 0.0
      %1525 = vmatmul.mubr.f32.gmra.mxu0 %v1398
      %v1526 = vpop.f32.mrf.mxu0
      %v1527 = vadd.f32 0.0, %v1526
      %v1528 = vpop.f32.mrf.mxu0
      %1529 = vmatprep.mubr.f32.mxu0 0.0
      %1530 = vmatmul.mubr.f32.gmra.mxu0 %v1401
      %v1531 = vpop.f32.mrf.mxu0
      %v1532 = vadd.f32 0.0, %v1531
      %v1533 = vpop.f32.mrf.mxu0
      %1534 = vmatprep.mubr.f32.mxu0 0.0
      %1535 = vmatmul.mubr.f32.gmra.mxu0 %v1404
      %v1536 = vpop.f32.mrf.mxu0
      %v1537 = vadd.f32 0.0, %v1536
      %v1538 = vpop.f32.mrf.mxu0
      %1539 = vmatprep.mubr.f32.mxu0 0.0
      %1540 = vmatmul.mubr.f32.gmra.mxu0 %v1407
      %v1541 = vpop.f32.mrf.mxu0
      %v1542 = vadd.f32 0.0, %v1541
      %v1543 = vpop.f32.mrf.mxu0
      %1544 = vmatprep.mubr.f32.mxu0 0.0
      %1545 = vmatmul.mubr.f32.gmra.mxu0 %v1410
      %v1546 = vpop.f32.mrf.mxu0
      %v1547 = vadd.f32 0.0, %v1546
      %v1548 = vpop.f32.mrf.mxu0
      %1549 = vmatprep.mubr.f32.mxu0 0.0
      %1550 = vmatmul.mubr.f32.gmra.mxu0 %v1413
      %v1551 = vpop.f32.mrf.mxu0
      %v1552 = vadd.f32 0.0, %v1551
      %v1553 = vpop.f32.mrf.mxu0
      %1554 = vmatprep.mubr.f32.mxu0 0.0
      %1555 = vmatmul.mubr.f32.gmra.mxu0 %v1416
      %v1556 = vpop.f32.mrf.mxu0
      %v1557 = vadd.f32 0.0, %v1556
      %v1558 = vpop.f32.mrf.mxu0
      %1559 = vmatprep.mubr.f32.mxu0 0.0
      %1560 = vmatmul.mubr.f32.gmra.mxu0 %v1419
      %v1561 = vpop.f32.mrf.mxu0
      %v1562 = vadd.f32 0.0, %v1561
      %v1563 = vpop.f32.mrf.mxu0
      %1564 = vmatprep.mubr.f32.mxu0 0.0
      %1565 = vmatmul.mubr.f32.gmra.mxu0 %v1422
      %v1566 = vpop.f32.mrf.mxu0
      %v1567 = vadd.f32 0.0, %v1566
      %v1568 = vpop.f32.mrf.mxu0
      %1569 = vmatprep.mubr.f32.mxu0 0.0
      %1570 = vmatmul.mubr.f32.gmra.mxu0 %v1425
      %v1571 = vpop.f32.mrf.mxu0
      %v1572 = vadd.f32 0.0, %v1571
      %v1573 = vpop.f32.mrf.mxu0
      %1574 = vdwg.mxu0
      %v1575 = vadd.f32 %v1339, %v1497
      %v1576 = vadd.f32 %v1340, %v1502
      %v1577 = vadd.f32 %v1341, %v1507
      %v1578 = vadd.f32 %v1342, %v1512
      %v1579 = vadd.f32 %v1343, %v1517
      %v1580 = vadd.f32 %v1344, %v1522
      %v1581 = vadd.f32 %v1345, %v1527
      %v1582 = vadd.f32 %v1346, %v1532
      %v1583 = vadd.f32 %v1347, %v1537
      %v1584 = vadd.f32 %v1348, %v1542
      %v1585 = vadd.f32 %v1349, %v1547
      %v1586 = vadd.f32 %v1350, %v1552
      %v1587 = vadd.f32 %v1351, %v1557
      %v1588 = vadd.f32 %v1352, %v1562
      %v1589 = vadd.f32 %v1353, %v1567
      %v1590 = vadd.f32 %v1354, %v1572
      %s1591 = scalar_lea.vmem %s1, 384
      %v1592 = vld [vmem:[%s1591] sm:$0xff]
      %v1593 = vld [vmem:[%s1591 + $0x8] sm:$0xff]
      %v1594 = vld [vmem:[%s1591 + $0x10] sm:$0xff]
      %v1595 = vld [vmem:[%s1591 + $0x18] sm:$0xff]
      %v1596 = vld [vmem:[%s1591 + $0x20] sm:$0xff]
      %v1597 = vld [vmem:[%s1591 + $0x28] sm:$0xff]
      %v1598 = vld [vmem:[%s1591 + $0x30] sm:$0xff]
      %v1599 = vld [vmem:[%s1591 + $0x38] sm:$0xff]
      %v1600 = vld [vmem:[%s1591 + $0x40] sm:$0xff]
      %v1601 = vld [vmem:[%s1591 + $0x48] sm:$0xff]
      %v1602 = vld [vmem:[%s1591 + $0x50] sm:$0xff]
      %v1603 = vld [vmem:[%s1591 + $0x58] sm:$0xff]
      %v1604 = vld [vmem:[%s1591 + $0x60] sm:$0xff]
      %v1605 = vld [vmem:[%s1591 + $0x68] sm:$0xff]
      %v1606 = vld [vmem:[%s1591 + $0x70] sm:$0xff]
      %v1607 = vld [vmem:[%s1591 + $0x78] sm:$0xff]
      %1613 = vrot.lane.b32.xlu0 %v1356, 127
      %v1614 = vpop.permute.xlu0 %1613
      %1615 = vrot.lane.b32.xlu0 %v1357, 127
      %v1616 = vpop.permute.xlu0 %1615
      %1617 = vrot.lane.b32.xlu0 %v1358, 127
      %v1618 = vpop.permute.xlu0 %1617
      %1619 = vrot.lane.b32.xlu0 %v1359, 127
      %v1620 = vpop.permute.xlu0 %1619
      %1621 = vrot.lane.b32.xlu0 %v1360, 127
      %v1622 = vpop.permute.xlu0 %1621
      %1623 = vrot.lane.b32.xlu0 %v1361, 127
      %v1624 = vpop.permute.xlu0 %1623
      %v1631 = vsel %vm228, %v1592, 0
      %v1634 = vsel %vm228, %v1593, 0
      %v1637 = vsel %vm228, %v1594, 0
      %v1640 = vsel %vm228, %v1595, 0
      %v1643 = vsel %vm228, %v1596, 0
      %v1646 = vsel %vm228, %v1597, 0
      %v1649 = vsel %vm228, %v1598, 0
      %v1652 = vsel %vm228, %v1599, 0
      %v1655 = vsel %vm228, %v1600, 0
      %v1658 = vsel %vm228, %v1601, 0
      %v1661 = vsel %vm228, %v1602, 0
      %v1664 = vsel %vm228, %v1603, 0
      %v1667 = vsel %vm228, %v1604, 0
      %v1670 = vsel %vm228, %v1605, 0
      %v1673 = vsel %vm228, %v1606, 0
      %v1676 = vsel %vm228, %v1607, 0
      %v1678 = vsel %vm277, %v1624, 0
      %1680 = vmatprep.subr.mxu0 0.0
      %1681 = vmatpush1.msra.mxu0 0.0
      %1682 = vmatprep.subr.mxu0 0.0
      %1683 = vmatpush1.msra.mxu0 0.0
      %1684 = vmatprep.subr.mxu0 0.0
      %1685 = vmatpush1.msra.mxu0 0.0
      %1686 = vmatprep.subr.mxu0 0.0
      %1687 = vmatpush1.msra.mxu0 0.0
      %1688 = vmatprep.subr.mxu0 0.0
      %1689 = vmatpush1.msra.mxu0 0.0
      %1690 = vmatprep.subr.mxu0 0.0
      %1691 = vmatpush1.msra.mxu0 0.0
      %1692 = vmatprep.subr.mxu0 0.0
      %1693 = vmatpush1.msra.mxu0 0.0
      %1694 = vmatprep.subr.mxu0 0.0
      %1695 = vmatpush1.msra.mxu0 0.0
      %1696 = vmatprep.subr.mxu0 0.0
      %1697 = vmatpush1.msra.mxu0 0.0
      %1698 = vmatprep.subr.mxu0 0.0
      %1699 = vmatpush1.msra.mxu0 0.0
      %1700 = vmatprep.subr.mxu0 0.0
      %1701 = vmatpush1.msra.mxu0 %v1678
      %1702 = vmatprep.subr.mxu0 0.0
      %1703 = vmatpush1.msra.mxu0 %v1622
      %1704 = vmatprep.subr.mxu0 0.0
      %1705 = vmatpush1.msra.mxu0 %v1620
      %1706 = vmatprep.subr.mxu0 0.0
      %1707 = vmatpush1.msra.mxu0 %v1618
      %1708 = vmatprep.subr.mxu0 0.0
      %1709 = vmatpush1.msra.mxu0 %v1616
      %1710 = vmatprep.subr.mxu0 0.0
      %1711 = vmatpush1.msra.mxu0 %v1614
      %1712 = vmatprep.subr.mxu0 0.0
      %1713 = vmatpush2.msra.mxu0 0.0
      %1714 = vmatprep.subr.mxu0 0.0
      %1715 = vmatpush2.msra.mxu0 0.0
      %1716 = vmatprep.subr.mxu0 0.0
      %1717 = vmatpush2.msra.mxu0 0.0
      %1718 = vmatprep.subr.mxu0 0.0
      %1719 = vmatpush2.msra.mxu0 0.0
      %1720 = vmatprep.subr.mxu0 0.0
      %1721 = vmatpush2.msra.mxu0 0.0
      %1722 = vmatprep.subr.mxu0 0.0
      %1723 = vmatpush2.msra.mxu0 0.0
      %1724 = vmatprep.subr.mxu0 0.0
      %1725 = vmatpush2.msra.mxu0 0.0
      %1726 = vmatprep.subr.mxu0 0.0
      %1727 = vmatpush2.msra.mxu0 0.0
      %1728 = vmatprep.subr.mxu0 0.0
      %1729 = vmatpush2.msra.mxu0 0.0
      %1730 = vmatprep.subr.mxu0 0.0
      %1731 = vmatpush2.msra.mxu0 0.0
      %1732 = vmatprep.subr.mxu0 0.0
      %1733 = vmatpush2.msra.mxu0 0.0
      %1734 = vmatprep.subr.mxu0 0.0
      %1735 = vmatpush2.msra.mxu0 0.0
      %1736 = vmatprep.subr.mxu0 0.0
      %1737 = vmatpush2.msra.mxu0 0.0
      %1738 = vmatprep.subr.mxu0 0.0
      %1739 = vmatpush2.msra.mxu0 0.0
      %1740 = vmatprep.subr.mxu0 0.0
      %1741 = vmatpush2.msra.mxu0 0.0
      %1742 = vmatprep.subr.mxu0 0.0
      %1743 = vmatpush2.msra.mxu0 0.0
      %1744 = vmatprep.mubr.f32.mxu0 0.0
      %1745 = vmatmul.mubr.f32.gmra.mxu0 %v1631
      %v1746 = vpop.f32.mrf.mxu0
      %v1747 = vadd.f32 0.0, %v1746
      %v1748 = vpop.f32.mrf.mxu0
      %1749 = vmatprep.mubr.f32.mxu0 0.0
      %1750 = vmatmul.mubr.f32.gmra.mxu0 %v1634
      %v1751 = vpop.f32.mrf.mxu0
      %v1752 = vadd.f32 0.0, %v1751
      %v1753 = vpop.f32.mrf.mxu0
      %1754 = vmatprep.mubr.f32.mxu0 0.0
      %1755 = vmatmul.mubr.f32.gmra.mxu0 %v1637
      %v1756 = vpop.f32.mrf.mxu0
      %v1757 = vadd.f32 0.0, %v1756
      %v1758 = vpop.f32.mrf.mxu0
      %1759 = vmatprep.mubr.f32.mxu0 0.0
      %1760 = vmatmul.mubr.f32.gmra.mxu0 %v1640
      %v1761 = vpop.f32.mrf.mxu0
      %v1762 = vadd.f32 0.0, %v1761
      %v1763 = vpop.f32.mrf.mxu0
      %1764 = vmatprep.mubr.f32.mxu0 0.0
      %1765 = vmatmul.mubr.f32.gmra.mxu0 %v1643
      %v1766 = vpop.f32.mrf.mxu0
      %v1767 = vadd.f32 0.0, %v1766
      %v1768 = vpop.f32.mrf.mxu0
      %1769 = vmatprep.mubr.f32.mxu0 0.0
      %1770 = vmatmul.mubr.f32.gmra.mxu0 %v1646
      %v1771 = vpop.f32.mrf.mxu0
      %v1772 = vadd.f32 0.0, %v1771
      %v1773 = vpop.f32.mrf.mxu0
      %1774 = vmatprep.mubr.f32.mxu0 0.0
      %1775 = vmatmul.mubr.f32.gmra.mxu0 %v1649
      %v1776 = vpop.f32.mrf.mxu0
      %v1777 = vadd.f32 0.0, %v1776
      %v1778 = vpop.f32.mrf.mxu0
      %1779 = vmatprep.mubr.f32.mxu0 0.0
      %1780 = vmatmul.mubr.f32.gmra.mxu0 %v1652
      %v1781 = vpop.f32.mrf.mxu0
      %v1782 = vadd.f32 0.0, %v1781
      %v1783 = vpop.f32.mrf.mxu0
      %1784 = vmatprep.mubr.f32.mxu0 0.0
      %1785 = vmatmul.mubr.f32.gmra.mxu0 %v1655
      %v1786 = vpop.f32.mrf.mxu0
      %v1787 = vadd.f32 0.0, %v1786
      %v1788 = vpop.f32.mrf.mxu0
      %1789 = vmatprep.mubr.f32.mxu0 0.0
      %1790 = vmatmul.mubr.f32.gmra.mxu0 %v1658
      %v1791 = vpop.f32.mrf.mxu0
      %v1792 = vadd.f32 0.0, %v1791
      %v1793 = vpop.f32.mrf.mxu0
      %1794 = vmatprep.mubr.f32.mxu0 0.0
      %1795 = vmatmul.mubr.f32.gmra.mxu0 %v1661
      %v1796 = vpop.f32.mrf.mxu0
      %v1797 = vadd.f32 0.0, %v1796
      %v1798 = vpop.f32.mrf.mxu0
      %1799 = vmatprep.mubr.f32.mxu0 0.0
      %1800 = vmatmul.mubr.f32.gmra.mxu0 %v1664
      %v1801 = vpop.f32.mrf.mxu0
      %v1802 = vadd.f32 0.0, %v1801
      %v1803 = vpop.f32.mrf.mxu0
      %1804 = vmatprep.mubr.f32.mxu0 0.0
      %1805 = vmatmul.mubr.f32.gmra.mxu0 %v1667
      %v1806 = vpop.f32.mrf.mxu0
      %v1807 = vadd.f32 0.0, %v1806
      %v1808 = vpop.f32.mrf.mxu0
      %1809 = vmatprep.mubr.f32.mxu0 0.0
      %1810 = vmatmul.mubr.f32.gmra.mxu0 %v1670
      %v1811 = vpop.f32.mrf.mxu0
      %v1812 = vadd.f32 0.0, %v1811
      %v1813 = vpop.f32.mrf.mxu0
      %1814 = vmatprep.mubr.f32.mxu0 0.0
      %1815 = vmatmul.mubr.f32.gmra.mxu0 %v1673
      %v1816 = vpop.f32.mrf.mxu0
      %v1817 = vadd.f32 0.0, %v1816
      %v1818 = vpop.f32.mrf.mxu0
      %1819 = vmatprep.mubr.f32.mxu0 0.0
      %1820 = vmatmul.mubr.f32.gmra.mxu0 %v1676
      %v1821 = vpop.f32.mrf.mxu0
      %v1822 = vadd.f32 0.0, %v1821
      %v1823 = vpop.f32.mrf.mxu0
      %1824 = vdwg.mxu0
      %v1825 = vadd.f32 %v1575, %v1747
      %v1826 = vadd.f32 %v1576, %v1752
      %v1827 = vadd.f32 %v1577, %v1757
      %v1828 = vadd.f32 %v1578, %v1762
      %v1829 = vadd.f32 %v1579, %v1767
      %v1830 = vadd.f32 %v1580, %v1772
      %v1831 = vadd.f32 %v1581, %v1777
      %v1832 = vadd.f32 %v1582, %v1782
      %v1833 = vadd.f32 %v1583, %v1787
      %v1834 = vadd.f32 %v1584, %v1792
      %v1835 = vadd.f32 %v1585, %v1797
      %v1836 = vadd.f32 %v1586, %v1802
      %v1837 = vadd.f32 %v1587, %v1807
      %v1838 = vadd.f32 %v1588, %v1812
      %v1839 = vadd.f32 %v1589, %v1817
      %v1840 = vadd.f32 %v1590, %v1822
      %s1841 = scalar_lea.vmem %s1, 640
      %v1842 = vld [vmem:[%s1841] sm:$0xff]
      %v1843 = vld [vmem:[%s1841 + $0x8] sm:$0xff]
      %v1844 = vld [vmem:[%s1841 + $0x10] sm:$0xff]
      %v1845 = vld [vmem:[%s1841 + $0x18] sm:$0xff]
      %v1846 = vld [vmem:[%s1841 + $0x20] sm:$0xff]
      %v1847 = vld [vmem:[%s1841 + $0x28] sm:$0xff]
      %v1848 = vld [vmem:[%s1841 + $0x30] sm:$0xff]
      %v1849 = vld [vmem:[%s1841 + $0x38] sm:$0xff]
      %v1850 = vld [vmem:[%s1841 + $0x40] sm:$0xff]
      %v1851 = vld [vmem:[%s1841 + $0x48] sm:$0xff]
      %v1852 = vld [vmem:[%s1841 + $0x50] sm:$0xff]
      %v1853 = vld [vmem:[%s1841 + $0x58] sm:$0xff]
      %v1854 = vld [vmem:[%s1841 + $0x60] sm:$0xff]
      %v1855 = vld [vmem:[%s1841 + $0x68] sm:$0xff]
      %v1856 = vld [vmem:[%s1841 + $0x70] sm:$0xff]
      %v1857 = vld [vmem:[%s1841 + $0x78] sm:$0xff]
      %1858 = vrot.lane.b32.xlu0 %v1356, 126
      %v1859 = vpop.permute.xlu0 %1858
      %1860 = vrot.lane.b32.xlu0 %v1357, 126
      %v1861 = vpop.permute.xlu0 %1860
      %1862 = vrot.lane.b32.xlu0 %v1358, 126
      %v1863 = vpop.permute.xlu0 %1862
      %1864 = vrot.lane.b32.xlu0 %v1359, 126
      %v1865 = vpop.permute.xlu0 %1864
      %1866 = vrot.lane.b32.xlu0 %v1360, 126
      %v1867 = vpop.permute.xlu0 %1866
      %1868 = vrot.lane.b32.xlu0 %v1361, 126
      %v1869 = vpop.permute.xlu0 %1868
      %v1876 = vsel %vm228, %v1842, 0
      %v1879 = vsel %vm228, %v1843, 0
      %v1882 = vsel %vm228, %v1844, 0
      %v1885 = vsel %vm228, %v1845, 0
      %v1888 = vsel %vm228, %v1846, 0
      %v1891 = vsel %vm228, %v1847, 0
      %v1894 = vsel %vm228, %v1848, 0
      %v1897 = vsel %vm228, %v1849, 0
      %v1900 = vsel %vm228, %v1850, 0
      %v1903 = vsel %vm228, %v1851, 0
      %v1906 = vsel %vm228, %v1852, 0
      %v1909 = vsel %vm228, %v1853, 0
      %v1912 = vsel %vm228, %v1854, 0
      %v1915 = vsel %vm228, %v1855, 0
      %v1918 = vsel %vm228, %v1856, 0
      %v1921 = vsel %vm228, %v1857, 0
      %v1923 = vsel %vm277, %v1869, 0
      %1925 = vmatprep.subr.mxu0 0.0
      %1926 = vmatpush1.msra.mxu0 0.0
      %1927 = vmatprep.subr.mxu0 0.0
      %1928 = vmatpush1.msra.mxu0 0.0
      %1929 = vmatprep.subr.mxu0 0.0
      %1930 = vmatpush1.msra.mxu0 0.0
      %1931 = vmatprep.subr.mxu0 0.0
      %1932 = vmatpush1.msra.mxu0 0.0
      %1933 = vmatprep.subr.mxu0 0.0
      %1934 = vmatpush1.msra.mxu0 0.0
      %1935 = vmatprep.subr.mxu0 0.0
      %1936 = vmatpush1.msra.mxu0 0.0
      %1937 = vmatprep.subr.mxu0 0.0
      %1938 = vmatpush1.msra.mxu0 0.0
      %1939 = vmatprep.subr.mxu0 0.0
      %1940 = vmatpush1.msra.mxu0 0.0
      %1941 = vmatprep.subr.mxu0 0.0
      %1942 = vmatpush1.msra.mxu0 0.0
      %1943 = vmatprep.subr.mxu0 0.0
      %1944 = vmatpush1.msra.mxu0 0.0
      %1945 = vmatprep.subr.mxu0 0.0
      %1946 = vmatpush1.msra.mxu0 %v1923
      %1947 = vmatprep.subr.mxu0 0.0
      %1948 = vmatpush1.msra.mxu0 %v1867
      %1949 = vmatprep.subr.mxu0 0.0
      %1950 = vmatpush1.msra.mxu0 %v1865
      %1951 = vmatprep.subr.mxu0 0.0
      %1952 = vmatpush1.msra.mxu0 %v1863
      %1953 = vmatprep.subr.mxu0 0.0
      %1954 = vmatpush1.msra.mxu0 %v1861
      %1955 = vmatprep.subr.mxu0 0.0
      %1956 = vmatpush1.msra.mxu0 %v1859
      %1957 = vmatprep.subr.mxu0 0.0
      %1958 = vmatpush2.msra.mxu0 0.0
      %1959 = vmatprep.subr.mxu0 0.0
      %1960 = vmatpush2.msra.mxu0 0.0
      %1961 = vmatprep.subr.mxu0 0.0
      %1962 = vmatpush2.msra.mxu0 0.0
      %1963 = vmatprep.subr.mxu0 0.0
      %1964 = vmatpush2.msra.mxu0 0.0
      %1965 = vmatprep.subr.mxu0 0.0
      %1966 = vmatpush2.msra.mxu0 0.0
      %1967 = vmatprep.subr.mxu0 0.0
      %1968 = vmatpush2.msra.mxu0 0.0
      %1969 = vmatprep.subr.mxu0 0.0
      %1970 = vmatpush2.msra.mxu0 0.0
      %1971 = vmatprep.subr.mxu0 0.0
      %1972 = vmatpush2.msra.mxu0 0.0
      %1973 = vmatprep.subr.mxu0 0.0
      %1974 = vmatpush2.msra.mxu0 0.0
      %1975 = vmatprep.subr.mxu0 0.0
      %1976 = vmatpush2.msra.mxu0 0.0
      %1977 = vmatprep.subr.mxu0 0.0
      %1978 = vmatpush2.msra.mxu0 0.0
      %1979 = vmatprep.subr.mxu0 0.0
      %1980 = vmatpush2.msra.mxu0 0.0
      %1981 = vmatprep.subr.mxu0 0.0
      %1982 = vmatpush2.msra.mxu0 0.0
      %1983 = vmatprep.subr.mxu0 0.0
      %1984 = vmatpush2.msra.mxu0 0.0
      %1985 = vmatprep.subr.mxu0 0.0
      %1986 = vmatpush2.msra.mxu0 0.0
      %1987 = vmatprep.subr.mxu0 0.0
      %1988 = vmatpush2.msra.mxu0 0.0
      %1989 = vmatprep.mubr.f32.mxu0 0.0
      %1990 = vmatmul.mubr.f32.gmra.mxu0 %v1876
      %v1991 = vpop.f32.mrf.mxu0
      %v1992 = vadd.f32 0.0, %v1991
      %v1993 = vpop.f32.mrf.mxu0
      %1994 = vmatprep.mubr.f32.mxu0 0.0
      %1995 = vmatmul.mubr.f32.gmra.mxu0 %v1879
      %v1996 = vpop.f32.mrf.mxu0
      %v1997 = vadd.f32 0.0, %v1996
      %v1998 = vpop.f32.mrf.mxu0
      %1999 = vmatprep.mubr.f32.mxu0 0.0
      %2000 = vmatmul.mubr.f32.gmra.mxu0 %v1882
      %v2001 = vpop.f32.mrf.mxu0
      %v2002 = vadd.f32 0.0, %v2001
      %v2003 = vpop.f32.mrf.mxu0
      %2004 = vmatprep.mubr.f32.mxu0 0.0
      %2005 = vmatmul.mubr.f32.gmra.mxu0 %v1885
      %v2006 = vpop.f32.mrf.mxu0
      %v2007 = vadd.f32 0.0, %v2006
      %v2008 = vpop.f32.mrf.mxu0
      %2009 = vmatprep.mubr.f32.mxu0 0.0
      %2010 = vmatmul.mubr.f32.gmra.mxu0 %v1888
      %v2011 = vpop.f32.mrf.mxu0
      %v2012 = vadd.f32 0.0, %v2011
      %v2013 = vpop.f32.mrf.mxu0
      %2014 = vmatprep.mubr.f32.mxu0 0.0
      %2015 = vmatmul.mubr.f32.gmra.mxu0 %v1891
      %v2016 = vpop.f32.mrf.mxu0
      %v2017 = vadd.f32 0.0, %v2016
      %v2018 = vpop.f32.mrf.mxu0
      %2019 = vmatprep.mubr.f32.mxu0 0.0
      %2020 = vmatmul.mubr.f32.gmra.mxu0 %v1894
      %v2021 = vpop.f32.mrf.mxu0
      %v2022 = vadd.f32 0.0, %v2021
      %v2023 = vpop.f32.mrf.mxu0
      %2024 = vmatprep.mubr.f32.mxu0 0.0
      %2025 = vmatmul.mubr.f32.gmra.mxu0 %v1897
      %v2026 = vpop.f32.mrf.mxu0
      %v2027 = vadd.f32 0.0, %v2026
      %v2028 = vpop.f32.mrf.mxu0
      %2029 = vmatprep.mubr.f32.mxu0 0.0
      %2030 = vmatmul.mubr.f32.gmra.mxu0 %v1900
      %v2031 = vpop.f32.mrf.mxu0
      %v2032 = vadd.f32 0.0, %v2031
      %v2033 = vpop.f32.mrf.mxu0
      %2034 = vmatprep.mubr.f32.mxu0 0.0
      %2035 = vmatmul.mubr.f32.gmra.mxu0 %v1903
      %v2036 = vpop.f32.mrf.mxu0
      %v2037 = vadd.f32 0.0, %v2036
      %v2038 = vpop.f32.mrf.mxu0
      %2039 = vmatprep.mubr.f32.mxu0 0.0
      %2040 = vmatmul.mubr.f32.gmra.mxu0 %v1906
      %v2041 = vpop.f32.mrf.mxu0
      %v2042 = vadd.f32 0.0, %v2041
      %v2043 = vpop.f32.mrf.mxu0
      %2044 = vmatprep.mubr.f32.mxu0 0.0
      %2045 = vmatmul.mubr.f32.gmra.mxu0 %v1909
      %v2046 = vpop.f32.mrf.mxu0
      %v2047 = vadd.f32 0.0, %v2046
      %v2048 = vpop.f32.mrf.mxu0
      %2049 = vmatprep.mubr.f32.mxu0 0.0
      %2050 = vmatmul.mubr.f32.gmra.mxu0 %v1912
      %v2051 = vpop.f32.mrf.mxu0
      %v2052 = vadd.f32 0.0, %v2051
      %v2053 = vpop.f32.mrf.mxu0
      %2054 = vmatprep.mubr.f32.mxu0 0.0
      %2055 = vmatmul.mubr.f32.gmra.mxu0 %v1915
      %v2056 = vpop.f32.mrf.mxu0
      %v2057 = vadd.f32 0.0, %v2056
      %v2058 = vpop.f32.mrf.mxu0
      %2059 = vmatprep.mubr.f32.mxu0 0.0
      %2060 = vmatmul.mubr.f32.gmra.mxu0 %v1918
      %v2061 = vpop.f32.mrf.mxu0
      %v2062 = vadd.f32 0.0, %v2061
      %v2063 = vpop.f32.mrf.mxu0
      %2064 = vmatprep.mubr.f32.mxu0 0.0
      %2065 = vmatmul.mubr.f32.gmra.mxu0 %v1921
      %v2066 = vpop.f32.mrf.mxu0
      %v2067 = vadd.f32 0.0, %v2066
      %v2068 = vpop.f32.mrf.mxu0
      %2069 = vdwg.mxu0
      %v2070 = vadd.f32 %v1825, %v1992
      %v2071 = vadd.f32 %v1826, %v1997
      %v2072 = vadd.f32 %v1827, %v2002
      %v2073 = vadd.f32 %v1828, %v2007
      %v2074 = vadd.f32 %v1829, %v2012
      %v2075 = vadd.f32 %v1830, %v2017
      %v2076 = vadd.f32 %v1831, %v2022
      %v2077 = vadd.f32 %v1832, %v2027
      %v2078 = vadd.f32 %v1833, %v2032
      %v2079 = vadd.f32 %v1834, %v2037
      %v2080 = vadd.f32 %v1835, %v2042
      %v2081 = vadd.f32 %v1836, %v2047
      %v2082 = vadd.f32 %v1837, %v2052
      %v2083 = vadd.f32 %v1838, %v2057
      %v2084 = vadd.f32 %v1839, %v2062
      %v2085 = vadd.f32 %v1840, %v2067
      %s2086 = scalar_lea.vmem %s1, 896
      %v2087 = vld [vmem:[%s2086] sm:$0xff]
      %v2088 = vld [vmem:[%s2086 + $0x8] sm:$0xff]
      %v2089 = vld [vmem:[%s2086 + $0x10] sm:$0xff]
      %v2090 = vld [vmem:[%s2086 + $0x18] sm:$0xff]
      %v2091 = vld [vmem:[%s2086 + $0x20] sm:$0xff]
      %v2092 = vld [vmem:[%s2086 + $0x28] sm:$0xff]
      %v2093 = vld [vmem:[%s2086 + $0x30] sm:$0xff]
      %v2094 = vld [vmem:[%s2086 + $0x38] sm:$0xff]
      %v2095 = vld [vmem:[%s2086 + $0x40] sm:$0xff]
      %v2096 = vld [vmem:[%s2086 + $0x48] sm:$0xff]
      %v2097 = vld [vmem:[%s2086 + $0x50] sm:$0xff]
      %v2098 = vld [vmem:[%s2086 + $0x58] sm:$0xff]
      %v2099 = vld [vmem:[%s2086 + $0x60] sm:$0xff]
      %v2100 = vld [vmem:[%s2086 + $0x68] sm:$0xff]
      %v2101 = vld [vmem:[%s2086 + $0x70] sm:$0xff]
      %v2102 = vld [vmem:[%s2086 + $0x78] sm:$0xff]
      %2103 = vrot.lane.b32.xlu0 %v1356, 125
      %v2104 = vpop.permute.xlu0 %2103
      %2105 = vrot.lane.b32.xlu0 %v1357, 125
      %v2106 = vpop.permute.xlu0 %2105
      %2107 = vrot.lane.b32.xlu0 %v1358, 125
      %v2108 = vpop.permute.xlu0 %2107
      %2109 = vrot.lane.b32.xlu0 %v1359, 125
      %v2110 = vpop.permute.xlu0 %2109
      %2111 = vrot.lane.b32.xlu0 %v1360, 125
      %v2112 = vpop.permute.xlu0 %2111
      %2113 = vrot.lane.b32.xlu0 %v1361, 125
      %v2114 = vpop.permute.xlu0 %2113
      %v2121 = vsel %vm228, %v2087, 0
      %v2124 = vsel %vm228, %v2088, 0
      %v2127 = vsel %vm228, %v2089, 0
      %v2130 = vsel %vm228, %v2090, 0
      %v2133 = vsel %vm228, %v2091, 0
      %v2136 = vsel %vm228, %v2092, 0
      %v2139 = vsel %vm228, %v2093, 0
      %v2142 = vsel %vm228, %v2094, 0
      %v2145 = vsel %vm228, %v2095, 0
      %v2148 = vsel %vm228, %v2096, 0
      %v2151 = vsel %vm228, %v2097, 0
      %v2154 = vsel %vm228, %v2098, 0
      %v2157 = vsel %vm228, %v2099, 0
      %v2160 = vsel %vm228, %v2100, 0
      %v2163 = vsel %vm228, %v2101, 0
      %v2166 = vsel %vm228, %v2102, 0
      %v2168 = vsel %vm277, %v2114, 0
      %2170 = vmatprep.subr.mxu0 0.0
      %2171 = vmatpush1.msra.mxu0 0.0
      %2172 = vmatprep.subr.mxu0 0.0
      %2173 = vmatpush1.msra.mxu0 0.0
      %2174 = vmatprep.subr.mxu0 0.0
      %2175 = vmatpush1.msra.mxu0 0.0
      %2176 = vmatprep.subr.mxu0 0.0
      %2177 = vmatpush1.msra.mxu0 0.0
      %2178 = vmatprep.subr.mxu0 0.0
      %2179 = vmatpush1.msra.mxu0 0.0
      %2180 = vmatprep.subr.mxu0 0.0
      %2181 = vmatpush1.msra.mxu0 0.0
      %2182 = vmatprep.subr.mxu0 0.0
      %2183 = vmatpush1.msra.mxu0 0.0
      %2184 = vmatprep.subr.mxu0 0.0
      %2185 = vmatpush1.msra.mxu0 0.0
      %2186 = vmatprep.subr.mxu0 0.0
      %2187 = vmatpush1.msra.mxu0 0.0
      %2188 = vmatprep.subr.mxu0 0.0
      %2189 = vmatpush1.msra.mxu0 0.0
      %2190 = vmatprep.subr.mxu0 0.0
      %2191 = vmatpush1.msra.mxu0 %v2168
      %2192 = vmatprep.subr.mxu0 0.0
      %2193 = vmatpush1.msra.mxu0 %v2112
      %2194 = vmatprep.subr.mxu0 0.0
      %2195 = vmatpush1.msra.mxu0 %v2110
      %2196 = vmatprep.subr.mxu0 0.0
      %2197 = vmatpush1.msra.mxu0 %v2108
      %2198 = vmatprep.subr.mxu0 0.0
      %2199 = vmatpush1.msra.mxu0 %v2106
      %2200 = vmatprep.subr.mxu0 0.0
      %2201 = vmatpush1.msra.mxu0 %v2104
      %2202 = vmatprep.subr.mxu0 0.0
      %2203 = vmatpush2.msra.mxu0 0.0
      %2204 = vmatprep.subr.mxu0 0.0
      %2205 = vmatpush2.msra.mxu0 0.0
      %2206 = vmatprep.subr.mxu0 0.0
      %2207 = vmatpush2.msra.mxu0 0.0
      %2208 = vmatprep.subr.mxu0 0.0
      %2209 = vmatpush2.msra.mxu0 0.0
      %2210 = vmatprep.subr.mxu0 0.0
      %2211 = vmatpush2.msra.mxu0 0.0
      %2212 = vmatprep.subr.mxu0 0.0
      %2213 = vmatpush2.msra.mxu0 0.0
      %2214 = vmatprep.subr.mxu0 0.0
      %2215 = vmatpush2.msra.mxu0 0.0
      %2216 = vmatprep.subr.mxu0 0.0
      %2217 = vmatpush2.msra.mxu0 0.0
      %2218 = vmatprep.subr.mxu0 0.0
      %2219 = vmatpush2.msra.mxu0 0.0
      %2220 = vmatprep.subr.mxu0 0.0
      %2221 = vmatpush2.msra.mxu0 0.0
      %2222 = vmatprep.subr.mxu0 0.0
      %2223 = vmatpush2.msra.mxu0 0.0
      %2224 = vmatprep.subr.mxu0 0.0
      %2225 = vmatpush2.msra.mxu0 0.0
      %2226 = vmatprep.subr.mxu0 0.0
      %2227 = vmatpush2.msra.mxu0 0.0
      %2228 = vmatprep.subr.mxu0 0.0
      %2229 = vmatpush2.msra.mxu0 0.0
      %2230 = vmatprep.subr.mxu0 0.0
      %2231 = vmatpush2.msra.mxu0 0.0
      %2232 = vmatprep.subr.mxu0 0.0
      %2233 = vmatpush2.msra.mxu0 0.0
      %2234 = vmatprep.mubr.f32.mxu0 0.0
      %2235 = vmatmul.mubr.f32.gmra.mxu0 %v2121
      %v2236 = vpop.f32.mrf.mxu0
      %v2237 = vadd.f32 0.0, %v2236
      %v2238 = vpop.f32.mrf.mxu0
      %2239 = vmatprep.mubr.f32.mxu0 0.0
      %2240 = vmatmul.mubr.f32.gmra.mxu0 %v2124
      %v2241 = vpop.f32.mrf.mxu0
      %v2242 = vadd.f32 0.0, %v2241
      %v2243 = vpop.f32.mrf.mxu0
      %2244 = vmatprep.mubr.f32.mxu0 0.0
      %2245 = vmatmul.mubr.f32.gmra.mxu0 %v2127
      %v2246 = vpop.f32.mrf.mxu0
      %v2247 = vadd.f32 0.0, %v2246
      %v2248 = vpop.f32.mrf.mxu0
      %2249 = vmatprep.mubr.f32.mxu0 0.0
      %2250 = vmatmul.mubr.f32.gmra.mxu0 %v2130
      %v2251 = vpop.f32.mrf.mxu0
      %v2252 = vadd.f32 0.0, %v2251
      %v2253 = vpop.f32.mrf.mxu0
      %2254 = vmatprep.mubr.f32.mxu0 0.0
      %2255 = vmatmul.mubr.f32.gmra.mxu0 %v2133
      %v2256 = vpop.f32.mrf.mxu0
      %v2257 = vadd.f32 0.0, %v2256
      %v2258 = vpop.f32.mrf.mxu0
      %2259 = vmatprep.mubr.f32.mxu0 0.0
      %2260 = vmatmul.mubr.f32.gmra.mxu0 %v2136
      %v2261 = vpop.f32.mrf.mxu0
      %v2262 = vadd.f32 0.0, %v2261
      %v2263 = vpop.f32.mrf.mxu0
      %2264 = vmatprep.mubr.f32.mxu0 0.0
      %2265 = vmatmul.mubr.f32.gmra.mxu0 %v2139
      %v2266 = vpop.f32.mrf.mxu0
      %v2267 = vadd.f32 0.0, %v2266
      %v2268 = vpop.f32.mrf.mxu0
      %2269 = vmatprep.mubr.f32.mxu0 0.0
      %2270 = vmatmul.mubr.f32.gmra.mxu0 %v2142
      %v2271 = vpop.f32.mrf.mxu0
      %v2272 = vadd.f32 0.0, %v2271
      %v2273 = vpop.f32.mrf.mxu0
      %2274 = vmatprep.mubr.f32.mxu0 0.0
      %2275 = vmatmul.mubr.f32.gmra.mxu0 %v2145
      %v2276 = vpop.f32.mrf.mxu0
      %v2277 = vadd.f32 0.0, %v2276
      %v2278 = vpop.f32.mrf.mxu0
      %2279 = vmatprep.mubr.f32.mxu0 0.0
      %2280 = vmatmul.mubr.f32.gmra.mxu0 %v2148
      %v2281 = vpop.f32.mrf.mxu0
      %v2282 = vadd.f32 0.0, %v2281
      %v2283 = vpop.f32.mrf.mxu0
      %2284 = vmatprep.mubr.f32.mxu0 0.0
      %2285 = vmatmul.mubr.f32.gmra.mxu0 %v2151
      %v2286 = vpop.f32.mrf.mxu0
      %v2287 = vadd.f32 0.0, %v2286
      %v2288 = vpop.f32.mrf.mxu0
      %2289 = vmatprep.mubr.f32.mxu0 0.0
      %2290 = vmatmul.mubr.f32.gmra.mxu0 %v2154
      %v2291 = vpop.f32.mrf.mxu0
      %v2292 = vadd.f32 0.0, %v2291
      %v2293 = vpop.f32.mrf.mxu0
      %2294 = vmatprep.mubr.f32.mxu0 0.0
      %2295 = vmatmul.mubr.f32.gmra.mxu0 %v2157
      %v2296 = vpop.f32.mrf.mxu0
      %v2297 = vadd.f32 0.0, %v2296
      %v2298 = vpop.f32.mrf.mxu0
      %2299 = vmatprep.mubr.f32.mxu0 0.0
      %2300 = vmatmul.mubr.f32.gmra.mxu0 %v2160
      %v2301 = vpop.f32.mrf.mxu0
      %v2302 = vadd.f32 0.0, %v2301
      %v2303 = vpop.f32.mrf.mxu0
      %2304 = vmatprep.mubr.f32.mxu0 0.0
      %2305 = vmatmul.mubr.f32.gmra.mxu0 %v2163
      %v2306 = vpop.f32.mrf.mxu0
      %v2307 = vadd.f32 0.0, %v2306
      %v2308 = vpop.f32.mrf.mxu0
      %2309 = vmatprep.mubr.f32.mxu0 0.0
      %2310 = vmatmul.mubr.f32.gmra.mxu0 %v2166
      %v2311 = vpop.f32.mrf.mxu0
      %v2312 = vadd.f32 0.0, %v2311
      %v2313 = vpop.f32.mrf.mxu0
      %2314 = vdwg.mxu0
      %v2315 = vadd.f32 %v2070, %v2237
      %v2316 = vadd.f32 %v2071, %v2242
      %v2317 = vadd.f32 %v2072, %v2247
      %v2318 = vadd.f32 %v2073, %v2252
      %v2319 = vadd.f32 %v2074, %v2257
      %v2320 = vadd.f32 %v2075, %v2262
      %v2321 = vadd.f32 %v2076, %v2267
      %v2322 = vadd.f32 %v2077, %v2272
      %v2323 = vadd.f32 %v2078, %v2277
      %v2324 = vadd.f32 %v2079, %v2282
      %v2325 = vadd.f32 %v2080, %v2287
      %v2326 = vadd.f32 %v2081, %v2292
      %v2327 = vadd.f32 %v2082, %v2297
      %v2328 = vadd.f32 %v2083, %v2302
      %v2329 = vadd.f32 %v2084, %v2307
      %v2330 = vadd.f32 %v2085, %v2312
      %s2331 = scalar_lea.vmem %s1, 1152
      %v2332 = vld [vmem:[%s2331] sm:$0xff]
      %v2333 = vld [vmem:[%s2331 + $0x8] sm:$0xff]
      %v2334 = vld [vmem:[%s2331 + $0x10] sm:$0xff]
      %v2335 = vld [vmem:[%s2331 + $0x18] sm:$0xff]
      %v2336 = vld [vmem:[%s2331 + $0x20] sm:$0xff]
      %v2337 = vld [vmem:[%s2331 + $0x28] sm:$0xff]
      %v2338 = vld [vmem:[%s2331 + $0x30] sm:$0xff]
      %v2339 = vld [vmem:[%s2331 + $0x38] sm:$0xff]
      %v2340 = vld [vmem:[%s2331 + $0x40] sm:$0xff]
      %v2341 = vld [vmem:[%s2331 + $0x48] sm:$0xff]
      %v2342 = vld [vmem:[%s2331 + $0x50] sm:$0xff]
      %v2343 = vld [vmem:[%s2331 + $0x58] sm:$0xff]
      %v2344 = vld [vmem:[%s2331 + $0x60] sm:$0xff]
      %v2345 = vld [vmem:[%s2331 + $0x68] sm:$0xff]
      %v2346 = vld [vmem:[%s2331 + $0x70] sm:$0xff]
      %v2347 = vld [vmem:[%s2331 + $0x78] sm:$0xff]
      %2348 = vrot.lane.b32.xlu0 %v1356, 124
      %v2349 = vpop.permute.xlu0 %2348
      %2350 = vrot.lane.b32.xlu0 %v1357, 124
      %v2351 = vpop.permute.xlu0 %2350
      %2352 = vrot.lane.b32.xlu0 %v1358, 124
      %v2353 = vpop.permute.xlu0 %2352
      %2354 = vrot.lane.b32.xlu0 %v1359, 124
      %v2355 = vpop.permute.xlu0 %2354
      %2356 = vrot.lane.b32.xlu0 %v1360, 124
      %v2357 = vpop.permute.xlu0 %2356
      %2358 = vrot.lane.b32.xlu0 %v1361, 124
      %v2359 = vpop.permute.xlu0 %2358
      %v2366 = vsel %vm228, %v2332, 0
      %v2369 = vsel %vm228, %v2333, 0
      %v2372 = vsel %vm228, %v2334, 0
      %v2375 = vsel %vm228, %v2335, 0
      %v2378 = vsel %vm228, %v2336, 0
      %v2381 = vsel %vm228, %v2337, 0
      %v2384 = vsel %vm228, %v2338, 0
      %v2387 = vsel %vm228, %v2339, 0
      %v2390 = vsel %vm228, %v2340, 0
      %v2393 = vsel %vm228, %v2341, 0
      %v2396 = vsel %vm228, %v2342, 0
      %v2399 = vsel %vm228, %v2343, 0
      %v2402 = vsel %vm228, %v2344, 0
      %v2405 = vsel %vm228, %v2345, 0
      %v2408 = vsel %vm228, %v2346, 0
      %v2411 = vsel %vm228, %v2347, 0
      %v2413 = vsel %vm277, %v2359, 0
      %2415 = vmatprep.subr.mxu0 0.0
      %2416 = vmatpush1.msra.mxu0 0.0
      %2417 = vmatprep.subr.mxu0 0.0
      %2418 = vmatpush1.msra.mxu0 0.0
      %2419 = vmatprep.subr.mxu0 0.0
      %2420 = vmatpush1.msra.mxu0 0.0
      %2421 = vmatprep.subr.mxu0 0.0
      %2422 = vmatpush1.msra.mxu0 0.0
      %2423 = vmatprep.subr.mxu0 0.0
      %2424 = vmatpush1.msra.mxu0 0.0
      %2425 = vmatprep.subr.mxu0 0.0
      %2426 = vmatpush1.msra.mxu0 0.0
      %2427 = vmatprep.subr.mxu0 0.0
      %2428 = vmatpush1.msra.mxu0 0.0
      %2429 = vmatprep.subr.mxu0 0.0
      %2430 = vmatpush1.msra.mxu0 0.0
      %2431 = vmatprep.subr.mxu0 0.0
      %2432 = vmatpush1.msra.mxu0 0.0
      %2433 = vmatprep.subr.mxu0 0.0
      %2434 = vmatpush1.msra.mxu0 0.0
      %2435 = vmatprep.subr.mxu0 0.0
      %2436 = vmatpush1.msra.mxu0 %v2413
      %2437 = vmatprep.subr.mxu0 0.0
      %2438 = vmatpush1.msra.mxu0 %v2357
      %2439 = vmatprep.subr.mxu0 0.0
      %2440 = vmatpush1.msra.mxu0 %v2355
      %2441 = vmatprep.subr.mxu0 0.0
      %2442 = vmatpush1.msra.mxu0 %v2353
      %2443 = vmatprep.subr.mxu0 0.0
      %2444 = vmatpush1.msra.mxu0 %v2351
      %2445 = vmatprep.subr.mxu0 0.0
      %2446 = vmatpush1.msra.mxu0 %v2349
      %2447 = vmatprep.subr.mxu0 0.0
      %2448 = vmatpush2.msra.mxu0 0.0
      %2449 = vmatprep.subr.mxu0 0.0
      %2450 = vmatpush2.msra.mxu0 0.0
      %2451 = vmatprep.subr.mxu0 0.0
      %2452 = vmatpush2.msra.mxu0 0.0
      %2453 = vmatprep.subr.mxu0 0.0
      %2454 = vmatpush2.msra.mxu0 0.0
      %2455 = vmatprep.subr.mxu0 0.0
      %2456 = vmatpush2.msra.mxu0 0.0
      %2457 = vmatprep.subr.mxu0 0.0
      %2458 = vmatpush2.msra.mxu0 0.0
      %2459 = vmatprep.subr.mxu0 0.0
      %2460 = vmatpush2.msra.mxu0 0.0
      %2461 = vmatprep.subr.mxu0 0.0
      %2462 = vmatpush2.msra.mxu0 0.0
      %2463 = vmatprep.subr.mxu0 0.0
      %2464 = vmatpush2.msra.mxu0 0.0
      %2465 = vmatprep.subr.mxu0 0.0
      %2466 = vmatpush2.msra.mxu0 0.0
      %2467 = vmatprep.subr.mxu0 0.0
      %2468 = vmatpush2.msra.mxu0 0.0
      %2469 = vmatprep.subr.mxu0 0.0
      %2470 = vmatpush2.msra.mxu0 0.0
      %2471 = vmatprep.subr.mxu0 0.0
      %2472 = vmatpush2.msra.mxu0 0.0
      %2473 = vmatprep.subr.mxu0 0.0
      %2474 = vmatpush2.msra.mxu0 0.0
      %2475 = vmatprep.subr.mxu0 0.0
      %2476 = vmatpush2.msra.mxu0 0.0
      %2477 = vmatprep.subr.mxu0 0.0
      %2478 = vmatpush2.msra.mxu0 0.0
      %2479 = vmatprep.mubr.f32.mxu0 0.0
      %2480 = vmatmul.mubr.f32.gmra.mxu0 %v2366
      %v2481 = vpop.f32.mrf.mxu0
      %v2482 = vadd.f32 0.0, %v2481
      %v2483 = vpop.f32.mrf.mxu0
      %2484 = vmatprep.mubr.f32.mxu0 0.0
      %2485 = vmatmul.mubr.f32.gmra.mxu0 %v2369
      %v2486 = vpop.f32.mrf.mxu0
      %v2487 = vadd.f32 0.0, %v2486
      %v2488 = vpop.f32.mrf.mxu0
      %2489 = vmatprep.mubr.f32.mxu0 0.0
      %2490 = vmatmul.mubr.f32.gmra.mxu0 %v2372
      %v2491 = vpop.f32.mrf.mxu0
      %v2492 = vadd.f32 0.0, %v2491
      %v2493 = vpop.f32.mrf.mxu0
      %2494 = vmatprep.mubr.f32.mxu0 0.0
      %2495 = vmatmul.mubr.f32.gmra.mxu0 %v2375
      %v2496 = vpop.f32.mrf.mxu0
      %v2497 = vadd.f32 0.0, %v2496
      %v2498 = vpop.f32.mrf.mxu0
      %2499 = vmatprep.mubr.f32.mxu0 0.0
      %2500 = vmatmul.mubr.f32.gmra.mxu0 %v2378
      %v2501 = vpop.f32.mrf.mxu0
      %v2502 = vadd.f32 0.0, %v2501
      %v2503 = vpop.f32.mrf.mxu0
      %2504 = vmatprep.mubr.f32.mxu0 0.0
      %2505 = vmatmul.mubr.f32.gmra.mxu0 %v2381
      %v2506 = vpop.f32.mrf.mxu0
      %v2507 = vadd.f32 0.0, %v2506
      %v2508 = vpop.f32.mrf.mxu0
      %2509 = vmatprep.mubr.f32.mxu0 0.0
      %2510 = vmatmul.mubr.f32.gmra.mxu0 %v2384
      %v2511 = vpop.f32.mrf.mxu0
      %v2512 = vadd.f32 0.0, %v2511
      %v2513 = vpop.f32.mrf.mxu0
      %2514 = vmatprep.mubr.f32.mxu0 0.0
      %2515 = vmatmul.mubr.f32.gmra.mxu0 %v2387
      %v2516 = vpop.f32.mrf.mxu0
      %v2517 = vadd.f32 0.0, %v2516
      %v2518 = vpop.f32.mrf.mxu0
      %2519 = vmatprep.mubr.f32.mxu0 0.0
      %2520 = vmatmul.mubr.f32.gmra.mxu0 %v2390
      %v2521 = vpop.f32.mrf.mxu0
      %v2522 = vadd.f32 0.0, %v2521
      %v2523 = vpop.f32.mrf.mxu0
      %2524 = vmatprep.mubr.f32.mxu0 0.0
      %2525 = vmatmul.mubr.f32.gmra.mxu0 %v2393
      %v2526 = vpop.f32.mrf.mxu0
      %v2527 = vadd.f32 0.0, %v2526
      %v2528 = vpop.f32.mrf.mxu0
      %2529 = vmatprep.mubr.f32.mxu0 0.0
      %2530 = vmatmul.mubr.f32.gmra.mxu0 %v2396
      %v2531 = vpop.f32.mrf.mxu0
      %v2532 = vadd.f32 0.0, %v2531
      %v2533 = vpop.f32.mrf.mxu0
      %2534 = vmatprep.mubr.f32.mxu0 0.0
      %2535 = vmatmul.mubr.f32.gmra.mxu0 %v2399
      %v2536 = vpop.f32.mrf.mxu0
      %v2537 = vadd.f32 0.0, %v2536
      %v2538 = vpop.f32.mrf.mxu0
      %2539 = vmatprep.mubr.f32.mxu0 0.0
      %2540 = vmatmul.mubr.f32.gmra.mxu0 %v2402
      %v2541 = vpop.f32.mrf.mxu0
      %v2542 = vadd.f32 0.0, %v2541
      %v2543 = vpop.f32.mrf.mxu0
      %2544 = vmatprep.mubr.f32.mxu0 0.0
      %2545 = vmatmul.mubr.f32.gmra.mxu0 %v2405
      %v2546 = vpop.f32.mrf.mxu0
      %v2547 = vadd.f32 0.0, %v2546
      %v2548 = vpop.f32.mrf.mxu0
      %2549 = vmatprep.mubr.f32.mxu0 0.0
      %2550 = vmatmul.mubr.f32.gmra.mxu0 %v2408
      %v2551 = vpop.f32.mrf.mxu0
      %v2552 = vadd.f32 0.0, %v2551
      %v2553 = vpop.f32.mrf.mxu0
      %2554 = vmatprep.mubr.f32.mxu0 0.0
      %2555 = vmatmul.mubr.f32.gmra.mxu0 %v2411
      %v2556 = vpop.f32.mrf.mxu0
      %v2557 = vadd.f32 0.0, %v2556
      %v2558 = vpop.f32.mrf.mxu0
      %2559 = vdwg.mxu0
      %v2560 = vadd.f32 %v2315, %v2482
      %v2561 = vadd.f32 %v2316, %v2487
      %v2562 = vadd.f32 %v2317, %v2492
      %v2563 = vadd.f32 %v2318, %v2497
      %v2564 = vadd.f32 %v2319, %v2502
      %v2565 = vadd.f32 %v2320, %v2507
      %v2566 = vadd.f32 %v2321, %v2512
      %v2567 = vadd.f32 %v2322, %v2517
      %v2568 = vadd.f32 %v2323, %v2522
      %v2569 = vadd.f32 %v2324, %v2527
      %v2570 = vadd.f32 %v2325, %v2532
      %v2571 = vadd.f32 %v2326, %v2537
      %v2572 = vadd.f32 %v2327, %v2542
      %v2573 = vadd.f32 %v2328, %v2547
      %v2574 = vadd.f32 %v2329, %v2552
      %v2575 = vadd.f32 %v2330, %v2557
      %v2576 = vlaneseq
      %v2577 = vand.u32 %v2576, 127
      %v2578 = vstv %s165
      %vm2579 = vcmp.lt.s32.totalorder %v2577, %v2578
      %v2580 = vsel %vm2579, 1, 0
      %v2581 = vcvt.s32.f32 %v2580
      %v2582 = vmul.f32 %v2560, %v2581
      %v2583 = vmul.f32 %v2561, %v2581
      %v2584 = vmul.f32 %v2562, %v2581
      %v2585 = vmul.f32 %v2563, %v2581
      %v2586 = vmul.f32 %v2564, %v2581
      %v2587 = vmul.f32 %v2565, %v2581
      %v2588 = vmul.f32 %v2566, %v2581
      %v2589 = vmul.f32 %v2567, %v2581
      %v2590 = vmul.f32 %v2568, %v2581
      %v2591 = vmul.f32 %v2569, %v2581
      %v2592 = vmul.f32 %v2570, %v2581
      %v2593 = vmul.f32 %v2571, %v2581
      %v2594 = vmul.f32 %v2572, %v2581
      %v2595 = vmul.f32 %v2573, %v2581
      %v2596 = vmul.f32 %v2574, %v2581
      %v2597 = vmul.f32 %v2575, %v2581
      %vm2598 = vcmask 72704
      %v2599 = vsel %vm2598, %v2582, 0.0
      %2600 = vadd.xlane.f32.xlu0 %v2599
      %v2601 = vpop.xlane.xlu0 %2600
      %v2602 = vsel %vm2598, %v2583, 0.0
      %2603 = vadd.xlane.f32.xlu0 %v2602
      %v2604 = vpop.xlane.xlu0 %2603
      %v2605 = vsel %vm2598, %v2584, 0.0
      %2606 = vadd.xlane.f32.xlu0 %v2605
      %v2607 = vpop.xlane.xlu0 %2606
      %v2608 = vsel %vm2598, %v2585, 0.0
      %2609 = vadd.xlane.f32.xlu0 %v2608
      %v2610 = vpop.xlane.xlu0 %2609
      %v2611 = vsel %vm2598, %v2586, 0.0
      %2612 = vadd.xlane.f32.xlu0 %v2611
      %v2613 = vpop.xlane.xlu0 %2612
      %v2614 = vsel %vm2598, %v2587, 0.0
      %2615 = vadd.xlane.f32.xlu0 %v2614
      %v2616 = vpop.xlane.xlu0 %2615
      %v2617 = vsel %vm2598, %v2588, 0.0
      %2618 = vadd.xlane.f32.xlu0 %v2617
      %v2619 = vpop.xlane.xlu0 %2618
      %v2620 = vsel %vm2598, %v2589, 0.0
      %2621 = vadd.xlane.f32.xlu0 %v2620
      %v2622 = vpop.xlane.xlu0 %2621
      %v2623 = vsel %vm2598, %v2590, 0.0
      %2624 = vadd.xlane.f32.xlu0 %v2623
      %v2625 = vpop.xlane.xlu0 %2624
      %v2626 = vsel %vm2598, %v2591, 0.0
      %2627 = vadd.xlane.f32.xlu0 %v2626
      %v2628 = vpop.xlane.xlu0 %2627
      %v2629 = vsel %vm2598, %v2592, 0.0
      %2630 = vadd.xlane.f32.xlu0 %v2629
      %v2631 = vpop.xlane.xlu0 %2630
      %v2632 = vsel %vm2598, %v2593, 0.0
      %2633 = vadd.xlane.f32.xlu0 %v2632
      %v2634 = vpop.xlane.xlu0 %2633
      %v2635 = vsel %vm2598, %v2594, 0.0
      %2636 = vadd.xlane.f32.xlu0 %v2635
      %v2637 = vpop.xlane.xlu0 %2636
      %v2638 = vsel %vm2598, %v2595, 0.0
      %2639 = vadd.xlane.f32.xlu0 %v2638
      %v2640 = vpop.xlane.xlu0 %2639
      %v2641 = vsel %vm2598, %v2596, 0.0
      %2642 = vadd.xlane.f32.xlu0 %v2641
      %v2643 = vpop.xlane.xlu0 %2642
      %v2644 = vsel %vm2598, %v2597, 0.0
      %2645 = vadd.xlane.f32.xlu0 %v2644
      %v2646 = vpop.xlane.xlu0 %2645
      %v2647 = vadd.f32 %v2601, 0.0
      %v2648 = vadd.f32 %v2604, 0.0
      %v2649 = vadd.f32 %v2607, 0.0
      %v2650 = vadd.f32 %v2610, 0.0
      %v2651 = vadd.f32 %v2613, 0.0
      %v2652 = vadd.f32 %v2616, 0.0
      %v2653 = vadd.f32 %v2619, 0.0
      %v2654 = vadd.f32 %v2622, 0.0
      %v2655 = vadd.f32 %v2625, 0.0
      %v2656 = vadd.f32 %v2628, 0.0
      %v2657 = vadd.f32 %v2631, 0.0
      %v2658 = vadd.f32 %v2634, 0.0
      %v2659 = vadd.f32 %v2637, 0.0
      %v2660 = vadd.f32 %v2640, 0.0
      %v2661 = vadd.f32 %v2643, 0.0
      %v2662 = vadd.f32 %v2646, 0.0
      %v2663 = vmul.f32 %v2582, %v2560
      %v2664 = vmul.f32 %v2583, %v2561
      %v2665 = vmul.f32 %v2584, %v2562
      %v2666 = vmul.f32 %v2585, %v2563
      %v2667 = vmul.f32 %v2586, %v2564
      %v2668 = vmul.f32 %v2587, %v2565
      %v2669 = vmul.f32 %v2588, %v2566
      %v2670 = vmul.f32 %v2589, %v2567
      %v2671 = vmul.f32 %v2590, %v2568
      %v2672 = vmul.f32 %v2591, %v2569
      %v2673 = vmul.f32 %v2592, %v2570
      %v2674 = vmul.f32 %v2593, %v2571
      %v2675 = vmul.f32 %v2594, %v2572
      %v2676 = vmul.f32 %v2595, %v2573
      %v2677 = vmul.f32 %v2596, %v2574
      %v2678 = vmul.f32 %v2597, %v2575
      %v2679 = vsel %vm2598, %v2663, 0.0
      %2680 = vadd.xlane.f32.xlu0 %v2679
      %v2681 = vpop.xlane.xlu0 %2680
      %v2682 = vsel %vm2598, %v2664, 0.0
      %2683 = vadd.xlane.f32.xlu0 %v2682
      %v2684 = vpop.xlane.xlu0 %2683
      %v2685 = vsel %vm2598, %v2665, 0.0
      %2686 = vadd.xlane.f32.xlu0 %v2685
      %v2687 = vpop.xlane.xlu0 %2686
      %v2688 = vsel %vm2598, %v2666, 0.0
      %2689 = vadd.xlane.f32.xlu0 %v2688
      %v2690 = vpop.xlane.xlu0 %2689
      %v2691 = vsel %vm2598, %v2667, 0.0
      %2692 = vadd.xlane.f32.xlu0 %v2691
      %v2693 = vpop.xlane.xlu0 %2692
      %v2694 = vsel %vm2598, %v2668, 0.0
      %2695 = vadd.xlane.f32.xlu0 %v2694
      %v2696 = vpop.xlane.xlu0 %2695
      %v2697 = vsel %vm2598, %v2669, 0.0
      %2698 = vadd.xlane.f32.xlu0 %v2697
      %v2699 = vpop.xlane.xlu0 %2698
      %v2700 = vsel %vm2598, %v2670, 0.0
      %2701 = vadd.xlane.f32.xlu0 %v2700
      %v2702 = vpop.xlane.xlu0 %2701
      %v2703 = vsel %vm2598, %v2671, 0.0
      %2704 = vadd.xlane.f32.xlu0 %v2703
      %v2705 = vpop.xlane.xlu0 %2704
      %v2706 = vsel %vm2598, %v2672, 0.0
      %2707 = vadd.xlane.f32.xlu0 %v2706
      %v2708 = vpop.xlane.xlu0 %2707
      %v2709 = vsel %vm2598, %v2673, 0.0
      %2710 = vadd.xlane.f32.xlu0 %v2709
      %v2711 = vpop.xlane.xlu0 %2710
      %v2712 = vsel %vm2598, %v2674, 0.0
      %2713 = vadd.xlane.f32.xlu0 %v2712
      %v2714 = vpop.xlane.xlu0 %2713
      %v2715 = vsel %vm2598, %v2675, 0.0
      %2716 = vadd.xlane.f32.xlu0 %v2715
      %v2717 = vpop.xlane.xlu0 %2716
      %v2718 = vsel %vm2598, %v2676, 0.0
      %2719 = vadd.xlane.f32.xlu0 %v2718
      %v2720 = vpop.xlane.xlu0 %2719
      %v2721 = vsel %vm2598, %v2677, 0.0
      %2722 = vadd.xlane.f32.xlu0 %v2721
      %v2723 = vpop.xlane.xlu0 %2722
      %v2724 = vsel %vm2598, %v2678, 0.0
      %2725 = vadd.xlane.f32.xlu0 %v2724
      %v2726 = vpop.xlane.xlu0 %2725
      %v2727 = vadd.f32 %v2681, 0.0
      %v2728 = vadd.f32 %v2684, 0.0
      %v2729 = vadd.f32 %v2687, 0.0
      %v2730 = vadd.f32 %v2690, 0.0
      %v2731 = vadd.f32 %v2693, 0.0
      %v2732 = vadd.f32 %v2696, 0.0
      %v2733 = vadd.f32 %v2699, 0.0
      %v2734 = vadd.f32 %v2702, 0.0
      %v2735 = vadd.f32 %v2705, 0.0
      %v2736 = vadd.f32 %v2708, 0.0
      %v2737 = vadd.f32 %v2711, 0.0
      %v2738 = vadd.f32 %v2714, 0.0
      %v2739 = vadd.f32 %v2717, 0.0
      %v2740 = vadd.f32 %v2720, 0.0
      %v2741 = vadd.f32 %v2723, 0.0
      %v2742 = vadd.f32 %v2726, 0.0
      %v2759 = vlaneseq
      %v2760 = vshrl.u32 %v2759, 7
      %v2761 = vsub.s32 %v2577, %v2760
      %v2762 = vrot.slane %v2647, %v2761
      %v2763 = vadd.s32 %v2577, 4294967288
      %v2764 = vlaneseq
      %v2765 = vshrl.u32 %v2764, 7
      %v2766 = vsub.s32 %v2763, %v2765
      %v2767 = vrot.slane %v2648, %v2766
      %vm2768 = vcmask 130112
      %v2769 = vsel %vm2768, %v2767, %v2762
      %v2770 = vadd.s32 %v2577, 4294967280
      %v2771 = vlaneseq
      %v2772 = vshrl.u32 %v2771, 7
      %v2773 = vsub.s32 %v2770, %v2772
      %v2774 = vrot.slane %v2649, %v2773
      %vm2775 = vcmask 195712
      %v2776 = vsel %vm2775, %v2774, %v2769
      %v2777 = vadd.s32 %v2577, 4294967272
      %v2778 = vlaneseq
      %v2779 = vshrl.u32 %v2778, 7
      %v2780 = vsub.s32 %v2777, %v2779
      %v2781 = vrot.slane %v2650, %v2780
      %vm2782 = vcmask 261312
      %v2783 = vsel %vm2782, %v2781, %v2776
      %v2784 = vadd.s32 %v2577, 4294967264
      %v2785 = vlaneseq
      %v2786 = vshrl.u32 %v2785, 7
      %v2787 = vsub.s32 %v2784, %v2786
      %v2788 = vrot.slane %v2651, %v2787
      %vm2789 = vcmask 326912
      %v2790 = vsel %vm2789, %v2788, %v2783
      %v2791 = vadd.s32 %v2577, 4294967256
      %v2792 = vlaneseq
      %v2793 = vshrl.u32 %v2792, 7
      %v2794 = vsub.s32 %v2791, %v2793
      %v2795 = vrot.slane %v2652, %v2794
      %vm2796 = vcmask 392512
      %v2797 = vsel %vm2796, %v2795, %v2790
      %v2798 = vadd.s32 %v2577, 4294967248
      %v2799 = vlaneseq
      %v2800 = vshrl.u32 %v2799, 7
      %v2801 = vsub.s32 %v2798, %v2800
      %v2802 = vrot.slane %v2653, %v2801
      %vm2803 = vcmask 458112
      %v2804 = vsel %vm2803, %v2802, %v2797
      %v2805 = vadd.s32 %v2577, 4294967240
      %v2806 = vlaneseq
      %v2807 = vshrl.u32 %v2806, 7
      %v2808 = vsub.s32 %v2805, %v2807
      %v2809 = vrot.slane %v2654, %v2808
      %vm2810 = vcmask 523712
      %v2811 = vsel %vm2810, %v2809, %v2804
      %v2812 = vadd.s32 %v2577, 4294967232
      %v2813 = vlaneseq
      %v2814 = vshrl.u32 %v2813, 7
      %v2815 = vsub.s32 %v2812, %v2814
      %v2816 = vrot.slane %v2655, %v2815
      %vm2817 = vcmask 589312
      %v2818 = vsel %vm2817, %v2816, %v2811
      %v2819 = vadd.s32 %v2577, 4294967224
      %v2820 = vlaneseq
      %v2821 = vshrl.u32 %v2820, 7
      %v2822 = vsub.s32 %v2819, %v2821
      %v2823 = vrot.slane %v2656, %v2822
      %vm2824 = vcmask 654912
      %v2825 = vsel %vm2824, %v2823, %v2818
      %v2826 = vadd.s32 %v2577, 4294967216
      %v2827 = vlaneseq
      %v2828 = vshrl.u32 %v2827, 7
      %v2829 = vsub.s32 %v2826, %v2828
      %v2830 = vrot.slane %v2657, %v2829
      %vm2831 = vcmask 720512
      %v2832 = vsel %vm2831, %v2830, %v2825
      %v2833 = vadd.s32 %v2577, 4294967208
      %v2834 = vlaneseq
      %v2835 = vshrl.u32 %v2834, 7
      %v2836 = vsub.s32 %v2833, %v2835
      %v2837 = vrot.slane %v2658, %v2836
      %vm2838 = vcmask 786112
      %v2839 = vsel %vm2838, %v2837, %v2832
      %v2840 = vadd.s32 %v2577, 4294967200
      %v2841 = vlaneseq
      %v2842 = vshrl.u32 %v2841, 7
      %v2843 = vsub.s32 %v2840, %v2842
      %v2844 = vrot.slane %v2659, %v2843
      %vm2845 = vcmask 851712
      %v2846 = vsel %vm2845, %v2844, %v2839
      %v2847 = vadd.s32 %v2577, 4294967192
      %v2848 = vlaneseq
      %v2849 = vshrl.u32 %v2848, 7
      %v2850 = vsub.s32 %v2847, %v2849
      %v2851 = vrot.slane %v2660, %v2850
      %vm2852 = vcmask 917312
      %v2853 = vsel %vm2852, %v2851, %v2846
      %v2854 = vadd.s32 %v2577, 4294967184
      %v2855 = vlaneseq
      %v2856 = vshrl.u32 %v2855, 7
      %v2857 = vsub.s32 %v2854, %v2856
      %v2858 = vrot.slane %v2661, %v2857
      %vm2859 = vcmask 982912
      %v2860 = vsel %vm2859, %v2858, %v2853
      %v2861 = vadd.s32 %v2577, 4294967176
      %v2862 = vlaneseq
      %v2863 = vshrl.u32 %v2862, 7
      %v2864 = vsub.s32 %v2861, %v2863
      %v2865 = vrot.slane %v2662, %v2864
      %vm2866 = vcmask 1048512
      %v2867 = vsel %vm2866, %v2865, %v2860
      %2869 = vst [vmem:[%s161] sm:$0x1] %v2867
      %v2886 = vlaneseq
      %v2887 = vshrl.u32 %v2886, 7
      %v2888 = vsub.s32 %v2577, %v2887
      %v2889 = vrot.slane %v2727, %v2888
      %v2890 = vlaneseq
      %v2891 = vshrl.u32 %v2890, 7
      %v2892 = vsub.s32 %v2763, %v2891
      %v2893 = vrot.slane %v2728, %v2892
      %v2894 = vsel %vm2768, %v2893, %v2889
      %v2895 = vlaneseq
      %v2896 = vshrl.u32 %v2895, 7
      %v2897 = vsub.s32 %v2770, %v2896
      %v2898 = vrot.slane %v2729, %v2897
      %v2899 = vsel %vm2775, %v2898, %v2894
      %v2900 = vlaneseq
      %v2901 = vshrl.u32 %v2900, 7
      %v2902 = vsub.s32 %v2777, %v2901
      %v2903 = vrot.slane %v2730, %v2902
      %v2904 = vsel %vm2782, %v2903, %v2899
      %v2905 = vlaneseq
      %v2906 = vshrl.u32 %v2905, 7
      %v2907 = vsub.s32 %v2784, %v2906
      %v2908 = vrot.slane %v2731, %v2907
      %v2909 = vsel %vm2789, %v2908, %v2904
      %v2910 = vlaneseq
      %v2911 = vshrl.u32 %v2910, 7
      %v2912 = vsub.s32 %v2791, %v2911
      %v2913 = vrot.slane %v2732, %v2912
      %v2914 = vsel %vm2796, %v2913, %v2909
      %v2915 = vlaneseq
      %v2916 = vshrl.u32 %v2915, 7
      %v2917 = vsub.s32 %v2798, %v2916
      %v2918 = vrot.slane %v2733, %v2917
      %v2919 = vsel %vm2803, %v2918, %v2914
      %v2920 = vlaneseq
      %v2921 = vshrl.u32 %v2920, 7
      %v2922 = vsub.s32 %v2805, %v2921
      %v2923 = vrot.slane %v2734, %v2922
      %v2924 = vsel %vm2810, %v2923, %v2919
      %v2925 = vlaneseq
      %v2926 = vshrl.u32 %v2925, 7
      %v2927 = vsub.s32 %v2812, %v2926
      %v2928 = vrot.slane %v2735, %v2927
      %v2929 = vsel %vm2817, %v2928, %v2924
      %v2930 = vlaneseq
      %v2931 = vshrl.u32 %v2930, 7
      %v2932 = vsub.s32 %v2819, %v2931
      %v2933 = vrot.slane %v2736, %v2932
      %v2934 = vsel %vm2824, %v2933, %v2929
      %v2935 = vlaneseq
      %v2936 = vshrl.u32 %v2935, 7
      %v2937 = vsub.s32 %v2826, %v2936
      %v2938 = vrot.slane %v2737, %v2937
      %v2939 = vsel %vm2831, %v2938, %v2934
      %v2940 = vlaneseq
      %v2941 = vshrl.u32 %v2940, 7
      %v2942 = vsub.s32 %v2833, %v2941
      %v2943 = vrot.slane %v2738, %v2942
      %v2944 = vsel %vm2838, %v2943, %v2939
      %v2945 = vlaneseq
      %v2946 = vshrl.u32 %v2945, 7
      %v2947 = vsub.s32 %v2840, %v2946
      %v2948 = vrot.slane %v2739, %v2947
      %v2949 = vsel %vm2845, %v2948, %v2944
      %v2950 = vlaneseq
      %v2951 = vshrl.u32 %v2950, 7
      %v2952 = vsub.s32 %v2847, %v2951
      %v2953 = vrot.slane %v2740, %v2952
      %v2954 = vsel %vm2852, %v2953, %v2949
      %v2955 = vlaneseq
      %v2956 = vshrl.u32 %v2955, 7
      %v2957 = vsub.s32 %v2854, %v2956
      %v2958 = vrot.slane %v2741, %v2957
      %v2959 = vsel %vm2859, %v2958, %v2954
      %v2960 = vlaneseq
      %v2961 = vshrl.u32 %v2960, 7
      %v2962 = vsub.s32 %v2861, %v2961
      %v2963 = vrot.slane %v2742, %v2962
      %v2964 = vsel %vm2866, %v2963, %v2959
      %2966 = vst [vmem:[%s161 + $0x1] sm:$0x1] %v2964
      %p2967 = scmp.lt.s32.totalorder %s17, 1
      %s2968 = scalar_select %p2967, %s17, 1
      %p2969 = scmp.lt.s32.totalorder %s18, 0
      %s2970 = scalar_select %p2969, %s18, 0
      %s2971 = sadd.s32 %s2970, %s2968
      %s2972 = smul.addr %s2971, 2
      %s2973 = scalar_lea.vmem %s2, %s2972
      // Predicated region
      $region29: #{cnn_block_forward.2} parent=27 // pred_check
        %p2974 = pneg %p92
      $region30: #{cnn_block_forward.2} parent=27 // pred_check_branch
        %2976 = sbr.rel (%p2974) target = $region32
      $region31: #{cnn_block_forward.2} parent=27 // pred_region
        _
      $region32: #{cnn_block_forward.2} parent=27 // pred_fallthru
        _
    $region28: #{cnn_block_forward.2} parent=5 // pred_fallthru
      _
    %p2977 = scmp.le.s32.totalorder 2, %s8
    // Predicated region
    $region33: #{cnn_block_forward.2} parent=5 // pred_check
      %p2978 = pneg %p2977
    $region34: #{cnn_block_forward.2} parent=5 // pred_check_branch
      %2980 = sbr.rel (%p2978) target = $region36
    $region35: #{cnn_block_forward.2} parent=5 // pred_region
      %s2981 = ssub.s32 %s8, 2
      // Predicated region
      $region37: #{cnn_block_forward.2} parent=35 // pred_check
        %p2982 = pneg %p98
      $region38: #{cnn_block_forward.2} parent=35 // pred_check_branch
        %2984 = sbr.rel (%p2982) target = $region40
      $region39: #{cnn_block_forward.2} parent=35 // pred_region
        %p2985 = scmp.lt.s32.totalorder %s19, 1
        %s2986 = scalar_select %p2985, %s19, 1
        %p2987 = scmp.lt.s32.totalorder %s20, 0
        %s2988 = scalar_select %p2987, %s20, 0
        %s2989 = sadd.s32 %s2988, %s2986
        %s2990 = smul.addr %s2989, 2
        %s2991 = scalar_lea.vmem %s2, %s2990
      $region40: #{cnn_block_forward.2} parent=35 // pred_fallthru
        _
    $region36: #{cnn_block_forward.2} parent=5 // pred_fallthru
      _
  $region6: #{cnn_block_forward.2} parent=0 // loop_footer
    %s12 = sadd.s32 1, %s8
  $region7: #{cnn_block_forward.2} parent=0 // loop_footer_branch
    %7 = sbr.rel target = $region3
  $region8: #{cnn_block_forward.2} parent=0 // loop_exit
    _

// kernel: cnn_block_forward.3
$region0: #{cnn_block_forward.3}
  #allocation0 [shape = 'u32[]', space=smem, size = 0x4, offset = 0x4, fixed_abs, tag = 'smem constant byte address 0x4 - core index']
  #allocation1 [shape = 'u32[144,128]{1,0:T(1,128)}', space=vmem, size = 0x12000, scoped, tag = 'internal scratch']
  %s0 = inlined_call_operand.vmem [shape: f32[2,2,41,128], index: 0, kind: input, shape index: {}]
  %s1 = inlined_call_operand.vmem [shape: f32[10,128,41], index: 1, kind: input, shape index: {}]
  %s2 = inlined_call_operand.vmem [shape: f32[128,1], index: 2, kind: input, shape index: {}]
  %s3 = inlined_call_operand.vmem [shape: f32[128,1], index: 3, kind: input, shape index: {}]
  %s4 = inlined_call_operand.vmem [shape: f32[2,128,9], index: 4, kind: output, shape index: {}]
  %s5 = sld [smem:[#allocation0]]
  $region49: #{cnn_block_forward.3} parent=0
    _
  %s7 = ssub.s32 1, %s5
  %s8 = scalar_select 0, %s7, %s5
  loop: start=0, step=1, limit=4
  $region2: #{cnn_block_forward.3} parent=0 // loop_pre_header
    _
  $region3: #{cnn_block_forward.3} parent=0 // loop_header
    %s10 = sphi 0, %s14
    %p11 = scmp.ge.s32.totalorder %s10, 4
    %s17 = sphi 0, %s29
    %s18 = sphi 0, %s25
    %s19 = sphi 0, %s17
    %s20 = sphi 0, %s18
    %s21 = sphi 0, %s19
    %s22 = sphi 0, %s20
    %s32 = sphi 0, %s34
    %s35 = sphi 0, %s32
    %s36 = sphi 0, %s35
    %s52 = sphi 0, %s36
    %s56 = sphi 0, %s56
    %s58 = sphi 0, %s56
    %s59 = sphi 0, %s58
    %s73 = sphi 0, %s59
    %s77 = sphi 0, %s77
    %s79 = sphi 0, %s77
    %s80 = sphi 0, %s79
    %s94 = sphi 0, %s80
    %s98 = sphi 0, %s98
    %s100 = sphi 0, %s98
    %s101 = sphi 0, %s100
    %s115 = sphi 0, %s101
    %s123 = sphi 0, %s125
    %s126 = sphi 0, %s123
    %s127 = sphi 0, %s126
    %s143 = sphi 0, %s127
  $region4: #{cnn_block_forward.3} parent=0 // loop_header_branch
    %13 = sbr.rel (%p11) target = $region8
  $region5: #{cnn_block_forward.3} parent=0 // loop_body
    %s15 = ssub.s32 %s10, 1
    %s16 = ssub.s32 %s10, 2
    %s23 = sadd.s32 1, %s18
    %p24 = scmp.ge.s32.totalorder %s23, 1
    %s25 = scalar_select %p24, 0, %s23
    %s26 = sadd.s32 1, %s17
    %s27 = scalar_select %p24, %s26, %s17
    %p28 = scmp.ge.s32.totalorder %s27, 2
    %s29 = scalar_select %p28, 0, %s27
    %s30 = ssub.s32 %s17, %s29
    %p31 = scmp.eq.s32.totalorder %s30, 0
    %s33 = sadd.s32 %s32, 1
    %s34 = scalar_select %p31, %s32, %s33
    %p37 = pneg %p31
    %p38 = scmp.eq.s32.totalorder %s10, 1
    %p39 = por %p37, %p38
    %p40 = scmp.ne.s32.totalorder %s32, %s35
    %p41 = scmp.eq.s32.totalorder %s10, 0
    %p42 = por %p40, %p41
    %p43 = scmp.ne.s32.totalorder %s32, %s35
    %p44 = scmp.eq.s32.totalorder %s15, 1
    %p45 = por %p43, %p44
    %p46 = scmp.ne.s32.totalorder %s35, %s36
    %p47 = scmp.eq.s32.totalorder %s15, 0
    %p48 = por %p46, %p47
    %p49 = scmp.ne.s32.totalorder %s35, %s36
    %p50 = scmp.eq.s32.totalorder %s16, 1
    %p51 = por %p49, %p50
    %p53 = scmp.ne.s32.totalorder %s36, %s52
    %p54 = scmp.eq.s32.totalorder %s16, 0
    %p55 = por %p53, %p54
    %s57 = sadd.s32 %s56, 1
    %p60 = scmp.eq.s32.totalorder %s10, 1
    %p61 = scmp.ne.s32.totalorder %s56, %s58
    %p62 = scmp.eq.s32.totalorder %s10, 0
    %p63 = por %p61, %p62
    %p64 = scmp.ne.s32.totalorder %s56, %s58
    %p65 = scmp.eq.s32.totalorder %s15, 1
    %p66 = por %p64, %p65
    %p67 = scmp.ne.s32.totalorder %s58, %s59
    %p68 = scmp.eq.s32.totalorder %s15, 0
    %p69 = por %p67, %p68
    %p70 = scmp.ne.s32.totalorder %s58, %s59
    %p71 = scmp.eq.s32.totalorder %s16, 1
    %p72 = por %p70, %p71
    %p74 = scmp.ne.s32.totalorder %s59, %s73
    %p75 = scmp.eq.s32.totalorder %s16, 0
    %p76 = por %p74, %p75
    %s78 = sadd.s32 %s77, 1
    %p81 = scmp.eq.s32.totalorder %s10, 1
    %p82 = scmp.ne.s32.totalorder %s77, %s79
    %p83 = scmp.eq.s32.totalorder %s10, 0
    %p84 = por %p82, %p83
    %p85 = scmp.ne.s32.totalorder %s77, %s79
    %p86 = scmp.eq.s32.totalorder %s15, 1
    %p87 = por %p85, %p86
    %p88 = scmp.ne.s32.totalorder %s79, %s80
    %p89 = scmp.eq.s32.totalorder %s15, 0
    %p90 = por %p88, %p89
    %p91 = scmp.ne.s32.totalorder %s79, %s80
    %p92 = scmp.eq.s32.totalorder %s16, 1
    %p93 = por %p91, %p92
    %p95 = scmp.ne.s32.totalorder %s80, %s94
    %p96 = scmp.eq.s32.totalorder %s16, 0
    %p97 = por %p95, %p96
    %s99 = sadd.s32 %s98, 1
    %p102 = scmp.eq.s32.totalorder %s10, 1
    %p103 = scmp.ne.s32.totalorder %s98, %s100
    %p104 = scmp.eq.s32.totalorder %s10, 0
    %p105 = por %p103, %p104
    %p106 = scmp.ne.s32.totalorder %s98, %s100
    %p107 = scmp.eq.s32.totalorder %s15, 1
    %p108 = por %p106, %p107
    %p109 = scmp.ne.s32.totalorder %s100, %s101
    %p110 = scmp.eq.s32.totalorder %s15, 0
    %p111 = por %p109, %p110
    %p112 = scmp.ne.s32.totalorder %s100, %s101
    %p113 = scmp.eq.s32.totalorder %s16, 1
    %p114 = por %p112, %p113
    %p116 = scmp.ne.s32.totalorder %s101, %s115
    %p117 = scmp.eq.s32.totalorder %s16, 0
    %p118 = por %p116, %p117
    %s119 = ssub.s32 %s17, %s29
    %s120 = ssub.s32 %s18, %s25
    %s121 = sor.u32 %s119, %s120
    %p122 = scmp.eq.s32.totalorder %s121, 0
    %s124 = sadd.s32 %s123, 1
    %s125 = scalar_select %p122, %s123, %s124
    %p128 = pneg %p122
    %p129 = scmp.eq.s32.totalorder %s10, 1
    %p130 = por %p128, %p129
    %p131 = scmp.ne.s32.totalorder %s123, %s126
    %p132 = scmp.eq.s32.totalorder %s10, 0
    %p133 = por %p131, %p132
    %p134 = scmp.ne.s32.totalorder %s123, %s126
    %p135 = scmp.eq.s32.totalorder %s15, 1
    %p136 = por %p134, %p135
    %p137 = scmp.ne.s32.totalorder %s126, %s127
    %p138 = scmp.eq.s32.totalorder %s15, 0
    %p139 = por %p137, %p138
    %p140 = scmp.ne.s32.totalorder %s126, %s127
    %p141 = scmp.eq.s32.totalorder %s16, 1
    %p142 = por %p140, %p141
    %p144 = scmp.ne.s32.totalorder %s127, %s143
    %p145 = scmp.eq.s32.totalorder %s16, 0
    %p146 = por %p144, %p145
    %p147 = scmp.le.s32.totalorder 1, %s10
    %p148 = scmp.lt.s32.totalorder %s10, 3
    %p149 = pnand %p147, %p148
    %p150 = pneg %p149
    // Predicated region
    $region9: #{cnn_block_forward.3} parent=5 // pred_check
      _
    $region10: #{cnn_block_forward.3} parent=5 // pred_check_branch
      %152 = sbr.rel (%p149) target = $region12
    $region11: #{cnn_block_forward.3} parent=5 // pred_region
      %s153 = ssub.s32 %s10, 1
      // Predicated region
      $region13: #{cnn_block_forward.3} parent=11 // pred_check
        %p154 = pneg %p69
      $region14: #{cnn_block_forward.3} parent=11 // pred_check_branch
        %156 = sbr.rel (%p154) target = $region16
      $region15: #{cnn_block_forward.3} parent=11 // pred_region
        _
      $region16: #{cnn_block_forward.3} parent=11 // pred_fallthru
        _
      // Predicated region
      $region17: #{cnn_block_forward.3} parent=11 // pred_check
        %p157 = pneg %p90
      $region18: #{cnn_block_forward.3} parent=11 // pred_check_branch
        %159 = sbr.rel (%p157) target = $region20
      $region19: #{cnn_block_forward.3} parent=11 // pred_region
        _
      $region20: #{cnn_block_forward.3} parent=11 // pred_fallthru
        _
      // Predicated region
      $region21: #{cnn_block_forward.3} parent=11 // pred_check
        %p160 = pneg %p111
      $region22: #{cnn_block_forward.3} parent=11 // pred_check_branch
        %162 = sbr.rel (%p160) target = $region24
      $region23: #{cnn_block_forward.3} parent=11 // pred_region
        _
      $region24: #{cnn_block_forward.3} parent=11 // pred_fallthru
        _
    $region12: #{cnn_block_forward.3} parent=5 // pred_fallthru
      _
    %p163 = scmp.lt.s32.totalorder %s10, 2
    // Predicated region
    $region25: #{cnn_block_forward.3} parent=5 // pred_check
      %p164 = pneg %p163
    $region26: #{cnn_block_forward.3} parent=5 // pred_check_branch
      %166 = sbr.rel (%p164) target = $region28
    $region27: #{cnn_block_forward.3} parent=5 // pred_region
      // Predicated region
      $region29: #{cnn_block_forward.3} parent=27 // pred_check
        %p167 = pneg %p42
      $region30: #{cnn_block_forward.3} parent=27 // pred_check_branch
        %169 = sbr.rel (%p167) target = $region32
      $region31: #{cnn_block_forward.3} parent=27 // pred_region
        %p170 = scmp.lt.s32.totalorder %s17, 1
        %s171 = scalar_select %p170, %s17, 1
        %s172 = smul.addr %s171, 12
        %s173 = smul.addr %s172, 8
        %s174 = scalar_lea.vmem %s0, %s173
      $region32: #{cnn_block_forward.3} parent=27 // pred_fallthru
        _
    $region28: #{cnn_block_forward.3} parent=5 // pred_fallthru
      _
    %p175 = scmp.le.s32.totalorder 1, %s10
    %p176 = scmp.lt.s32.totalorder %s10, 3
    %p177 = pnand %p175, %p176
    %p178 = pneg %p177
    // Predicated region
    $region33: #{cnn_block_forward.3} parent=5 // pred_check
      _
    $region34: #{cnn_block_forward.3} parent=5 // pred_check_branch
      %180 = sbr.rel (%p177) target = $region36
    $region35: #{cnn_block_forward.3} parent=5 // pred_region
      %s181 = ssub.s32 %s10, 1
      %p182 = scmp.lt.s32.totalorder %s19, 1
      %s183 = scalar_select %p182, %s19, 1
      %s184 = smul.addr %s183, 12
      %s185 = smul.addr %s184, 8
      %s186 = scalar_lea.vmem %s0, %s185
      %p187 = pneg %p48
      %p188 = pneg %p45
      %p189 = pneg %p69
      %p190 = pneg %p66
      %p191 = pneg %p90
      %p192 = pneg %p87
      %p193 = pneg %p111
      %p194 = pneg %p108
      %p195 = pneg %p139
      %p196 = pneg %p136
      %p197 = scmp.lt.s32.totalorder %s19, 1
      %s198 = scalar_select %p197, %s19, 1
      %p199 = scmp.lt.s32.totalorder %s20, 0
      %s200 = scalar_select %p199, %s20, 0
      %s201 = smul.addr %s198, 16
      %s202 = sadd.s32 %s200, %s201
      %s203 = smul.addr %s202, 8
      %s204 = scalar_lea.vmem %s4, %s203
      %p205 = scmp.lt.s32.totalorder %s19, 1
      %s206 = scalar_select %p205, %s19, 1
      %s207 = smul.addr %s206, 12
      %s208 = smul.addr %s207, 8
      %s209 = scalar_lea.vmem %s0, %s208
      %p210 = scmp.lt.s32.totalorder %s19, 1
      %s211 = scalar_select %p210, %s19, 1
      %p212 = scmp.lt.s32.totalorder %s20, 0
      %s213 = scalar_select %p212, %s20, 0
      %s214 = smul.addr %s211, 16
      %s215 = sadd.s32 %s213, %s214
      %s216 = smul.addr %s215, 8
      %s217 = scalar_lea.vmem %s4, %s216
      %v218 = vld [vmem:[%s2] sm:$0xff]
      %v219 = vld [vmem:[%s2 + $0x8] sm:$0xff]
      %v220 = vld [vmem:[%s2 + $0x10] sm:$0xff]
      %v221 = vld [vmem:[%s2 + $0x18] sm:$0xff]
      %v222 = vld [vmem:[%s2 + $0x20] sm:$0xff]
      %v223 = vld [vmem:[%s2 + $0x28] sm:$0xff]
      %v224 = vld [vmem:[%s2 + $0x30] sm:$0xff]
      %v225 = vld [vmem:[%s2 + $0x38] sm:$0xff]
      %v226 = vld [vmem:[%s2 + $0x40] sm:$0xff]
      %v227 = vld [vmem:[%s2 + $0x48] sm:$0xff]
      %v228 = vld [vmem:[%s2 + $0x50] sm:$0xff]
      %v229 = vld [vmem:[%s2 + $0x58] sm:$0xff]
      %v230 = vld [vmem:[%s2 + $0x60] sm:$0xff]
      %v231 = vld [vmem:[%s2 + $0x68] sm:$0xff]
      %v232 = vld [vmem:[%s2 + $0x70] sm:$0xff]
      %v233 = vld [vmem:[%s2 + $0x78] sm:$0xff]
      %v234 = vld [vmem:[%s3] sm:$0xff]
      %v235 = vld [vmem:[%s3 + $0x8] sm:$0xff]
      %v236 = vld [vmem:[%s3 + $0x10] sm:$0xff]
      %v237 = vld [vmem:[%s3 + $0x18] sm:$0xff]
      %v238 = vld [vmem:[%s3 + $0x20] sm:$0xff]
      %v239 = vld [vmem:[%s3 + $0x28] sm:$0xff]
      %v240 = vld [vmem:[%s3 + $0x30] sm:$0xff]
      %v241 = vld [vmem:[%s3 + $0x38] sm:$0xff]
      %v242 = vld [vmem:[%s3 + $0x40] sm:$0xff]
      %v243 = vld [vmem:[%s3 + $0x48] sm:$0xff]
      %v244 = vld [vmem:[%s3 + $0x50] sm:$0xff]
      %v245 = vld [vmem:[%s3 + $0x58] sm:$0xff]
      %v246 = vld [vmem:[%s3 + $0x60] sm:$0xff]
      %v247 = vld [vmem:[%s3 + $0x68] sm:$0xff]
      %v248 = vld [vmem:[%s3 + $0x70] sm:$0xff]
      %v249 = vld [vmem:[%s3 + $0x78] sm:$0xff]
      %v250 = vld [vmem:[%s209] sm:$0xff]
      %v251 = vld [vmem:[%s209 + $0x8] sm:$0xff]
      %v252 = vld [vmem:[%s209 + $0x10] sm:$0xff]
      %v253 = vld [vmem:[%s209 + $0x18] sm:$0xff]
      %v254 = vld [vmem:[%s209 + $0x20] sm:$0xff]
      %v255 = vld [vmem:[%s209 + $0x28] sm:$0x1]
      %v256 = vld [vmem:[%s1] sm:$0xff]
      %v257 = vld [vmem:[%s1 + $0x8] sm:$0xff]
      %v258 = vld [vmem:[%s1 + $0x10] sm:$0xff]
      %v259 = vld [vmem:[%s1 + $0x18] sm:$0xff]
      %v260 = vld [vmem:[%s1 + $0x20] sm:$0xff]
      %v261 = vld [vmem:[%s1 + $0x28] sm:$0xff]
      %v262 = vld [vmem:[%s1 + $0x30] sm:$0xff]
      %v263 = vld [vmem:[%s1 + $0x38] sm:$0xff]
      %v264 = vld [vmem:[%s1 + $0x40] sm:$0xff]
      %v265 = vld [vmem:[%s1 + $0x48] sm:$0xff]
      %v266 = vld [vmem:[%s1 + $0x50] sm:$0xff]
      %v267 = vld [vmem:[%s1 + $0x58] sm:$0xff]
      %v268 = vld [vmem:[%s1 + $0x60] sm:$0xff]
      %v269 = vld [vmem:[%s1 + $0x68] sm:$0xff]
      %v270 = vld [vmem:[%s1 + $0x70] sm:$0xff]
      %v271 = vld [vmem:[%s1 + $0x78] sm:$0xff]
      %s272 = scalar_lea.vmem %s1, 256
      %v273 = vld [vmem:[%s272] sm:$0xff]
      %v274 = vld [vmem:[%s272 + $0x8] sm:$0xff]
      %v275 = vld [vmem:[%s272 + $0x10] sm:$0xff]
      %v276 = vld [vmem:[%s272 + $0x18] sm:$0xff]
      %v277 = vld [vmem:[%s272 + $0x20] sm:$0xff]
      %v278 = vld [vmem:[%s272 + $0x28] sm:$0xff]
      %v279 = vld [vmem:[%s272 + $0x30] sm:$0xff]
      %v280 = vld [vmem:[%s272 + $0x38] sm:$0xff]
      %v281 = vld [vmem:[%s272 + $0x40] sm:$0xff]
      %v282 = vld [vmem:[%s272 + $0x48] sm:$0xff]
      %v283 = vld [vmem:[%s272 + $0x50] sm:$0xff]
      %v284 = vld [vmem:[%s272 + $0x58] sm:$0xff]
      %v285 = vld [vmem:[%s272 + $0x60] sm:$0xff]
      %v286 = vld [vmem:[%s272 + $0x68] sm:$0xff]
      %v287 = vld [vmem:[%s272 + $0x70] sm:$0xff]
      %v288 = vld [vmem:[%s272 + $0x78] sm:$0xff]
      %295 = vrot.lane.b32.xlu0 %v250, 127
      %v296 = vpop.permute.xlu0 %295
      %297 = vrot.lane.b32.xlu0 %v251, 127
      %v298 = vpop.permute.xlu0 %297
      %299 = vrot.lane.b32.xlu0 %v252, 127
      %v300 = vpop.permute.xlu0 %299
      %301 = vrot.lane.b32.xlu0 %v253, 127
      %v302 = vpop.permute.xlu0 %301
      %303 = vrot.lane.b32.xlu0 %v254, 127
      %v304 = vpop.permute.xlu0 %303
      %305 = vrot.lane.b32.xlu0 %v255, 127
      %v306 = vpop.permute.xlu0 %305
      %vm312 = vcmask 334848
      %v314 = vsel %vm312, %v273, 0
      %v317 = vsel %vm312, %v274, 0
      %v320 = vsel %vm312, %v275, 0
      %v323 = vsel %vm312, %v276, 0
      %v326 = vsel %vm312, %v277, 0
      %v329 = vsel %vm312, %v278, 0
      %v332 = vsel %vm312, %v279, 0
      %v335 = vsel %vm312, %v280, 0
      %v338 = vsel %vm312, %v281, 0
      %v341 = vsel %vm312, %v282, 0
      %v344 = vsel %vm312, %v283, 0
      %v347 = vsel %vm312, %v284, 0
      %v350 = vsel %vm312, %v285, 0
      %v353 = vsel %vm312, %v286, 0
      %v356 = vsel %vm312, %v287, 0
      %v359 = vsel %vm312, %v288, 0
      %vm361 = vcmask 1040384
      %v362 = vsel %vm361, %v306, 0
      %364 = vmatprep.subr.mxu0 0.0
      %365 = vmatpush1.msra.mxu0 0.0
      %366 = vmatprep.subr.mxu0 0.0
      %367 = vmatpush1.msra.mxu0 0.0
      %368 = vmatprep.subr.mxu0 0.0
      %369 = vmatpush1.msra.mxu0 0.0
      %370 = vmatprep.subr.mxu0 0.0
      %371 = vmatpush1.msra.mxu0 0.0
      %372 = vmatprep.subr.mxu0 0.0
      %373 = vmatpush1.msra.mxu0 0.0
      %374 = vmatprep.subr.mxu0 0.0
      %375 = vmatpush1.msra.mxu0 0.0
      %376 = vmatprep.subr.mxu0 0.0
      %377 = vmatpush1.msra.mxu0 0.0
      %378 = vmatprep.subr.mxu0 0.0
      %379 = vmatpush1.msra.mxu0 0.0
      %380 = vmatprep.subr.mxu0 0.0
      %381 = vmatpush1.msra.mxu0 0.0
      %382 = vmatprep.subr.mxu0 0.0
      %383 = vmatpush1.msra.mxu0 0.0
      %384 = vmatprep.subr.mxu0 0.0
      %385 = vmatpush1.msra.mxu0 %v362
      %386 = vmatprep.subr.mxu0 0.0
      %387 = vmatpush1.msra.mxu0 %v304
      %388 = vmatprep.subr.mxu0 0.0
      %389 = vmatpush1.msra.mxu0 %v302
      %390 = vmatprep.subr.mxu0 0.0
      %391 = vmatpush1.msra.mxu0 %v300
      %392 = vmatprep.subr.mxu0 0.0
      %393 = vmatpush1.msra.mxu0 %v298
      %394 = vmatprep.subr.mxu0 0.0
      %395 = vmatpush1.msra.mxu0 %v296
      %396 = vmatprep.subr.mxu0 0.0
      %397 = vmatpush2.msra.mxu0 0.0
      %398 = vmatprep.subr.mxu0 0.0
      %399 = vmatpush2.msra.mxu0 0.0
      %400 = vmatprep.subr.mxu0 0.0
      %401 = vmatpush2.msra.mxu0 0.0
      %402 = vmatprep.subr.mxu0 0.0
      %403 = vmatpush2.msra.mxu0 0.0
      %404 = vmatprep.subr.mxu0 0.0
      %405 = vmatpush2.msra.mxu0 0.0
      %406 = vmatprep.subr.mxu0 0.0
      %407 = vmatpush2.msra.mxu0 0.0
      %408 = vmatprep.subr.mxu0 0.0
      %409 = vmatpush2.msra.mxu0 0.0
      %410 = vmatprep.subr.mxu0 0.0
      %411 = vmatpush2.msra.mxu0 0.0
      %412 = vmatprep.subr.mxu0 0.0
      %413 = vmatpush2.msra.mxu0 0.0
      %414 = vmatprep.subr.mxu0 0.0
      %415 = vmatpush2.msra.mxu0 0.0
      %416 = vmatprep.subr.mxu0 0.0
      %417 = vmatpush2.msra.mxu0 0.0
      %418 = vmatprep.subr.mxu0 0.0
      %419 = vmatpush2.msra.mxu0 0.0
      %420 = vmatprep.subr.mxu0 0.0
      %421 = vmatpush2.msra.mxu0 0.0
      %422 = vmatprep.subr.mxu0 0.0
      %423 = vmatpush2.msra.mxu0 0.0
      %424 = vmatprep.subr.mxu0 0.0
      %425 = vmatpush2.msra.mxu0 0.0
      %426 = vmatprep.subr.mxu0 0.0
      %427 = vmatpush2.msra.mxu0 0.0
      %428 = vmatprep.mubr.f32.mxu0 0.0
      %429 = vmatmul.mubr.f32.gmra.mxu0 %v314
      %v430 = vpop.f32.mrf.mxu0
      %v431 = vadd.f32 0.0, %v430
      %v432 = vpop.f32.mrf.mxu0
      %433 = vmatprep.mubr.f32.mxu0 0.0
      %434 = vmatmul.mubr.f32.gmra.mxu0 %v317
      %v435 = vpop.f32.mrf.mxu0
      %v436 = vadd.f32 0.0, %v435
      %v437 = vpop.f32.mrf.mxu0
      %438 = vmatprep.mubr.f32.mxu0 0.0
      %439 = vmatmul.mubr.f32.gmra.mxu0 %v320
      %v440 = vpop.f32.mrf.mxu0
      %v441 = vadd.f32 0.0, %v440
      %v442 = vpop.f32.mrf.mxu0
      %443 = vmatprep.mubr.f32.mxu0 0.0
      %444 = vmatmul.mubr.f32.gmra.mxu0 %v323
      %v445 = vpop.f32.mrf.mxu0
      %v446 = vadd.f32 0.0, %v445
      %v447 = vpop.f32.mrf.mxu0
      %448 = vmatprep.mubr.f32.mxu0 0.0
      %449 = vmatmul.mubr.f32.gmra.mxu0 %v326
      %v450 = vpop.f32.mrf.mxu0
      %v451 = vadd.f32 0.0, %v450
      %v452 = vpop.f32.mrf.mxu0
      %453 = vmatprep.mubr.f32.mxu0 0.0
      %454 = vmatmul.mubr.f32.gmra.mxu0 %v329
      %v455 = vpop.f32.mrf.mxu0
      %v456 = vadd.f32 0.0, %v455
      %v457 = vpop.f32.mrf.mxu0
      %458 = vmatprep.mubr.f32.mxu0 0.0
      %459 = vmatmul.mubr.f32.gmra.mxu0 %v332
      %v460 = vpop.f32.mrf.mxu0
      %v461 = vadd.f32 0.0, %v460
      %v462 = vpop.f32.mrf.mxu0
      %463 = vmatprep.mubr.f32.mxu0 0.0
      %464 = vmatmul.mubr.f32.gmra.mxu0 %v335
      %v465 = vpop.f32.mrf.mxu0
      %v466 = vadd.f32 0.0, %v465
      %v467 = vpop.f32.mrf.mxu0
      %468 = vmatprep.mubr.f32.mxu0 0.0
      %469 = vmatmul.mubr.f32.gmra.mxu0 %v338
      %v470 = vpop.f32.mrf.mxu0
      %v471 = vadd.f32 0.0, %v470
      %v472 = vpop.f32.mrf.mxu0
      %473 = vmatprep.mubr.f32.mxu0 0.0
      %474 = vmatmul.mubr.f32.gmra.mxu0 %v341
      %v475 = vpop.f32.mrf.mxu0
      %v476 = vadd.f32 0.0, %v475
      %v477 = vpop.f32.mrf.mxu0
      %478 = vmatprep.mubr.f32.mxu0 0.0
      %479 = vmatmul.mubr.f32.gmra.mxu0 %v344
      %v480 = vpop.f32.mrf.mxu0
      %v481 = vadd.f32 0.0, %v480
      %v482 = vpop.f32.mrf.mxu0
      %483 = vmatprep.mubr.f32.mxu0 0.0
      %484 = vmatmul.mubr.f32.gmra.mxu0 %v347
      %v485 = vpop.f32.mrf.mxu0
      %v486 = vadd.f32 0.0, %v485
      %v487 = vpop.f32.mrf.mxu0
      %488 = vmatprep.mubr.f32.mxu0 0.0
      %489 = vmatmul.mubr.f32.gmra.mxu0 %v350
      %v490 = vpop.f32.mrf.mxu0
      %v491 = vadd.f32 0.0, %v490
      %v492 = vpop.f32.mrf.mxu0
      %493 = vmatprep.mubr.f32.mxu0 0.0
      %494 = vmatmul.mubr.f32.gmra.mxu0 %v353
      %v495 = vpop.f32.mrf.mxu0
      %v496 = vadd.f32 0.0, %v495
      %v497 = vpop.f32.mrf.mxu0
      %498 = vmatprep.mubr.f32.mxu0 0.0
      %499 = vmatmul.mubr.f32.gmra.mxu0 %v356
      %v500 = vpop.f32.mrf.mxu0
      %v501 = vadd.f32 0.0, %v500
      %v502 = vpop.f32.mrf.mxu0
      %503 = vmatprep.mubr.f32.mxu0 0.0
      %504 = vmatmul.mubr.f32.gmra.mxu0 %v359
      %v505 = vpop.f32.mrf.mxu0
      %v506 = vadd.f32 0.0, %v505
      %v507 = vpop.f32.mrf.mxu0
      %508 = vdwg.mxu0
      %v510 = vsel %vm312, %v256, 0
      %v513 = vsel %vm312, %v257, 0
      %v516 = vsel %vm312, %v258, 0
      %v519 = vsel %vm312, %v259, 0
      %v522 = vsel %vm312, %v260, 0
      %v525 = vsel %vm312, %v261, 0
      %v528 = vsel %vm312, %v262, 0
      %v531 = vsel %vm312, %v263, 0
      %v534 = vsel %vm312, %v264, 0
      %v537 = vsel %vm312, %v265, 0
      %v540 = vsel %vm312, %v266, 0
      %v543 = vsel %vm312, %v267, 0
      %v546 = vsel %vm312, %v268, 0
      %v549 = vsel %vm312, %v269, 0
      %v552 = vsel %vm312, %v270, 0
      %v555 = vsel %vm312, %v271, 0
      %v557 = vsel %vm361, %v255, 0
      %559 = vmatprep.subr.mxu0 0.0
      %560 = vmatpush1.msra.mxu0 0.0
      %561 = vmatprep.subr.mxu0 0.0
      %562 = vmatpush1.msra.mxu0 0.0
      %563 = vmatprep.subr.mxu0 0.0
      %564 = vmatpush1.msra.mxu0 0.0
      %565 = vmatprep.subr.mxu0 0.0
      %566 = vmatpush1.msra.mxu0 0.0
      %567 = vmatprep.subr.mxu0 0.0
      %568 = vmatpush1.msra.mxu0 0.0
      %569 = vmatprep.subr.mxu0 0.0
      %570 = vmatpush1.msra.mxu0 0.0
      %571 = vmatprep.subr.mxu0 0.0
      %572 = vmatpush1.msra.mxu0 0.0
      %573 = vmatprep.subr.mxu0 0.0
      %574 = vmatpush1.msra.mxu0 0.0
      %575 = vmatprep.subr.mxu0 0.0
      %576 = vmatpush1.msra.mxu0 0.0
      %577 = vmatprep.subr.mxu0 0.0
      %578 = vmatpush1.msra.mxu0 0.0
      %579 = vmatprep.subr.mxu0 0.0
      %580 = vmatpush1.msra.mxu0 %v557
      %581 = vmatprep.subr.mxu0 0.0
      %582 = vmatpush1.msra.mxu0 %v254
      %583 = vmatprep.subr.mxu0 0.0
      %584 = vmatpush1.msra.mxu0 %v253
      %585 = vmatprep.subr.mxu0 0.0
      %586 = vmatpush1.msra.mxu0 %v252
      %587 = vmatprep.subr.mxu0 0.0
      %588 = vmatpush1.msra.mxu0 %v251
      %589 = vmatprep.subr.mxu0 0.0
      %590 = vmatpush1.msra.mxu0 %v250
      %591 = vmatprep.subr.mxu0 0.0
      %592 = vmatpush2.msra.mxu0 0.0
      %593 = vmatprep.subr.mxu0 0.0
      %594 = vmatpush2.msra.mxu0 0.0
      %595 = vmatprep.subr.mxu0 0.0
      %596 = vmatpush2.msra.mxu0 0.0
      %597 = vmatprep.subr.mxu0 0.0
      %598 = vmatpush2.msra.mxu0 0.0
      %599 = vmatprep.subr.mxu0 0.0
      %600 = vmatpush2.msra.mxu0 0.0
      %601 = vmatprep.subr.mxu0 0.0
      %602 = vmatpush2.msra.mxu0 0.0
      %603 = vmatprep.subr.mxu0 0.0
      %604 = vmatpush2.msra.mxu0 0.0
      %605 = vmatprep.subr.mxu0 0.0
      %606 = vmatpush2.msra.mxu0 0.0
      %607 = vmatprep.subr.mxu0 0.0
      %608 = vmatpush2.msra.mxu0 0.0
      %609 = vmatprep.subr.mxu0 0.0
      %610 = vmatpush2.msra.mxu0 0.0
      %611 = vmatprep.subr.mxu0 0.0
      %612 = vmatpush2.msra.mxu0 0.0
      %613 = vmatprep.subr.mxu0 0.0
      %614 = vmatpush2.msra.mxu0 0.0
      %615 = vmatprep.subr.mxu0 0.0
      %616 = vmatpush2.msra.mxu0 0.0
      %617 = vmatprep.subr.mxu0 0.0
      %618 = vmatpush2.msra.mxu0 0.0
      %619 = vmatprep.subr.mxu0 0.0
      %620 = vmatpush2.msra.mxu0 0.0
      %621 = vmatprep.subr.mxu0 0.0
      %622 = vmatpush2.msra.mxu0 0.0
      %623 = vmatprep.mubr.f32.mxu0 0.0
      %624 = vmatmul.mubr.f32.gmra.mxu0 %v510
      %v625 = vpop.f32.mrf.mxu0
      %v626 = vadd.f32 %v431, %v625
      %v627 = vpop.f32.mrf.mxu0
      %628 = vmatprep.mubr.f32.mxu0 0.0
      %629 = vmatmul.mubr.f32.gmra.mxu0 %v513
      %v630 = vpop.f32.mrf.mxu0
      %v631 = vadd.f32 %v436, %v630
      %v632 = vpop.f32.mrf.mxu0
      %633 = vmatprep.mubr.f32.mxu0 0.0
      %634 = vmatmul.mubr.f32.gmra.mxu0 %v516
      %v635 = vpop.f32.mrf.mxu0
      %v636 = vadd.f32 %v441, %v635
      %v637 = vpop.f32.mrf.mxu0
      %638 = vmatprep.mubr.f32.mxu0 0.0
      %639 = vmatmul.mubr.f32.gmra.mxu0 %v519
      %v640 = vpop.f32.mrf.mxu0
      %v641 = vadd.f32 %v446, %v640
      %v642 = vpop.f32.mrf.mxu0
      %643 = vmatprep.mubr.f32.mxu0 0.0
      %644 = vmatmul.mubr.f32.gmra.mxu0 %v522
      %v645 = vpop.f32.mrf.mxu0
      %v646 = vadd.f32 %v451, %v645
      %v647 = vpop.f32.mrf.mxu0
      %648 = vmatprep.mubr.f32.mxu0 0.0
      %649 = vmatmul.mubr.f32.gmra.mxu0 %v525
      %v650 = vpop.f32.mrf.mxu0
      %v651 = vadd.f32 %v456, %v650
      %v652 = vpop.f32.mrf.mxu0
      %653 = vmatprep.mubr.f32.mxu0 0.0
      %654 = vmatmul.mubr.f32.gmra.mxu0 %v528
      %v655 = vpop.f32.mrf.mxu0
      %v656 = vadd.f32 %v461, %v655
      %v657 = vpop.f32.mrf.mxu0
      %658 = vmatprep.mubr.f32.mxu0 0.0
      %659 = vmatmul.mubr.f32.gmra.mxu0 %v531
      %v660 = vpop.f32.mrf.mxu0
      %v661 = vadd.f32 %v466, %v660
      %v662 = vpop.f32.mrf.mxu0
      %663 = vmatprep.mubr.f32.mxu0 0.0
      %664 = vmatmul.mubr.f32.gmra.mxu0 %v534
      %v665 = vpop.f32.mrf.mxu0
      %v666 = vadd.f32 %v471, %v665
      %v667 = vpop.f32.mrf.mxu0
      %668 = vmatprep.mubr.f32.mxu0 0.0
      %669 = vmatmul.mubr.f32.gmra.mxu0 %v537
      %v670 = vpop.f32.mrf.mxu0
      %v671 = vadd.f32 %v476, %v670
      %v672 = vpop.f32.mrf.mxu0
      %673 = vmatprep.mubr.f32.mxu0 0.0
      %674 = vmatmul.mubr.f32.gmra.mxu0 %v540
      %v675 = vpop.f32.mrf.mxu0
      %v676 = vadd.f32 %v481, %v675
      %v677 = vpop.f32.mrf.mxu0
      %678 = vmatprep.mubr.f32.mxu0 0.0
      %679 = vmatmul.mubr.f32.gmra.mxu0 %v543
      %v680 = vpop.f32.mrf.mxu0
      %v681 = vadd.f32 %v486, %v680
      %v682 = vpop.f32.mrf.mxu0
      %683 = vmatprep.mubr.f32.mxu0 0.0
      %684 = vmatmul.mubr.f32.gmra.mxu0 %v546
      %v685 = vpop.f32.mrf.mxu0
      %v686 = vadd.f32 %v491, %v685
      %v687 = vpop.f32.mrf.mxu0
      %688 = vmatprep.mubr.f32.mxu0 0.0
      %689 = vmatmul.mubr.f32.gmra.mxu0 %v549
      %v690 = vpop.f32.mrf.mxu0
      %v691 = vadd.f32 %v496, %v690
      %v692 = vpop.f32.mrf.mxu0
      %693 = vmatprep.mubr.f32.mxu0 0.0
      %694 = vmatmul.mubr.f32.gmra.mxu0 %v552
      %v695 = vpop.f32.mrf.mxu0
      %v696 = vadd.f32 %v501, %v695
      %v697 = vpop.f32.mrf.mxu0
      %698 = vmatprep.mubr.f32.mxu0 0.0
      %699 = vmatmul.mubr.f32.gmra.mxu0 %v555
      %v700 = vpop.f32.mrf.mxu0
      %v701 = vadd.f32 %v506, %v700
      %v702 = vpop.f32.mrf.mxu0
      %703 = vdwg.mxu0
      %s704 = scalar_lea.vmem %s1, 512
      %v705 = vld [vmem:[%s704] sm:$0xff]
      %v706 = vld [vmem:[%s704 + $0x8] sm:$0xff]
      %v707 = vld [vmem:[%s704 + $0x10] sm:$0xff]
      %v708 = vld [vmem:[%s704 + $0x18] sm:$0xff]
      %v709 = vld [vmem:[%s704 + $0x20] sm:$0xff]
      %v710 = vld [vmem:[%s704 + $0x28] sm:$0xff]
      %v711 = vld [vmem:[%s704 + $0x30] sm:$0xff]
      %v712 = vld [vmem:[%s704 + $0x38] sm:$0xff]
      %v713 = vld [vmem:[%s704 + $0x40] sm:$0xff]
      %v714 = vld [vmem:[%s704 + $0x48] sm:$0xff]
      %v715 = vld [vmem:[%s704 + $0x50] sm:$0xff]
      %v716 = vld [vmem:[%s704 + $0x58] sm:$0xff]
      %v717 = vld [vmem:[%s704 + $0x60] sm:$0xff]
      %v718 = vld [vmem:[%s704 + $0x68] sm:$0xff]
      %v719 = vld [vmem:[%s704 + $0x70] sm:$0xff]
      %v720 = vld [vmem:[%s704 + $0x78] sm:$0xff]
      %721 = vrot.lane.b32.xlu0 %v250, 126
      %v722 = vpop.permute.xlu0 %721
      %723 = vrot.lane.b32.xlu0 %v251, 126
      %v724 = vpop.permute.xlu0 %723
      %725 = vrot.lane.b32.xlu0 %v252, 126
      %v726 = vpop.permute.xlu0 %725
      %727 = vrot.lane.b32.xlu0 %v253, 126
      %v728 = vpop.permute.xlu0 %727
      %729 = vrot.lane.b32.xlu0 %v254, 126
      %v730 = vpop.permute.xlu0 %729
      %731 = vrot.lane.b32.xlu0 %v255, 126
      %v732 = vpop.permute.xlu0 %731
      %v739 = vsel %vm312, %v705, 0
      %v742 = vsel %vm312, %v706, 0
      %v745 = vsel %vm312, %v707, 0
      %v748 = vsel %vm312, %v708, 0
      %v751 = vsel %vm312, %v709, 0
      %v754 = vsel %vm312, %v710, 0
      %v757 = vsel %vm312, %v711, 0
      %v760 = vsel %vm312, %v712, 0
      %v763 = vsel %vm312, %v713, 0
      %v766 = vsel %vm312, %v714, 0
      %v769 = vsel %vm312, %v715, 0
      %v772 = vsel %vm312, %v716, 0
      %v775 = vsel %vm312, %v717, 0
      %v778 = vsel %vm312, %v718, 0
      %v781 = vsel %vm312, %v719, 0
      %v784 = vsel %vm312, %v720, 0
      %v786 = vsel %vm361, %v732, 0
      %788 = vmatprep.subr.mxu0 0.0
      %789 = vmatpush1.msra.mxu0 0.0
      %790 = vmatprep.subr.mxu0 0.0
      %791 = vmatpush1.msra.mxu0 0.0
      %792 = vmatprep.subr.mxu0 0.0
      %793 = vmatpush1.msra.mxu0 0.0
      %794 = vmatprep.subr.mxu0 0.0
      %795 = vmatpush1.msra.mxu0 0.0
      %796 = vmatprep.subr.mxu0 0.0
      %797 = vmatpush1.msra.mxu0 0.0
      %798 = vmatprep.subr.mxu0 0.0
      %799 = vmatpush1.msra.mxu0 0.0
      %800 = vmatprep.subr.mxu0 0.0
      %801 = vmatpush1.msra.mxu0 0.0
      %802 = vmatprep.subr.mxu0 0.0
      %803 = vmatpush1.msra.mxu0 0.0
      %804 = vmatprep.subr.mxu0 0.0
      %805 = vmatpush1.msra.mxu0 0.0
      %806 = vmatprep.subr.mxu0 0.0
      %807 = vmatpush1.msra.mxu0 0.0
      %808 = vmatprep.subr.mxu0 0.0
      %809 = vmatpush1.msra.mxu0 %v786
      %810 = vmatprep.subr.mxu0 0.0
      %811 = vmatpush1.msra.mxu0 %v730
      %812 = vmatprep.subr.mxu0 0.0
      %813 = vmatpush1.msra.mxu0 %v728
      %814 = vmatprep.subr.mxu0 0.0
      %815 = vmatpush1.msra.mxu0 %v726
      %816 = vmatprep.subr.mxu0 0.0
      %817 = vmatpush1.msra.mxu0 %v724
      %818 = vmatprep.subr.mxu0 0.0
      %819 = vmatpush1.msra.mxu0 %v722
      %820 = vmatprep.subr.mxu0 0.0
      %821 = vmatpush2.msra.mxu0 0.0
      %822 = vmatprep.subr.mxu0 0.0
      %823 = vmatpush2.msra.mxu0 0.0
      %824 = vmatprep.subr.mxu0 0.0
      %825 = vmatpush2.msra.mxu0 0.0
      %826 = vmatprep.subr.mxu0 0.0
      %827 = vmatpush2.msra.mxu0 0.0
      %828 = vmatprep.subr.mxu0 0.0
      %829 = vmatpush2.msra.mxu0 0.0
      %830 = vmatprep.subr.mxu0 0.0
      %831 = vmatpush2.msra.mxu0 0.0
      %832 = vmatprep.subr.mxu0 0.0
      %833 = vmatpush2.msra.mxu0 0.0
      %834 = vmatprep.subr.mxu0 0.0
      %835 = vmatpush2.msra.mxu0 0.0
      %836 = vmatprep.subr.mxu0 0.0
      %837 = vmatpush2.msra.mxu0 0.0
      %838 = vmatprep.subr.mxu0 0.0
      %839 = vmatpush2.msra.mxu0 0.0
      %840 = vmatprep.subr.mxu0 0.0
      %841 = vmatpush2.msra.mxu0 0.0
      %842 = vmatprep.subr.mxu0 0.0
      %843 = vmatpush2.msra.mxu0 0.0
      %844 = vmatprep.subr.mxu0 0.0
      %845 = vmatpush2.msra.mxu0 0.0
      %846 = vmatprep.subr.mxu0 0.0
      %847 = vmatpush2.msra.mxu0 0.0
      %848 = vmatprep.subr.mxu0 0.0
      %849 = vmatpush2.msra.mxu0 0.0
      %850 = vmatprep.subr.mxu0 0.0
      %851 = vmatpush2.msra.mxu0 0.0
      %852 = vmatprep.mubr.f32.mxu0 0.0
      %853 = vmatmul.mubr.f32.gmra.mxu0 %v739
      %v854 = vpop.f32.mrf.mxu0
      %v855 = vadd.f32 0.0, %v854
      %v856 = vpop.f32.mrf.mxu0
      %857 = vmatprep.mubr.f32.mxu0 0.0
      %858 = vmatmul.mubr.f32.gmra.mxu0 %v742
      %v859 = vpop.f32.mrf.mxu0
      %v860 = vadd.f32 0.0, %v859
      %v861 = vpop.f32.mrf.mxu0
      %862 = vmatprep.mubr.f32.mxu0 0.0
      %863 = vmatmul.mubr.f32.gmra.mxu0 %v745
      %v864 = vpop.f32.mrf.mxu0
      %v865 = vadd.f32 0.0, %v864
      %v866 = vpop.f32.mrf.mxu0
      %867 = vmatprep.mubr.f32.mxu0 0.0
      %868 = vmatmul.mubr.f32.gmra.mxu0 %v748
      %v869 = vpop.f32.mrf.mxu0
      %v870 = vadd.f32 0.0, %v869
      %v871 = vpop.f32.mrf.mxu0
      %872 = vmatprep.mubr.f32.mxu0 0.0
      %873 = vmatmul.mubr.f32.gmra.mxu0 %v751
      %v874 = vpop.f32.mrf.mxu0
      %v875 = vadd.f32 0.0, %v874
      %v876 = vpop.f32.mrf.mxu0
      %877 = vmatprep.mubr.f32.mxu0 0.0
      %878 = vmatmul.mubr.f32.gmra.mxu0 %v754
      %v879 = vpop.f32.mrf.mxu0
      %v880 = vadd.f32 0.0, %v879
      %v881 = vpop.f32.mrf.mxu0
      %882 = vmatprep.mubr.f32.mxu0 0.0
      %883 = vmatmul.mubr.f32.gmra.mxu0 %v757
      %v884 = vpop.f32.mrf.mxu0
      %v885 = vadd.f32 0.0, %v884
      %v886 = vpop.f32.mrf.mxu0
      %887 = vmatprep.mubr.f32.mxu0 0.0
      %888 = vmatmul.mubr.f32.gmra.mxu0 %v760
      %v889 = vpop.f32.mrf.mxu0
      %v890 = vadd.f32 0.0, %v889
      %v891 = vpop.f32.mrf.mxu0
      %892 = vmatprep.mubr.f32.mxu0 0.0
      %893 = vmatmul.mubr.f32.gmra.mxu0 %v763
      %v894 = vpop.f32.mrf.mxu0
      %v895 = vadd.f32 0.0, %v894
      %v896 = vpop.f32.mrf.mxu0
      %897 = vmatprep.mubr.f32.mxu0 0.0
      %898 = vmatmul.mubr.f32.gmra.mxu0 %v766
      %v899 = vpop.f32.mrf.mxu0
      %v900 = vadd.f32 0.0, %v899
      %v901 = vpop.f32.mrf.mxu0
      %902 = vmatprep.mubr.f32.mxu0 0.0
      %903 = vmatmul.mubr.f32.gmra.mxu0 %v769
      %v904 = vpop.f32.mrf.mxu0
      %v905 = vadd.f32 0.0, %v904
      %v906 = vpop.f32.mrf.mxu0
      %907 = vmatprep.mubr.f32.mxu0 0.0
      %908 = vmatmul.mubr.f32.gmra.mxu0 %v772
      %v909 = vpop.f32.mrf.mxu0
      %v910 = vadd.f32 0.0, %v909
      %v911 = vpop.f32.mrf.mxu0
      %912 = vmatprep.mubr.f32.mxu0 0.0
      %913 = vmatmul.mubr.f32.gmra.mxu0 %v775
      %v914 = vpop.f32.mrf.mxu0
      %v915 = vadd.f32 0.0, %v914
      %v916 = vpop.f32.mrf.mxu0
      %917 = vmatprep.mubr.f32.mxu0 0.0
      %918 = vmatmul.mubr.f32.gmra.mxu0 %v778
      %v919 = vpop.f32.mrf.mxu0
      %v920 = vadd.f32 0.0, %v919
      %v921 = vpop.f32.mrf.mxu0
      %922 = vmatprep.mubr.f32.mxu0 0.0
      %923 = vmatmul.mubr.f32.gmra.mxu0 %v781
      %v924 = vpop.f32.mrf.mxu0
      %v925 = vadd.f32 0.0, %v924
      %v926 = vpop.f32.mrf.mxu0
      %927 = vmatprep.mubr.f32.mxu0 0.0
      %928 = vmatmul.mubr.f32.gmra.mxu0 %v784
      %v929 = vpop.f32.mrf.mxu0
      %v930 = vadd.f32 0.0, %v929
      %v931 = vpop.f32.mrf.mxu0
      %932 = vdwg.mxu0
      %v933 = vadd.f32 %v626, %v855
      %v934 = vadd.f32 %v631, %v860
      %v935 = vadd.f32 %v636, %v865
      %v936 = vadd.f32 %v641, %v870
      %v937 = vadd.f32 %v646, %v875
      %v938 = vadd.f32 %v651, %v880
      %v939 = vadd.f32 %v656, %v885
      %v940 = vadd.f32 %v661, %v890
      %v941 = vadd.f32 %v666, %v895
      %v942 = vadd.f32 %v671, %v900
      %v943 = vadd.f32 %v676, %v905
      %v944 = vadd.f32 %v681, %v910
      %v945 = vadd.f32 %v686, %v915
      %v946 = vadd.f32 %v691, %v920
      %v947 = vadd.f32 %v696, %v925
      %v948 = vadd.f32 %v701, %v930
      %s949 = scalar_lea.vmem %s1, 768
      %v950 = vld [vmem:[%s949] sm:$0xff]
      %v951 = vld [vmem:[%s949 + $0x8] sm:$0xff]
      %v952 = vld [vmem:[%s949 + $0x10] sm:$0xff]
      %v953 = vld [vmem:[%s949 + $0x18] sm:$0xff]
      %v954 = vld [vmem:[%s949 + $0x20] sm:$0xff]
      %v955 = vld [vmem:[%s949 + $0x28] sm:$0xff]
      %v956 = vld [vmem:[%s949 + $0x30] sm:$0xff]
      %v957 = vld [vmem:[%s949 + $0x38] sm:$0xff]
      %v958 = vld [vmem:[%s949 + $0x40] sm:$0xff]
      %v959 = vld [vmem:[%s949 + $0x48] sm:$0xff]
      %v960 = vld [vmem:[%s949 + $0x50] sm:$0xff]
      %v961 = vld [vmem:[%s949 + $0x58] sm:$0xff]
      %v962 = vld [vmem:[%s949 + $0x60] sm:$0xff]
      %v963 = vld [vmem:[%s949 + $0x68] sm:$0xff]
      %v964 = vld [vmem:[%s949 + $0x70] sm:$0xff]
      %v965 = vld [vmem:[%s949 + $0x78] sm:$0xff]
      %966 = vrot.lane.b32.xlu0 %v250, 125
      %v967 = vpop.permute.xlu0 %966
      %968 = vrot.lane.b32.xlu0 %v251, 125
      %v969 = vpop.permute.xlu0 %968
      %970 = vrot.lane.b32.xlu0 %v252, 125
      %v971 = vpop.permute.xlu0 %970
      %972 = vrot.lane.b32.xlu0 %v253, 125
      %v973 = vpop.permute.xlu0 %972
      %974 = vrot.lane.b32.xlu0 %v254, 125
      %v975 = vpop.permute.xlu0 %974
      %976 = vrot.lane.b32.xlu0 %v255, 125
      %v977 = vpop.permute.xlu0 %976
      %v984 = vsel %vm312, %v950, 0
      %v987 = vsel %vm312, %v951, 0
      %v990 = vsel %vm312, %v952, 0
      %v993 = vsel %vm312, %v953, 0
      %v996 = vsel %vm312, %v954, 0
      %v999 = vsel %vm312, %v955, 0
      %v1002 = vsel %vm312, %v956, 0
      %v1005 = vsel %vm312, %v957, 0
      %v1008 = vsel %vm312, %v958, 0
      %v1011 = vsel %vm312, %v959, 0
      %v1014 = vsel %vm312, %v960, 0
      %v1017 = vsel %vm312, %v961, 0
      %v1020 = vsel %vm312, %v962, 0
      %v1023 = vsel %vm312, %v963, 0
      %v1026 = vsel %vm312, %v964, 0
      %v1029 = vsel %vm312, %v965, 0
      %v1031 = vsel %vm361, %v977, 0
      %1033 = vmatprep.subr.mxu0 0.0
      %1034 = vmatpush1.msra.mxu0 0.0
      %1035 = vmatprep.subr.mxu0 0.0
      %1036 = vmatpush1.msra.mxu0 0.0
      %1037 = vmatprep.subr.mxu0 0.0
      %1038 = vmatpush1.msra.mxu0 0.0
      %1039 = vmatprep.subr.mxu0 0.0
      %1040 = vmatpush1.msra.mxu0 0.0
      %1041 = vmatprep.subr.mxu0 0.0
      %1042 = vmatpush1.msra.mxu0 0.0
      %1043 = vmatprep.subr.mxu0 0.0
      %1044 = vmatpush1.msra.mxu0 0.0
      %1045 = vmatprep.subr.mxu0 0.0
      %1046 = vmatpush1.msra.mxu0 0.0
      %1047 = vmatprep.subr.mxu0 0.0
      %1048 = vmatpush1.msra.mxu0 0.0
      %1049 = vmatprep.subr.mxu0 0.0
      %1050 = vmatpush1.msra.mxu0 0.0
      %1051 = vmatprep.subr.mxu0 0.0
      %1052 = vmatpush1.msra.mxu0 0.0
      %1053 = vmatprep.subr.mxu0 0.0
      %1054 = vmatpush1.msra.mxu0 %v1031
      %1055 = vmatprep.subr.mxu0 0.0
      %1056 = vmatpush1.msra.mxu0 %v975
      %1057 = vmatprep.subr.mxu0 0.0
      %1058 = vmatpush1.msra.mxu0 %v973
      %1059 = vmatprep.subr.mxu0 0.0
      %1060 = vmatpush1.msra.mxu0 %v971
      %1061 = vmatprep.subr.mxu0 0.0
      %1062 = vmatpush1.msra.mxu0 %v969
      %1063 = vmatprep.subr.mxu0 0.0
      %1064 = vmatpush1.msra.mxu0 %v967
      %1065 = vmatprep.subr.mxu0 0.0
      %1066 = vmatpush2.msra.mxu0 0.0
      %1067 = vmatprep.subr.mxu0 0.0
      %1068 = vmatpush2.msra.mxu0 0.0
      %1069 = vmatprep.subr.mxu0 0.0
      %1070 = vmatpush2.msra.mxu0 0.0
      %1071 = vmatprep.subr.mxu0 0.0
      %1072 = vmatpush2.msra.mxu0 0.0
      %1073 = vmatprep.subr.mxu0 0.0
      %1074 = vmatpush2.msra.mxu0 0.0
      %1075 = vmatprep.subr.mxu0 0.0
      %1076 = vmatpush2.msra.mxu0 0.0
      %1077 = vmatprep.subr.mxu0 0.0
      %1078 = vmatpush2.msra.mxu0 0.0
      %1079 = vmatprep.subr.mxu0 0.0
      %1080 = vmatpush2.msra.mxu0 0.0
      %1081 = vmatprep.subr.mxu0 0.0
      %1082 = vmatpush2.msra.mxu0 0.0
      %1083 = vmatprep.subr.mxu0 0.0
      %1084 = vmatpush2.msra.mxu0 0.0
      %1085 = vmatprep.subr.mxu0 0.0
      %1086 = vmatpush2.msra.mxu0 0.0
      %1087 = vmatprep.subr.mxu0 0.0
      %1088 = vmatpush2.msra.mxu0 0.0
      %1089 = vmatprep.subr.mxu0 0.0
      %1090 = vmatpush2.msra.mxu0 0.0
      %1091 = vmatprep.subr.mxu0 0.0
      %1092 = vmatpush2.msra.mxu0 0.0
      %1093 = vmatprep.subr.mxu0 0.0
      %1094 = vmatpush2.msra.mxu0 0.0
      %1095 = vmatprep.subr.mxu0 0.0
      %1096 = vmatpush2.msra.mxu0 0.0
      %1097 = vmatprep.mubr.f32.mxu0 0.0
      %1098 = vmatmul.mubr.f32.gmra.mxu0 %v984
      %v1099 = vpop.f32.mrf.mxu0
      %v1100 = vadd.f32 0.0, %v1099
      %v1101 = vpop.f32.mrf.mxu0
      %1102 = vmatprep.mubr.f32.mxu0 0.0
      %1103 = vmatmul.mubr.f32.gmra.mxu0 %v987
      %v1104 = vpop.f32.mrf.mxu0
      %v1105 = vadd.f32 0.0, %v1104
      %v1106 = vpop.f32.mrf.mxu0
      %1107 = vmatprep.mubr.f32.mxu0 0.0
      %1108 = vmatmul.mubr.f32.gmra.mxu0 %v990
      %v1109 = vpop.f32.mrf.mxu0
      %v1110 = vadd.f32 0.0, %v1109
      %v1111 = vpop.f32.mrf.mxu0
      %1112 = vmatprep.mubr.f32.mxu0 0.0
      %1113 = vmatmul.mubr.f32.gmra.mxu0 %v993
      %v1114 = vpop.f32.mrf.mxu0
      %v1115 = vadd.f32 0.0, %v1114
      %v1116 = vpop.f32.mrf.mxu0
      %1117 = vmatprep.mubr.f32.mxu0 0.0
      %1118 = vmatmul.mubr.f32.gmra.mxu0 %v996
      %v1119 = vpop.f32.mrf.mxu0
      %v1120 = vadd.f32 0.0, %v1119
      %v1121 = vpop.f32.mrf.mxu0
      %1122 = vmatprep.mubr.f32.mxu0 0.0
      %1123 = vmatmul.mubr.f32.gmra.mxu0 %v999
      %v1124 = vpop.f32.mrf.mxu0
      %v1125 = vadd.f32 0.0, %v1124
      %v1126 = vpop.f32.mrf.mxu0
      %1127 = vmatprep.mubr.f32.mxu0 0.0
      %1128 = vmatmul.mubr.f32.gmra.mxu0 %v1002
      %v1129 = vpop.f32.mrf.mxu0
      %v1130 = vadd.f32 0.0, %v1129
      %v1131 = vpop.f32.mrf.mxu0
      %1132 = vmatprep.mubr.f32.mxu0 0.0
      %1133 = vmatmul.mubr.f32.gmra.mxu0 %v1005
      %v1134 = vpop.f32.mrf.mxu0
      %v1135 = vadd.f32 0.0, %v1134
      %v1136 = vpop.f32.mrf.mxu0
      %1137 = vmatprep.mubr.f32.mxu0 0.0
      %1138 = vmatmul.mubr.f32.gmra.mxu0 %v1008
      %v1139 = vpop.f32.mrf.mxu0
      %v1140 = vadd.f32 0.0, %v1139
      %v1141 = vpop.f32.mrf.mxu0
      %1142 = vmatprep.mubr.f32.mxu0 0.0
      %1143 = vmatmul.mubr.f32.gmra.mxu0 %v1011
      %v1144 = vpop.f32.mrf.mxu0
      %v1145 = vadd.f32 0.0, %v1144
      %v1146 = vpop.f32.mrf.mxu0
      %1147 = vmatprep.mubr.f32.mxu0 0.0
      %1148 = vmatmul.mubr.f32.gmra.mxu0 %v1014
      %v1149 = vpop.f32.mrf.mxu0
      %v1150 = vadd.f32 0.0, %v1149
      %v1151 = vpop.f32.mrf.mxu0
      %1152 = vmatprep.mubr.f32.mxu0 0.0
      %1153 = vmatmul.mubr.f32.gmra.mxu0 %v1017
      %v1154 = vpop.f32.mrf.mxu0
      %v1155 = vadd.f32 0.0, %v1154
      %v1156 = vpop.f32.mrf.mxu0
      %1157 = vmatprep.mubr.f32.mxu0 0.0
      %1158 = vmatmul.mubr.f32.gmra.mxu0 %v1020
      %v1159 = vpop.f32.mrf.mxu0
      %v1160 = vadd.f32 0.0, %v1159
      %v1161 = vpop.f32.mrf.mxu0
      %1162 = vmatprep.mubr.f32.mxu0 0.0
      %1163 = vmatmul.mubr.f32.gmra.mxu0 %v1023
      %v1164 = vpop.f32.mrf.mxu0
      %v1165 = vadd.f32 0.0, %v1164
      %v1166 = vpop.f32.mrf.mxu0
      %1167 = vmatprep.mubr.f32.mxu0 0.0
      %1168 = vmatmul.mubr.f32.gmra.mxu0 %v1026
      %v1169 = vpop.f32.mrf.mxu0
      %v1170 = vadd.f32 0.0, %v1169
      %v1171 = vpop.f32.mrf.mxu0
      %1172 = vmatprep.mubr.f32.mxu0 0.0
      %1173 = vmatmul.mubr.f32.gmra.mxu0 %v1029
      %v1174 = vpop.f32.mrf.mxu0
      %v1175 = vadd.f32 0.0, %v1174
      %v1176 = vpop.f32.mrf.mxu0
      %1177 = vdwg.mxu0
      %v1178 = vadd.f32 %v933, %v1100
      %v1179 = vadd.f32 %v934, %v1105
      %v1180 = vadd.f32 %v935, %v1110
      %v1181 = vadd.f32 %v936, %v1115
      %v1182 = vadd.f32 %v937, %v1120
      %v1183 = vadd.f32 %v938, %v1125
      %v1184 = vadd.f32 %v939, %v1130
      %v1185 = vadd.f32 %v940, %v1135
      %v1186 = vadd.f32 %v941, %v1140
      %v1187 = vadd.f32 %v942, %v1145
      %v1188 = vadd.f32 %v943, %v1150
      %v1189 = vadd.f32 %v944, %v1155
      %v1190 = vadd.f32 %v945, %v1160
      %v1191 = vadd.f32 %v946, %v1165
      %v1192 = vadd.f32 %v947, %v1170
      %v1193 = vadd.f32 %v948, %v1175
      %s1194 = scalar_lea.vmem %s1, 1024
      %v1195 = vld [vmem:[%s1194] sm:$0xff]
      %v1196 = vld [vmem:[%s1194 + $0x8] sm:$0xff]
      %v1197 = vld [vmem:[%s1194 + $0x10] sm:$0xff]
      %v1198 = vld [vmem:[%s1194 + $0x18] sm:$0xff]
      %v1199 = vld [vmem:[%s1194 + $0x20] sm:$0xff]
      %v1200 = vld [vmem:[%s1194 + $0x28] sm:$0xff]
      %v1201 = vld [vmem:[%s1194 + $0x30] sm:$0xff]
      %v1202 = vld [vmem:[%s1194 + $0x38] sm:$0xff]
      %v1203 = vld [vmem:[%s1194 + $0x40] sm:$0xff]
      %v1204 = vld [vmem:[%s1194 + $0x48] sm:$0xff]
      %v1205 = vld [vmem:[%s1194 + $0x50] sm:$0xff]
      %v1206 = vld [vmem:[%s1194 + $0x58] sm:$0xff]
      %v1207 = vld [vmem:[%s1194 + $0x60] sm:$0xff]
      %v1208 = vld [vmem:[%s1194 + $0x68] sm:$0xff]
      %v1209 = vld [vmem:[%s1194 + $0x70] sm:$0xff]
      %v1210 = vld [vmem:[%s1194 + $0x78] sm:$0xff]
      %1211 = vrot.lane.b32.xlu0 %v250, 124
      %v1212 = vpop.permute.xlu0 %1211
      %1213 = vrot.lane.b32.xlu0 %v251, 124
      %v1214 = vpop.permute.xlu0 %1213
      %1215 = vrot.lane.b32.xlu0 %v252, 124
      %v1216 = vpop.permute.xlu0 %1215
      %1217 = vrot.lane.b32.xlu0 %v253, 124
      %v1218 = vpop.permute.xlu0 %1217
      %1219 = vrot.lane.b32.xlu0 %v254, 124
      %v1220 = vpop.permute.xlu0 %1219
      %1221 = vrot.lane.b32.xlu0 %v255, 124
      %v1222 = vpop.permute.xlu0 %1221
      %v1229 = vsel %vm312, %v1195, 0
      %v1232 = vsel %vm312, %v1196, 0
      %v1235 = vsel %vm312, %v1197, 0
      %v1238 = vsel %vm312, %v1198, 0
      %v1241 = vsel %vm312, %v1199, 0
      %v1244 = vsel %vm312, %v1200, 0
      %v1247 = vsel %vm312, %v1201, 0
      %v1250 = vsel %vm312, %v1202, 0
      %v1253 = vsel %vm312, %v1203, 0
      %v1256 = vsel %vm312, %v1204, 0
      %v1259 = vsel %vm312, %v1205, 0
      %v1262 = vsel %vm312, %v1206, 0
      %v1265 = vsel %vm312, %v1207, 0
      %v1268 = vsel %vm312, %v1208, 0
      %v1271 = vsel %vm312, %v1209, 0
      %v1274 = vsel %vm312, %v1210, 0
      %v1276 = vsel %vm361, %v1222, 0
      %1278 = vmatprep.subr.mxu0 0.0
      %1279 = vmatpush1.msra.mxu0 0.0
      %1280 = vmatprep.subr.mxu0 0.0
      %1281 = vmatpush1.msra.mxu0 0.0
      %1282 = vmatprep.subr.mxu0 0.0
      %1283 = vmatpush1.msra.mxu0 0.0
      %1284 = vmatprep.subr.mxu0 0.0
      %1285 = vmatpush1.msra.mxu0 0.0
      %1286 = vmatprep.subr.mxu0 0.0
      %1287 = vmatpush1.msra.mxu0 0.0
      %1288 = vmatprep.subr.mxu0 0.0
      %1289 = vmatpush1.msra.mxu0 0.0
      %1290 = vmatprep.subr.mxu0 0.0
      %1291 = vmatpush1.msra.mxu0 0.0
      %1292 = vmatprep.subr.mxu0 0.0
      %1293 = vmatpush1.msra.mxu0 0.0
      %1294 = vmatprep.subr.mxu0 0.0
      %1295 = vmatpush1.msra.mxu0 0.0
      %1296 = vmatprep.subr.mxu0 0.0
      %1297 = vmatpush1.msra.mxu0 0.0
      %1298 = vmatprep.subr.mxu0 0.0
      %1299 = vmatpush1.msra.mxu0 %v1276
      %1300 = vmatprep.subr.mxu0 0.0
      %1301 = vmatpush1.msra.mxu0 %v1220
      %1302 = vmatprep.subr.mxu0 0.0
      %1303 = vmatpush1.msra.mxu0 %v1218
      %1304 = vmatprep.subr.mxu0 0.0
      %1305 = vmatpush1.msra.mxu0 %v1216
      %1306 = vmatprep.subr.mxu0 0.0
      %1307 = vmatpush1.msra.mxu0 %v1214
      %1308 = vmatprep.subr.mxu0 0.0
      %1309 = vmatpush1.msra.mxu0 %v1212
      %1310 = vmatprep.subr.mxu0 0.0
      %1311 = vmatpush2.msra.mxu0 0.0
      %1312 = vmatprep.subr.mxu0 0.0
      %1313 = vmatpush2.msra.mxu0 0.0
      %1314 = vmatprep.subr.mxu0 0.0
      %1315 = vmatpush2.msra.mxu0 0.0
      %1316 = vmatprep.subr.mxu0 0.0
      %1317 = vmatpush2.msra.mxu0 0.0
      %1318 = vmatprep.subr.mxu0 0.0
      %1319 = vmatpush2.msra.mxu0 0.0
      %1320 = vmatprep.subr.mxu0 0.0
      %1321 = vmatpush2.msra.mxu0 0.0
      %1322 = vmatprep.subr.mxu0 0.0
      %1323 = vmatpush2.msra.mxu0 0.0
      %1324 = vmatprep.subr.mxu0 0.0
      %1325 = vmatpush2.msra.mxu0 0.0
      %1326 = vmatprep.subr.mxu0 0.0
      %1327 = vmatpush2.msra.mxu0 0.0
      %1328 = vmatprep.subr.mxu0 0.0
      %1329 = vmatpush2.msra.mxu0 0.0
      %1330 = vmatprep.subr.mxu0 0.0
      %1331 = vmatpush2.msra.mxu0 0.0
      %1332 = vmatprep.subr.mxu0 0.0
      %1333 = vmatpush2.msra.mxu0 0.0
      %1334 = vmatprep.subr.mxu0 0.0
      %1335 = vmatpush2.msra.mxu0 0.0
      %1336 = vmatprep.subr.mxu0 0.0
      %1337 = vmatpush2.msra.mxu0 0.0
      %1338 = vmatprep.subr.mxu0 0.0
      %1339 = vmatpush2.msra.mxu0 0.0
      %1340 = vmatprep.subr.mxu0 0.0
      %1341 = vmatpush2.msra.mxu0 0.0
      %1342 = vmatprep.mubr.f32.mxu0 0.0
      %1343 = vmatmul.mubr.f32.gmra.mxu0 %v1229
      %v1344 = vpop.f32.mrf.mxu0
      %v1345 = vadd.f32 0.0, %v1344
      %v1346 = vpop.f32.mrf.mxu0
      %1347 = vmatprep.mubr.f32.mxu0 0.0
      %1348 = vmatmul.mubr.f32.gmra.mxu0 %v1232
      %v1349 = vpop.f32.mrf.mxu0
      %v1350 = vadd.f32 0.0, %v1349
      %v1351 = vpop.f32.mrf.mxu0
      %1352 = vmatprep.mubr.f32.mxu0 0.0
      %1353 = vmatmul.mubr.f32.gmra.mxu0 %v1235
      %v1354 = vpop.f32.mrf.mxu0
      %v1355 = vadd.f32 0.0, %v1354
      %v1356 = vpop.f32.mrf.mxu0
      %1357 = vmatprep.mubr.f32.mxu0 0.0
      %1358 = vmatmul.mubr.f32.gmra.mxu0 %v1238
      %v1359 = vpop.f32.mrf.mxu0
      %v1360 = vadd.f32 0.0, %v1359
      %v1361 = vpop.f32.mrf.mxu0
      %1362 = vmatprep.mubr.f32.mxu0 0.0
      %1363 = vmatmul.mubr.f32.gmra.mxu0 %v1241
      %v1364 = vpop.f32.mrf.mxu0
      %v1365 = vadd.f32 0.0, %v1364
      %v1366 = vpop.f32.mrf.mxu0
      %1367 = vmatprep.mubr.f32.mxu0 0.0
      %1368 = vmatmul.mubr.f32.gmra.mxu0 %v1244
      %v1369 = vpop.f32.mrf.mxu0
      %v1370 = vadd.f32 0.0, %v1369
      %v1371 = vpop.f32.mrf.mxu0
      %1372 = vmatprep.mubr.f32.mxu0 0.0
      %1373 = vmatmul.mubr.f32.gmra.mxu0 %v1247
      %v1374 = vpop.f32.mrf.mxu0
      %v1375 = vadd.f32 0.0, %v1374
      %v1376 = vpop.f32.mrf.mxu0
      %1377 = vmatprep.mubr.f32.mxu0 0.0
      %1378 = vmatmul.mubr.f32.gmra.mxu0 %v1250
      %v1379 = vpop.f32.mrf.mxu0
      %v1380 = vadd.f32 0.0, %v1379
      %v1381 = vpop.f32.mrf.mxu0
      %1382 = vmatprep.mubr.f32.mxu0 0.0
      %1383 = vmatmul.mubr.f32.gmra.mxu0 %v1253
      %v1384 = vpop.f32.mrf.mxu0
      %v1385 = vadd.f32 0.0, %v1384
      %v1386 = vpop.f32.mrf.mxu0
      %1387 = vmatprep.mubr.f32.mxu0 0.0
      %1388 = vmatmul.mubr.f32.gmra.mxu0 %v1256
      %v1389 = vpop.f32.mrf.mxu0
      %v1390 = vadd.f32 0.0, %v1389
      %v1391 = vpop.f32.mrf.mxu0
      %1392 = vmatprep.mubr.f32.mxu0 0.0
      %1393 = vmatmul.mubr.f32.gmra.mxu0 %v1259
      %v1394 = vpop.f32.mrf.mxu0
      %v1395 = vadd.f32 0.0, %v1394
      %v1396 = vpop.f32.mrf.mxu0
      %1397 = vmatprep.mubr.f32.mxu0 0.0
      %1398 = vmatmul.mubr.f32.gmra.mxu0 %v1262
      %v1399 = vpop.f32.mrf.mxu0
      %v1400 = vadd.f32 0.0, %v1399
      %v1401 = vpop.f32.mrf.mxu0
      %1402 = vmatprep.mubr.f32.mxu0 0.0
      %1403 = vmatmul.mubr.f32.gmra.mxu0 %v1265
      %v1404 = vpop.f32.mrf.mxu0
      %v1405 = vadd.f32 0.0, %v1404
      %v1406 = vpop.f32.mrf.mxu0
      %1407 = vmatprep.mubr.f32.mxu0 0.0
      %1408 = vmatmul.mubr.f32.gmra.mxu0 %v1268
      %v1409 = vpop.f32.mrf.mxu0
      %v1410 = vadd.f32 0.0, %v1409
      %v1411 = vpop.f32.mrf.mxu0
      %1412 = vmatprep.mubr.f32.mxu0 0.0
      %1413 = vmatmul.mubr.f32.gmra.mxu0 %v1271
      %v1414 = vpop.f32.mrf.mxu0
      %v1415 = vadd.f32 0.0, %v1414
      %v1416 = vpop.f32.mrf.mxu0
      %1417 = vmatprep.mubr.f32.mxu0 0.0
      %1418 = vmatmul.mubr.f32.gmra.mxu0 %v1274
      %v1419 = vpop.f32.mrf.mxu0
      %v1420 = vadd.f32 0.0, %v1419
      %v1421 = vpop.f32.mrf.mxu0
      %1422 = vdwg.mxu0
      %v1423 = vadd.f32 %v1178, %v1345
      %v1424 = vadd.f32 %v1179, %v1350
      %v1425 = vadd.f32 %v1180, %v1355
      %v1426 = vadd.f32 %v1181, %v1360
      %v1427 = vadd.f32 %v1182, %v1365
      %v1428 = vadd.f32 %v1183, %v1370
      %v1429 = vadd.f32 %v1184, %v1375
      %v1430 = vadd.f32 %v1185, %v1380
      %v1431 = vadd.f32 %v1186, %v1385
      %v1432 = vadd.f32 %v1187, %v1390
      %v1433 = vadd.f32 %v1188, %v1395
      %v1434 = vadd.f32 %v1189, %v1400
      %v1435 = vadd.f32 %v1190, %v1405
      %v1436 = vadd.f32 %v1191, %v1410
      %v1437 = vadd.f32 %v1192, %v1415
      %v1438 = vadd.f32 %v1193, %v1420
      %s1439 = scalar_lea.vmem %s209, 48
      %v1440 = vld [vmem:[%s1439] sm:$0xff]
      %v1441 = vld [vmem:[%s1439 + $0x8] sm:$0xff]
      %v1442 = vld [vmem:[%s1439 + $0x10] sm:$0xff]
      %v1443 = vld [vmem:[%s1439 + $0x18] sm:$0xff]
      %v1444 = vld [vmem:[%s1439 + $0x20] sm:$0xff]
      %v1445 = vld [vmem:[%s1439 + $0x28] sm:$0x1]
      %s1446 = scalar_lea.vmem %s1, 128
      %v1447 = vld [vmem:[%s1446] sm:$0xff]
      %v1448 = vld [vmem:[%s1446 + $0x8] sm:$0xff]
      %v1449 = vld [vmem:[%s1446 + $0x10] sm:$0xff]
      %v1450 = vld [vmem:[%s1446 + $0x18] sm:$0xff]
      %v1451 = vld [vmem:[%s1446 + $0x20] sm:$0xff]
      %v1452 = vld [vmem:[%s1446 + $0x28] sm:$0xff]
      %v1453 = vld [vmem:[%s1446 + $0x30] sm:$0xff]
      %v1454 = vld [vmem:[%s1446 + $0x38] sm:$0xff]
      %v1455 = vld [vmem:[%s1446 + $0x40] sm:$0xff]
      %v1456 = vld [vmem:[%s1446 + $0x48] sm:$0xff]
      %v1457 = vld [vmem:[%s1446 + $0x50] sm:$0xff]
      %v1458 = vld [vmem:[%s1446 + $0x58] sm:$0xff]
      %v1459 = vld [vmem:[%s1446 + $0x60] sm:$0xff]
      %v1460 = vld [vmem:[%s1446 + $0x68] sm:$0xff]
      %v1461 = vld [vmem:[%s1446 + $0x70] sm:$0xff]
      %v1462 = vld [vmem:[%s1446 + $0x78] sm:$0xff]
      %v1464 = vsel %vm312, %v1447, 0
      %v1467 = vsel %vm312, %v1448, 0
      %v1470 = vsel %vm312, %v1449, 0
      %v1473 = vsel %vm312, %v1450, 0
      %v1476 = vsel %vm312, %v1451, 0
      %v1479 = vsel %vm312, %v1452, 0
      %v1482 = vsel %vm312, %v1453, 0
      %v1485 = vsel %vm312, %v1454, 0
      %v1488 = vsel %vm312, %v1455, 0
      %v1491 = vsel %vm312, %v1456, 0
      %v1494 = vsel %vm312, %v1457, 0
      %v1497 = vsel %vm312, %v1458, 0
      %v1500 = vsel %vm312, %v1459, 0
      %v1503 = vsel %vm312, %v1460, 0
      %v1506 = vsel %vm312, %v1461, 0
      %v1509 = vsel %vm312, %v1462, 0
      %v1512 = vsel %vm361, %v1445, 0
      %1514 = vmatprep.subr.mxu0 0.0
      %1515 = vmatpush1.msra.mxu0 0.0
      %1516 = vmatprep.subr.mxu0 0.0
      %1517 = vmatpush1.msra.mxu0 0.0
      %1518 = vmatprep.subr.mxu0 0.0
      %1519 = vmatpush1.msra.mxu0 0.0
      %1520 = vmatprep.subr.mxu0 0.0
      %1521 = vmatpush1.msra.mxu0 0.0
      %1522 = vmatprep.subr.mxu0 0.0
      %1523 = vmatpush1.msra.mxu0 0.0
      %1524 = vmatprep.subr.mxu0 0.0
      %1525 = vmatpush1.msra.mxu0 0.0
      %1526 = vmatprep.subr.mxu0 0.0
      %1527 = vmatpush1.msra.mxu0 0.0
      %1528 = vmatprep.subr.mxu0 0.0
      %1529 = vmatpush1.msra.mxu0 0.0
      %1530 = vmatprep.subr.mxu0 0.0
      %1531 = vmatpush1.msra.mxu0 0.0
      %1532 = vmatprep.subr.mxu0 0.0
      %1533 = vmatpush1.msra.mxu0 0.0
      %1534 = vmatprep.subr.mxu0 0.0
      %1535 = vmatpush1.msra.mxu0 %v1512
      %1536 = vmatprep.subr.mxu0 0.0
      %1537 = vmatpush1.msra.mxu0 %v1444
      %1538 = vmatprep.subr.mxu0 0.0
      %1539 = vmatpush1.msra.mxu0 %v1443
      %1540 = vmatprep.subr.mxu0 0.0
      %1541 = vmatpush1.msra.mxu0 %v1442
      %1542 = vmatprep.subr.mxu0 0.0
      %1543 = vmatpush1.msra.mxu0 %v1441
      %1544 = vmatprep.subr.mxu0 0.0
      %1545 = vmatpush1.msra.mxu0 %v1440
      %1546 = vmatprep.subr.mxu0 0.0
      %1547 = vmatpush2.msra.mxu0 0.0
      %1548 = vmatprep.subr.mxu0 0.0
      %1549 = vmatpush2.msra.mxu0 0.0
      %1550 = vmatprep.subr.mxu0 0.0
      %1551 = vmatpush2.msra.mxu0 0.0
      %1552 = vmatprep.subr.mxu0 0.0
      %1553 = vmatpush2.msra.mxu0 0.0
      %1554 = vmatprep.subr.mxu0 0.0
      %1555 = vmatpush2.msra.mxu0 0.0
      %1556 = vmatprep.subr.mxu0 0.0
      %1557 = vmatpush2.msra.mxu0 0.0
      %1558 = vmatprep.subr.mxu0 0.0
      %1559 = vmatpush2.msra.mxu0 0.0
      %1560 = vmatprep.subr.mxu0 0.0
      %1561 = vmatpush2.msra.mxu0 0.0
      %1562 = vmatprep.subr.mxu0 0.0
      %1563 = vmatpush2.msra.mxu0 0.0
      %1564 = vmatprep.subr.mxu0 0.0
      %1565 = vmatpush2.msra.mxu0 0.0
      %1566 = vmatprep.subr.mxu0 0.0
      %1567 = vmatpush2.msra.mxu0 0.0
      %1568 = vmatprep.subr.mxu0 0.0
      %1569 = vmatpush2.msra.mxu0 0.0
      %1570 = vmatprep.subr.mxu0 0.0
      %1571 = vmatpush2.msra.mxu0 0.0
      %1572 = vmatprep.subr.mxu0 0.0
      %1573 = vmatpush2.msra.mxu0 0.0
      %1574 = vmatprep.subr.mxu0 0.0
      %1575 = vmatpush2.msra.mxu0 0.0
      %1576 = vmatprep.subr.mxu0 0.0
      %1577 = vmatpush2.msra.mxu0 0.0
      %1578 = vmatprep.mubr.f32.mxu0 0.0
      %1579 = vmatmul.mubr.f32.gmra.mxu0 %v1464
      %v1580 = vpop.f32.mrf.mxu0
      %v1581 = vadd.f32 0.0, %v1580
      %v1582 = vpop.f32.mrf.mxu0
      %1583 = vmatprep.mubr.f32.mxu0 0.0
      %1584 = vmatmul.mubr.f32.gmra.mxu0 %v1467
      %v1585 = vpop.f32.mrf.mxu0
      %v1586 = vadd.f32 0.0, %v1585
      %v1587 = vpop.f32.mrf.mxu0
      %1588 = vmatprep.mubr.f32.mxu0 0.0
      %1589 = vmatmul.mubr.f32.gmra.mxu0 %v1470
      %v1590 = vpop.f32.mrf.mxu0
      %v1591 = vadd.f32 0.0, %v1590
      %v1592 = vpop.f32.mrf.mxu0
      %1593 = vmatprep.mubr.f32.mxu0 0.0
      %1594 = vmatmul.mubr.f32.gmra.mxu0 %v1473
      %v1595 = vpop.f32.mrf.mxu0
      %v1596 = vadd.f32 0.0, %v1595
      %v1597 = vpop.f32.mrf.mxu0
      %1598 = vmatprep.mubr.f32.mxu0 0.0
      %1599 = vmatmul.mubr.f32.gmra.mxu0 %v1476
      %v1600 = vpop.f32.mrf.mxu0
      %v1601 = vadd.f32 0.0, %v1600
      %v1602 = vpop.f32.mrf.mxu0
      %1603 = vmatprep.mubr.f32.mxu0 0.0
      %1604 = vmatmul.mubr.f32.gmra.mxu0 %v1479
      %v1605 = vpop.f32.mrf.mxu0
      %v1606 = vadd.f32 0.0, %v1605
      %v1607 = vpop.f32.mrf.mxu0
      %1608 = vmatprep.mubr.f32.mxu0 0.0
      %1609 = vmatmul.mubr.f32.gmra.mxu0 %v1482
      %v1610 = vpop.f32.mrf.mxu0
      %v1611 = vadd.f32 0.0, %v1610
      %v1612 = vpop.f32.mrf.mxu0
      %1613 = vmatprep.mubr.f32.mxu0 0.0
      %1614 = vmatmul.mubr.f32.gmra.mxu0 %v1485
      %v1615 = vpop.f32.mrf.mxu0
      %v1616 = vadd.f32 0.0, %v1615
      %v1617 = vpop.f32.mrf.mxu0
      %1618 = vmatprep.mubr.f32.mxu0 0.0
      %1619 = vmatmul.mubr.f32.gmra.mxu0 %v1488
      %v1620 = vpop.f32.mrf.mxu0
      %v1621 = vadd.f32 0.0, %v1620
      %v1622 = vpop.f32.mrf.mxu0
      %1623 = vmatprep.mubr.f32.mxu0 0.0
      %1624 = vmatmul.mubr.f32.gmra.mxu0 %v1491
      %v1625 = vpop.f32.mrf.mxu0
      %v1626 = vadd.f32 0.0, %v1625
      %v1627 = vpop.f32.mrf.mxu0
      %1628 = vmatprep.mubr.f32.mxu0 0.0
      %1629 = vmatmul.mubr.f32.gmra.mxu0 %v1494
      %v1630 = vpop.f32.mrf.mxu0
      %v1631 = vadd.f32 0.0, %v1630
      %v1632 = vpop.f32.mrf.mxu0
      %1633 = vmatprep.mubr.f32.mxu0 0.0
      %1634 = vmatmul.mubr.f32.gmra.mxu0 %v1497
      %v1635 = vpop.f32.mrf.mxu0
      %v1636 = vadd.f32 0.0, %v1635
      %v1637 = vpop.f32.mrf.mxu0
      %1638 = vmatprep.mubr.f32.mxu0 0.0
      %1639 = vmatmul.mubr.f32.gmra.mxu0 %v1500
      %v1640 = vpop.f32.mrf.mxu0
      %v1641 = vadd.f32 0.0, %v1640
      %v1642 = vpop.f32.mrf.mxu0
      %1643 = vmatprep.mubr.f32.mxu0 0.0
      %1644 = vmatmul.mubr.f32.gmra.mxu0 %v1503
      %v1645 = vpop.f32.mrf.mxu0
      %v1646 = vadd.f32 0.0, %v1645
      %v1647 = vpop.f32.mrf.mxu0
      %1648 = vmatprep.mubr.f32.mxu0 0.0
      %1649 = vmatmul.mubr.f32.gmra.mxu0 %v1506
      %v1650 = vpop.f32.mrf.mxu0
      %v1651 = vadd.f32 0.0, %v1650
      %v1652 = vpop.f32.mrf.mxu0
      %1653 = vmatprep.mubr.f32.mxu0 0.0
      %1654 = vmatmul.mubr.f32.gmra.mxu0 %v1509
      %v1655 = vpop.f32.mrf.mxu0
      %v1656 = vadd.f32 0.0, %v1655
      %v1657 = vpop.f32.mrf.mxu0
      %1658 = vdwg.mxu0
      %v1659 = vadd.f32 %v1423, %v1581
      %v1660 = vadd.f32 %v1424, %v1586
      %v1661 = vadd.f32 %v1425, %v1591
      %v1662 = vadd.f32 %v1426, %v1596
      %v1663 = vadd.f32 %v1427, %v1601
      %v1664 = vadd.f32 %v1428, %v1606
      %v1665 = vadd.f32 %v1429, %v1611
      %v1666 = vadd.f32 %v1430, %v1616
      %v1667 = vadd.f32 %v1431, %v1621
      %v1668 = vadd.f32 %v1432, %v1626
      %v1669 = vadd.f32 %v1433, %v1631
      %v1670 = vadd.f32 %v1434, %v1636
      %v1671 = vadd.f32 %v1435, %v1641
      %v1672 = vadd.f32 %v1436, %v1646
      %v1673 = vadd.f32 %v1437, %v1651
      %v1674 = vadd.f32 %v1438, %v1656
      %s1675 = scalar_lea.vmem %s1, 384
      %v1676 = vld [vmem:[%s1675] sm:$0xff]
      %v1677 = vld [vmem:[%s1675 + $0x8] sm:$0xff]
      %v1678 = vld [vmem:[%s1675 + $0x10] sm:$0xff]
      %v1679 = vld [vmem:[%s1675 + $0x18] sm:$0xff]
      %v1680 = vld [vmem:[%s1675 + $0x20] sm:$0xff]
      %v1681 = vld [vmem:[%s1675 + $0x28] sm:$0xff]
      %v1682 = vld [vmem:[%s1675 + $0x30] sm:$0xff]
      %v1683 = vld [vmem:[%s1675 + $0x38] sm:$0xff]
      %v1684 = vld [vmem:[%s1675 + $0x40] sm:$0xff]
      %v1685 = vld [vmem:[%s1675 + $0x48] sm:$0xff]
      %v1686 = vld [vmem:[%s1675 + $0x50] sm:$0xff]
      %v1687 = vld [vmem:[%s1675 + $0x58] sm:$0xff]
      %v1688 = vld [vmem:[%s1675 + $0x60] sm:$0xff]
      %v1689 = vld [vmem:[%s1675 + $0x68] sm:$0xff]
      %v1690 = vld [vmem:[%s1675 + $0x70] sm:$0xff]
      %v1691 = vld [vmem:[%s1675 + $0x78] sm:$0xff]
      %1697 = vrot.lane.b32.xlu0 %v1440, 127
      %v1698 = vpop.permute.xlu0 %1697
      %1699 = vrot.lane.b32.xlu0 %v1441, 127
      %v1700 = vpop.permute.xlu0 %1699
      %1701 = vrot.lane.b32.xlu0 %v1442, 127
      %v1702 = vpop.permute.xlu0 %1701
      %1703 = vrot.lane.b32.xlu0 %v1443, 127
      %v1704 = vpop.permute.xlu0 %1703
      %1705 = vrot.lane.b32.xlu0 %v1444, 127
      %v1706 = vpop.permute.xlu0 %1705
      %1707 = vrot.lane.b32.xlu0 %v1445, 127
      %v1708 = vpop.permute.xlu0 %1707
      %v1715 = vsel %vm312, %v1676, 0
      %v1718 = vsel %vm312, %v1677, 0
      %v1721 = vsel %vm312, %v1678, 0
      %v1724 = vsel %vm312, %v1679, 0
      %v1727 = vsel %vm312, %v1680, 0
      %v1730 = vsel %vm312, %v1681, 0
      %v1733 = vsel %vm312, %v1682, 0
      %v1736 = vsel %vm312, %v1683, 0
      %v1739 = vsel %vm312, %v1684, 0
      %v1742 = vsel %vm312, %v1685, 0
      %v1745 = vsel %vm312, %v1686, 0
      %v1748 = vsel %vm312, %v1687, 0
      %v1751 = vsel %vm312, %v1688, 0
      %v1754 = vsel %vm312, %v1689, 0
      %v1757 = vsel %vm312, %v1690, 0
      %v1760 = vsel %vm312, %v1691, 0
      %v1762 = vsel %vm361, %v1708, 0
      %1764 = vmatprep.subr.mxu0 0.0
      %1765 = vmatpush1.msra.mxu0 0.0
      %1766 = vmatprep.subr.mxu0 0.0
      %1767 = vmatpush1.msra.mxu0 0.0
      %1768 = vmatprep.subr.mxu0 0.0
      %1769 = vmatpush1.msra.mxu0 0.0
      %1770 = vmatprep.subr.mxu0 0.0
      %1771 = vmatpush1.msra.mxu0 0.0
      %1772 = vmatprep.subr.mxu0 0.0
      %1773 = vmatpush1.msra.mxu0 0.0
      %1774 = vmatprep.subr.mxu0 0.0
      %1775 = vmatpush1.msra.mxu0 0.0
      %1776 = vmatprep.subr.mxu0 0.0
      %1777 = vmatpush1.msra.mxu0 0.0
      %1778 = vmatprep.subr.mxu0 0.0
      %1779 = vmatpush1.msra.mxu0 0.0
      %1780 = vmatprep.subr.mxu0 0.0
      %1781 = vmatpush1.msra.mxu0 0.0
      %1782 = vmatprep.subr.mxu0 0.0
      %1783 = vmatpush1.msra.mxu0 0.0
      %1784 = vmatprep.subr.mxu0 0.0
      %1785 = vmatpush1.msra.mxu0 %v1762
      %1786 = vmatprep.subr.mxu0 0.0
      %1787 = vmatpush1.msra.mxu0 %v1706
      %1788 = vmatprep.subr.mxu0 0.0
      %1789 = vmatpush1.msra.mxu0 %v1704
      %1790 = vmatprep.subr.mxu0 0.0
      %1791 = vmatpush1.msra.mxu0 %v1702
      %1792 = vmatprep.subr.mxu0 0.0
      %1793 = vmatpush1.msra.mxu0 %v1700
      %1794 = vmatprep.subr.mxu0 0.0
      %1795 = vmatpush1.msra.mxu0 %v1698
      %1796 = vmatprep.subr.mxu0 0.0
      %1797 = vmatpush2.msra.mxu0 0.0
      %1798 = vmatprep.subr.mxu0 0.0
      %1799 = vmatpush2.msra.mxu0 0.0
      %1800 = vmatprep.subr.mxu0 0.0
      %1801 = vmatpush2.msra.mxu0 0.0
      %1802 = vmatprep.subr.mxu0 0.0
      %1803 = vmatpush2.msra.mxu0 0.0
      %1804 = vmatprep.subr.mxu0 0.0
      %1805 = vmatpush2.msra.mxu0 0.0
      %1806 = vmatprep.subr.mxu0 0.0
      %1807 = vmatpush2.msra.mxu0 0.0
      %1808 = vmatprep.subr.mxu0 0.0
      %1809 = vmatpush2.msra.mxu0 0.0
      %1810 = vmatprep.subr.mxu0 0.0
      %1811 = vmatpush2.msra.mxu0 0.0
      %1812 = vmatprep.subr.mxu0 0.0
      %1813 = vmatpush2.msra.mxu0 0.0
      %1814 = vmatprep.subr.mxu0 0.0
      %1815 = vmatpush2.msra.mxu0 0.0
      %1816 = vmatprep.subr.mxu0 0.0
      %1817 = vmatpush2.msra.mxu0 0.0
      %1818 = vmatprep.subr.mxu0 0.0
      %1819 = vmatpush2.msra.mxu0 0.0
      %1820 = vmatprep.subr.mxu0 0.0
      %1821 = vmatpush2.msra.mxu0 0.0
      %1822 = vmatprep.subr.mxu0 0.0
      %1823 = vmatpush2.msra.mxu0 0.0
      %1824 = vmatprep.subr.mxu0 0.0
      %1825 = vmatpush2.msra.mxu0 0.0
      %1826 = vmatprep.subr.mxu0 0.0
      %1827 = vmatpush2.msra.mxu0 0.0
      %1828 = vmatprep.mubr.f32.mxu0 0.0
      %1829 = vmatmul.mubr.f32.gmra.mxu0 %v1715
      %v1830 = vpop.f32.mrf.mxu0
      %v1831 = vadd.f32 0.0, %v1830
      %v1832 = vpop.f32.mrf.mxu0
      %1833 = vmatprep.mubr.f32.mxu0 0.0
      %1834 = vmatmul.mubr.f32.gmra.mxu0 %v1718
      %v1835 = vpop.f32.mrf.mxu0
      %v1836 = vadd.f32 0.0, %v1835
      %v1837 = vpop.f32.mrf.mxu0
      %1838 = vmatprep.mubr.f32.mxu0 0.0
      %1839 = vmatmul.mubr.f32.gmra.mxu0 %v1721
      %v1840 = vpop.f32.mrf.mxu0
      %v1841 = vadd.f32 0.0, %v1840
      %v1842 = vpop.f32.mrf.mxu0
      %1843 = vmatprep.mubr.f32.mxu0 0.0
      %1844 = vmatmul.mubr.f32.gmra.mxu0 %v1724
      %v1845 = vpop.f32.mrf.mxu0
      %v1846 = vadd.f32 0.0, %v1845
      %v1847 = vpop.f32.mrf.mxu0
      %1848 = vmatprep.mubr.f32.mxu0 0.0
      %1849 = vmatmul.mubr.f32.gmra.mxu0 %v1727
      %v1850 = vpop.f32.mrf.mxu0
      %v1851 = vadd.f32 0.0, %v1850
      %v1852 = vpop.f32.mrf.mxu0
      %1853 = vmatprep.mubr.f32.mxu0 0.0
      %1854 = vmatmul.mubr.f32.gmra.mxu0 %v1730
      %v1855 = vpop.f32.mrf.mxu0
      %v1856 = vadd.f32 0.0, %v1855
      %v1857 = vpop.f32.mrf.mxu0
      %1858 = vmatprep.mubr.f32.mxu0 0.0
      %1859 = vmatmul.mubr.f32.gmra.mxu0 %v1733
      %v1860 = vpop.f32.mrf.mxu0
      %v1861 = vadd.f32 0.0, %v1860
      %v1862 = vpop.f32.mrf.mxu0
      %1863 = vmatprep.mubr.f32.mxu0 0.0
      %1864 = vmatmul.mubr.f32.gmra.mxu0 %v1736
      %v1865 = vpop.f32.mrf.mxu0
      %v1866 = vadd.f32 0.0, %v1865
      %v1867 = vpop.f32.mrf.mxu0
      %1868 = vmatprep.mubr.f32.mxu0 0.0
      %1869 = vmatmul.mubr.f32.gmra.mxu0 %v1739
      %v1870 = vpop.f32.mrf.mxu0
      %v1871 = vadd.f32 0.0, %v1870
      %v1872 = vpop.f32.mrf.mxu0
      %1873 = vmatprep.mubr.f32.mxu0 0.0
      %1874 = vmatmul.mubr.f32.gmra.mxu0 %v1742
      %v1875 = vpop.f32.mrf.mxu0
      %v1876 = vadd.f32 0.0, %v1875
      %v1877 = vpop.f32.mrf.mxu0
      %1878 = vmatprep.mubr.f32.mxu0 0.0
      %1879 = vmatmul.mubr.f32.gmra.mxu0 %v1745
      %v1880 = vpop.f32.mrf.mxu0
      %v1881 = vadd.f32 0.0, %v1880
      %v1882 = vpop.f32.mrf.mxu0
      %1883 = vmatprep.mubr.f32.mxu0 0.0
      %1884 = vmatmul.mubr.f32.gmra.mxu0 %v1748
      %v1885 = vpop.f32.mrf.mxu0
      %v1886 = vadd.f32 0.0, %v1885
      %v1887 = vpop.f32.mrf.mxu0
      %1888 = vmatprep.mubr.f32.mxu0 0.0
      %1889 = vmatmul.mubr.f32.gmra.mxu0 %v1751
      %v1890 = vpop.f32.mrf.mxu0
      %v1891 = vadd.f32 0.0, %v1890
      %v1892 = vpop.f32.mrf.mxu0
      %1893 = vmatprep.mubr.f32.mxu0 0.0
      %1894 = vmatmul.mubr.f32.gmra.mxu0 %v1754
      %v1895 = vpop.f32.mrf.mxu0
      %v1896 = vadd.f32 0.0, %v1895
      %v1897 = vpop.f32.mrf.mxu0
      %1898 = vmatprep.mubr.f32.mxu0 0.0
      %1899 = vmatmul.mubr.f32.gmra.mxu0 %v1757
      %v1900 = vpop.f32.mrf.mxu0
      %v1901 = vadd.f32 0.0, %v1900
      %v1902 = vpop.f32.mrf.mxu0
      %1903 = vmatprep.mubr.f32.mxu0 0.0
      %1904 = vmatmul.mubr.f32.gmra.mxu0 %v1760
      %v1905 = vpop.f32.mrf.mxu0
      %v1906 = vadd.f32 0.0, %v1905
      %v1907 = vpop.f32.mrf.mxu0
      %1908 = vdwg.mxu0
      %v1909 = vadd.f32 %v1659, %v1831
      %v1910 = vadd.f32 %v1660, %v1836
      %v1911 = vadd.f32 %v1661, %v1841
      %v1912 = vadd.f32 %v1662, %v1846
      %v1913 = vadd.f32 %v1663, %v1851
      %v1914 = vadd.f32 %v1664, %v1856
      %v1915 = vadd.f32 %v1665, %v1861
      %v1916 = vadd.f32 %v1666, %v1866
      %v1917 = vadd.f32 %v1667, %v1871
      %v1918 = vadd.f32 %v1668, %v1876
      %v1919 = vadd.f32 %v1669, %v1881
      %v1920 = vadd.f32 %v1670, %v1886
      %v1921 = vadd.f32 %v1671, %v1891
      %v1922 = vadd.f32 %v1672, %v1896
      %v1923 = vadd.f32 %v1673, %v1901
      %v1924 = vadd.f32 %v1674, %v1906
      %s1925 = scalar_lea.vmem %s1, 640
      %v1926 = vld [vmem:[%s1925] sm:$0xff]
      %v1927 = vld [vmem:[%s1925 + $0x8] sm:$0xff]
      %v1928 = vld [vmem:[%s1925 + $0x10] sm:$0xff]
      %v1929 = vld [vmem:[%s1925 + $0x18] sm:$0xff]
      %v1930 = vld [vmem:[%s1925 + $0x20] sm:$0xff]
      %v1931 = vld [vmem:[%s1925 + $0x28] sm:$0xff]
      %v1932 = vld [vmem:[%s1925 + $0x30] sm:$0xff]
      %v1933 = vld [vmem:[%s1925 + $0x38] sm:$0xff]
      %v1934 = vld [vmem:[%s1925 + $0x40] sm:$0xff]
      %v1935 = vld [vmem:[%s1925 + $0x48] sm:$0xff]
      %v1936 = vld [vmem:[%s1925 + $0x50] sm:$0xff]
      %v1937 = vld [vmem:[%s1925 + $0x58] sm:$0xff]
      %v1938 = vld [vmem:[%s1925 + $0x60] sm:$0xff]
      %v1939 = vld [vmem:[%s1925 + $0x68] sm:$0xff]
      %v1940 = vld [vmem:[%s1925 + $0x70] sm:$0xff]
      %v1941 = vld [vmem:[%s1925 + $0x78] sm:$0xff]
      %1942 = vrot.lane.b32.xlu0 %v1440, 126
      %v1943 = vpop.permute.xlu0 %1942
      %1944 = vrot.lane.b32.xlu0 %v1441, 126
      %v1945 = vpop.permute.xlu0 %1944
      %1946 = vrot.lane.b32.xlu0 %v1442, 126
      %v1947 = vpop.permute.xlu0 %1946
      %1948 = vrot.lane.b32.xlu0 %v1443, 126
      %v1949 = vpop.permute.xlu0 %1948
      %1950 = vrot.lane.b32.xlu0 %v1444, 126
      %v1951 = vpop.permute.xlu0 %1950
      %1952 = vrot.lane.b32.xlu0 %v1445, 126
      %v1953 = vpop.permute.xlu0 %1952
      %v1960 = vsel %vm312, %v1926, 0
      %v1963 = vsel %vm312, %v1927, 0
      %v1966 = vsel %vm312, %v1928, 0
      %v1969 = vsel %vm312, %v1929, 0
      %v1972 = vsel %vm312, %v1930, 0
      %v1975 = vsel %vm312, %v1931, 0
      %v1978 = vsel %vm312, %v1932, 0
      %v1981 = vsel %vm312, %v1933, 0
      %v1984 = vsel %vm312, %v1934, 0
      %v1987 = vsel %vm312, %v1935, 0
      %v1990 = vsel %vm312, %v1936, 0
      %v1993 = vsel %vm312, %v1937, 0
      %v1996 = vsel %vm312, %v1938, 0
      %v1999 = vsel %vm312, %v1939, 0
      %v2002 = vsel %vm312, %v1940, 0
      %v2005 = vsel %vm312, %v1941, 0
      %v2007 = vsel %vm361, %v1953, 0
      %2009 = vmatprep.subr.mxu0 0.0
      %2010 = vmatpush1.msra.mxu0 0.0
      %2011 = vmatprep.subr.mxu0 0.0
      %2012 = vmatpush1.msra.mxu0 0.0
      %2013 = vmatprep.subr.mxu0 0.0
      %2014 = vmatpush1.msra.mxu0 0.0
      %2015 = vmatprep.subr.mxu0 0.0
      %2016 = vmatpush1.msra.mxu0 0.0
      %2017 = vmatprep.subr.mxu0 0.0
      %2018 = vmatpush1.msra.mxu0 0.0
      %2019 = vmatprep.subr.mxu0 0.0
      %2020 = vmatpush1.msra.mxu0 0.0
      %2021 = vmatprep.subr.mxu0 0.0
      %2022 = vmatpush1.msra.mxu0 0.0
      %2023 = vmatprep.subr.mxu0 0.0
      %2024 = vmatpush1.msra.mxu0 0.0
      %2025 = vmatprep.subr.mxu0 0.0
      %2026 = vmatpush1.msra.mxu0 0.0
      %2027 = vmatprep.subr.mxu0 0.0
      %2028 = vmatpush1.msra.mxu0 0.0
      %2029 = vmatprep.subr.mxu0 0.0
      %2030 = vmatpush1.msra.mxu0 %v2007
      %2031 = vmatprep.subr.mxu0 0.0
      %2032 = vmatpush1.msra.mxu0 %v1951
      %2033 = vmatprep.subr.mxu0 0.0
      %2034 = vmatpush1.msra.mxu0 %v1949
      %2035 = vmatprep.subr.mxu0 0.0
      %2036 = vmatpush1.msra.mxu0 %v1947
      %2037 = vmatprep.subr.mxu0 0.0
      %2038 = vmatpush1.msra.mxu0 %v1945
      %2039 = vmatprep.subr.mxu0 0.0
      %2040 = vmatpush1.msra.mxu0 %v1943
      %2041 = vmatprep.subr.mxu0 0.0
      %2042 = vmatpush2.msra.mxu0 0.0
      %2043 = vmatprep.subr.mxu0 0.0
      %2044 = vmatpush2.msra.mxu0 0.0
      %2045 = vmatprep.subr.mxu0 0.0
      %2046 = vmatpush2.msra.mxu0 0.0
      %2047 = vmatprep.subr.mxu0 0.0
      %2048 = vmatpush2.msra.mxu0 0.0
      %2049 = vmatprep.subr.mxu0 0.0
      %2050 = vmatpush2.msra.mxu0 0.0
      %2051 = vmatprep.subr.mxu0 0.0
      %2052 = vmatpush2.msra.mxu0 0.0
      %2053 = vmatprep.subr.mxu0 0.0
      %2054 = vmatpush2.msra.mxu0 0.0
      %2055 = vmatprep.subr.mxu0 0.0
      %2056 = vmatpush2.msra.mxu0 0.0
      %2057 = vmatprep.subr.mxu0 0.0
      %2058 = vmatpush2.msra.mxu0 0.0
      %2059 = vmatprep.subr.mxu0 0.0
      %2060 = vmatpush2.msra.mxu0 0.0
      %2061 = vmatprep.subr.mxu0 0.0
      %2062 = vmatpush2.msra.mxu0 0.0
      %2063 = vmatprep.subr.mxu0 0.0
      %2064 = vmatpush2.msra.mxu0 0.0
      %2065 = vmatprep.subr.mxu0 0.0
      %2066 = vmatpush2.msra.mxu0 0.0
      %2067 = vmatprep.subr.mxu0 0.0
      %2068 = vmatpush2.msra.mxu0 0.0
      %2069 = vmatprep.subr.mxu0 0.0
      %2070 = vmatpush2.msra.mxu0 0.0
      %2071 = vmatprep.subr.mxu0 0.0
      %2072 = vmatpush2.msra.mxu0 0.0
      %2073 = vmatprep.mubr.f32.mxu0 0.0
      %2074 = vmatmul.mubr.f32.gmra.mxu0 %v1960
      %v2075 = vpop.f32.mrf.mxu0
      %v2076 = vadd.f32 0.0, %v2075
      %v2077 = vpop.f32.mrf.mxu0
      %2078 = vmatprep.mubr.f32.mxu0 0.0
      %2079 = vmatmul.mubr.f32.gmra.mxu0 %v1963
      %v2080 = vpop.f32.mrf.mxu0
      %v2081 = vadd.f32 0.0, %v2080
      %v2082 = vpop.f32.mrf.mxu0
      %2083 = vmatprep.mubr.f32.mxu0 0.0
      %2084 = vmatmul.mubr.f32.gmra.mxu0 %v1966
      %v2085 = vpop.f32.mrf.mxu0
      %v2086 = vadd.f32 0.0, %v2085
      %v2087 = vpop.f32.mrf.mxu0
      %2088 = vmatprep.mubr.f32.mxu0 0.0
      %2089 = vmatmul.mubr.f32.gmra.mxu0 %v1969
      %v2090 = vpop.f32.mrf.mxu0
      %v2091 = vadd.f32 0.0, %v2090
      %v2092 = vpop.f32.mrf.mxu0
      %2093 = vmatprep.mubr.f32.mxu0 0.0
      %2094 = vmatmul.mubr.f32.gmra.mxu0 %v1972
      %v2095 = vpop.f32.mrf.mxu0
      %v2096 = vadd.f32 0.0, %v2095
      %v2097 = vpop.f32.mrf.mxu0
      %2098 = vmatprep.mubr.f32.mxu0 0.0
      %2099 = vmatmul.mubr.f32.gmra.mxu0 %v1975
      %v2100 = vpop.f32.mrf.mxu0
      %v2101 = vadd.f32 0.0, %v2100
      %v2102 = vpop.f32.mrf.mxu0
      %2103 = vmatprep.mubr.f32.mxu0 0.0
      %2104 = vmatmul.mubr.f32.gmra.mxu0 %v1978
      %v2105 = vpop.f32.mrf.mxu0
      %v2106 = vadd.f32 0.0, %v2105
      %v2107 = vpop.f32.mrf.mxu0
      %2108 = vmatprep.mubr.f32.mxu0 0.0
      %2109 = vmatmul.mubr.f32.gmra.mxu0 %v1981
      %v2110 = vpop.f32.mrf.mxu0
      %v2111 = vadd.f32 0.0, %v2110
      %v2112 = vpop.f32.mrf.mxu0
      %2113 = vmatprep.mubr.f32.mxu0 0.0
      %2114 = vmatmul.mubr.f32.gmra.mxu0 %v1984
      %v2115 = vpop.f32.mrf.mxu0
      %v2116 = vadd.f32 0.0, %v2115
      %v2117 = vpop.f32.mrf.mxu0
      %2118 = vmatprep.mubr.f32.mxu0 0.0
      %2119 = vmatmul.mubr.f32.gmra.mxu0 %v1987
      %v2120 = vpop.f32.mrf.mxu0
      %v2121 = vadd.f32 0.0, %v2120
      %v2122 = vpop.f32.mrf.mxu0
      %2123 = vmatprep.mubr.f32.mxu0 0.0
      %2124 = vmatmul.mubr.f32.gmra.mxu0 %v1990
      %v2125 = vpop.f32.mrf.mxu0
      %v2126 = vadd.f32 0.0, %v2125
      %v2127 = vpop.f32.mrf.mxu0
      %2128 = vmatprep.mubr.f32.mxu0 0.0
      %2129 = vmatmul.mubr.f32.gmra.mxu0 %v1993
      %v2130 = vpop.f32.mrf.mxu0
      %v2131 = vadd.f32 0.0, %v2130
      %v2132 = vpop.f32.mrf.mxu0
      %2133 = vmatprep.mubr.f32.mxu0 0.0
      %2134 = vmatmul.mubr.f32.gmra.mxu0 %v1996
      %v2135 = vpop.f32.mrf.mxu0
      %v2136 = vadd.f32 0.0, %v2135
      %v2137 = vpop.f32.mrf.mxu0
      %2138 = vmatprep.mubr.f32.mxu0 0.0
      %2139 = vmatmul.mubr.f32.gmra.mxu0 %v1999
      %v2140 = vpop.f32.mrf.mxu0
      %v2141 = vadd.f32 0.0, %v2140
      %v2142 = vpop.f32.mrf.mxu0
      %2143 = vmatprep.mubr.f32.mxu0 0.0
      %2144 = vmatmul.mubr.f32.gmra.mxu0 %v2002
      %v2145 = vpop.f32.mrf.mxu0
      %v2146 = vadd.f32 0.0, %v2145
      %v2147 = vpop.f32.mrf.mxu0
      %2148 = vmatprep.mubr.f32.mxu0 0.0
      %2149 = vmatmul.mubr.f32.gmra.mxu0 %v2005
      %v2150 = vpop.f32.mrf.mxu0
      %v2151 = vadd.f32 0.0, %v2150
      %v2152 = vpop.f32.mrf.mxu0
      %2153 = vdwg.mxu0
      %v2154 = vadd.f32 %v1909, %v2076
      %v2155 = vadd.f32 %v1910, %v2081
      %v2156 = vadd.f32 %v1911, %v2086
      %v2157 = vadd.f32 %v1912, %v2091
      %v2158 = vadd.f32 %v1913, %v2096
      %v2159 = vadd.f32 %v1914, %v2101
      %v2160 = vadd.f32 %v1915, %v2106
      %v2161 = vadd.f32 %v1916, %v2111
      %v2162 = vadd.f32 %v1917, %v2116
      %v2163 = vadd.f32 %v1918, %v2121
      %v2164 = vadd.f32 %v1919, %v2126
      %v2165 = vadd.f32 %v1920, %v2131
      %v2166 = vadd.f32 %v1921, %v2136
      %v2167 = vadd.f32 %v1922, %v2141
      %v2168 = vadd.f32 %v1923, %v2146
      %v2169 = vadd.f32 %v1924, %v2151
      %s2170 = scalar_lea.vmem %s1, 896
      %v2171 = vld [vmem:[%s2170] sm:$0xff]
      %v2172 = vld [vmem:[%s2170 + $0x8] sm:$0xff]
      %v2173 = vld [vmem:[%s2170 + $0x10] sm:$0xff]
      %v2174 = vld [vmem:[%s2170 + $0x18] sm:$0xff]
      %v2175 = vld [vmem:[%s2170 + $0x20] sm:$0xff]
      %v2176 = vld [vmem:[%s2170 + $0x28] sm:$0xff]
      %v2177 = vld [vmem:[%s2170 + $0x30] sm:$0xff]
      %v2178 = vld [vmem:[%s2170 + $0x38] sm:$0xff]
      %v2179 = vld [vmem:[%s2170 + $0x40] sm:$0xff]
      %v2180 = vld [vmem:[%s2170 + $0x48] sm:$0xff]
      %v2181 = vld [vmem:[%s2170 + $0x50] sm:$0xff]
      %v2182 = vld [vmem:[%s2170 + $0x58] sm:$0xff]
      %v2183 = vld [vmem:[%s2170 + $0x60] sm:$0xff]
      %v2184 = vld [vmem:[%s2170 + $0x68] sm:$0xff]
      %v2185 = vld [vmem:[%s2170 + $0x70] sm:$0xff]
      %v2186 = vld [vmem:[%s2170 + $0x78] sm:$0xff]
      %2187 = vrot.lane.b32.xlu0 %v1440, 125
      %v2188 = vpop.permute.xlu0 %2187
      %2189 = vrot.lane.b32.xlu0 %v1441, 125
      %v2190 = vpop.permute.xlu0 %2189
      %2191 = vrot.lane.b32.xlu0 %v1442, 125
      %v2192 = vpop.permute.xlu0 %2191
      %2193 = vrot.lane.b32.xlu0 %v1443, 125
      %v2194 = vpop.permute.xlu0 %2193
      %2195 = vrot.lane.b32.xlu0 %v1444, 125
      %v2196 = vpop.permute.xlu0 %2195
      %2197 = vrot.lane.b32.xlu0 %v1445, 125
      %v2198 = vpop.permute.xlu0 %2197
      %v2205 = vsel %vm312, %v2171, 0
      %v2208 = vsel %vm312, %v2172, 0
      %v2211 = vsel %vm312, %v2173, 0
      %v2214 = vsel %vm312, %v2174, 0
      %v2217 = vsel %vm312, %v2175, 0
      %v2220 = vsel %vm312, %v2176, 0
      %v2223 = vsel %vm312, %v2177, 0
      %v2226 = vsel %vm312, %v2178, 0
      %v2229 = vsel %vm312, %v2179, 0
      %v2232 = vsel %vm312, %v2180, 0
      %v2235 = vsel %vm312, %v2181, 0
      %v2238 = vsel %vm312, %v2182, 0
      %v2241 = vsel %vm312, %v2183, 0
      %v2244 = vsel %vm312, %v2184, 0
      %v2247 = vsel %vm312, %v2185, 0
      %v2250 = vsel %vm312, %v2186, 0
      %v2252 = vsel %vm361, %v2198, 0
      %2254 = vmatprep.subr.mxu0 0.0
      %2255 = vmatpush1.msra.mxu0 0.0
      %2256 = vmatprep.subr.mxu0 0.0
      %2257 = vmatpush1.msra.mxu0 0.0
      %2258 = vmatprep.subr.mxu0 0.0
      %2259 = vmatpush1.msra.mxu0 0.0
      %2260 = vmatprep.subr.mxu0 0.0
      %2261 = vmatpush1.msra.mxu0 0.0
      %2262 = vmatprep.subr.mxu0 0.0
      %2263 = vmatpush1.msra.mxu0 0.0
      %2264 = vmatprep.subr.mxu0 0.0
      %2265 = vmatpush1.msra.mxu0 0.0
      %2266 = vmatprep.subr.mxu0 0.0
      %2267 = vmatpush1.msra.mxu0 0.0
      %2268 = vmatprep.subr.mxu0 0.0
      %2269 = vmatpush1.msra.mxu0 0.0
      %2270 = vmatprep.subr.mxu0 0.0
      %2271 = vmatpush1.msra.mxu0 0.0
      %2272 = vmatprep.subr.mxu0 0.0
      %2273 = vmatpush1.msra.mxu0 0.0
      %2274 = vmatprep.subr.mxu0 0.0
      %2275 = vmatpush1.msra.mxu0 %v2252
      %2276 = vmatprep.subr.mxu0 0.0
      %2277 = vmatpush1.msra.mxu0 %v2196
      %2278 = vmatprep.subr.mxu0 0.0
      %2279 = vmatpush1.msra.mxu0 %v2194
      %2280 = vmatprep.subr.mxu0 0.0
      %2281 = vmatpush1.msra.mxu0 %v2192
      %2282 = vmatprep.subr.mxu0 0.0
      %2283 = vmatpush1.msra.mxu0 %v2190
      %2284 = vmatprep.subr.mxu0 0.0
      %2285 = vmatpush1.msra.mxu0 %v2188
      %2286 = vmatprep.subr.mxu0 0.0
      %2287 = vmatpush2.msra.mxu0 0.0
      %2288 = vmatprep.subr.mxu0 0.0
      %2289 = vmatpush2.msra.mxu0 0.0
      %2290 = vmatprep.subr.mxu0 0.0
      %2291 = vmatpush2.msra.mxu0 0.0
      %2292 = vmatprep.subr.mxu0 0.0
      %2293 = vmatpush2.msra.mxu0 0.0
      %2294 = vmatprep.subr.mxu0 0.0
      %2295 = vmatpush2.msra.mxu0 0.0
      %2296 = vmatprep.subr.mxu0 0.0
      %2297 = vmatpush2.msra.mxu0 0.0
      %2298 = vmatprep.subr.mxu0 0.0
      %2299 = vmatpush2.msra.mxu0 0.0
      %2300 = vmatprep.subr.mxu0 0.0
      %2301 = vmatpush2.msra.mxu0 0.0
      %2302 = vmatprep.subr.mxu0 0.0
      %2303 = vmatpush2.msra.mxu0 0.0
      %2304 = vmatprep.subr.mxu0 0.0
      %2305 = vmatpush2.msra.mxu0 0.0
      %2306 = vmatprep.subr.mxu0 0.0
      %2307 = vmatpush2.msra.mxu0 0.0
      %2308 = vmatprep.subr.mxu0 0.0
      %2309 = vmatpush2.msra.mxu0 0.0
      %2310 = vmatprep.subr.mxu0 0.0
      %2311 = vmatpush2.msra.mxu0 0.0
      %2312 = vmatprep.subr.mxu0 0.0
      %2313 = vmatpush2.msra.mxu0 0.0
      %2314 = vmatprep.subr.mxu0 0.0
      %2315 = vmatpush2.msra.mxu0 0.0
      %2316 = vmatprep.subr.mxu0 0.0
      %2317 = vmatpush2.msra.mxu0 0.0
      %2318 = vmatprep.mubr.f32.mxu0 0.0
      %2319 = vmatmul.mubr.f32.gmra.mxu0 %v2205
      %v2320 = vpop.f32.mrf.mxu0
      %v2321 = vadd.f32 0.0, %v2320
      %v2322 = vpop.f32.mrf.mxu0
      %2323 = vmatprep.mubr.f32.mxu0 0.0
      %2324 = vmatmul.mubr.f32.gmra.mxu0 %v2208
      %v2325 = vpop.f32.mrf.mxu0
      %v2326 = vadd.f32 0.0, %v2325
      %v2327 = vpop.f32.mrf.mxu0
      %2328 = vmatprep.mubr.f32.mxu0 0.0
      %2329 = vmatmul.mubr.f32.gmra.mxu0 %v2211
      %v2330 = vpop.f32.mrf.mxu0
      %v2331 = vadd.f32 0.0, %v2330
      %v2332 = vpop.f32.mrf.mxu0
      %2333 = vmatprep.mubr.f32.mxu0 0.0
      %2334 = vmatmul.mubr.f32.gmra.mxu0 %v2214
      %v2335 = vpop.f32.mrf.mxu0
      %v2336 = vadd.f32 0.0, %v2335
      %v2337 = vpop.f32.mrf.mxu0
      %2338 = vmatprep.mubr.f32.mxu0 0.0
      %2339 = vmatmul.mubr.f32.gmra.mxu0 %v2217
      %v2340 = vpop.f32.mrf.mxu0
      %v2341 = vadd.f32 0.0, %v2340
      %v2342 = vpop.f32.mrf.mxu0
      %2343 = vmatprep.mubr.f32.mxu0 0.0
      %2344 = vmatmul.mubr.f32.gmra.mxu0 %v2220
      %v2345 = vpop.f32.mrf.mxu0
      %v2346 = vadd.f32 0.0, %v2345
      %v2347 = vpop.f32.mrf.mxu0
      %2348 = vmatprep.mubr.f32.mxu0 0.0
      %2349 = vmatmul.mubr.f32.gmra.mxu0 %v2223
      %v2350 = vpop.f32.mrf.mxu0
      %v2351 = vadd.f32 0.0, %v2350
      %v2352 = vpop.f32.mrf.mxu0
      %2353 = vmatprep.mubr.f32.mxu0 0.0
      %2354 = vmatmul.mubr.f32.gmra.mxu0 %v2226
      %v2355 = vpop.f32.mrf.mxu0
      %v2356 = vadd.f32 0.0, %v2355
      %v2357 = vpop.f32.mrf.mxu0
      %2358 = vmatprep.mubr.f32.mxu0 0.0
      %2359 = vmatmul.mubr.f32.gmra.mxu0 %v2229
      %v2360 = vpop.f32.mrf.mxu0
      %v2361 = vadd.f32 0.0, %v2360
      %v2362 = vpop.f32.mrf.mxu0
      %2363 = vmatprep.mubr.f32.mxu0 0.0
      %2364 = vmatmul.mubr.f32.gmra.mxu0 %v2232
      %v2365 = vpop.f32.mrf.mxu0
      %v2366 = vadd.f32 0.0, %v2365
      %v2367 = vpop.f32.mrf.mxu0
      %2368 = vmatprep.mubr.f32.mxu0 0.0
      %2369 = vmatmul.mubr.f32.gmra.mxu0 %v2235
      %v2370 = vpop.f32.mrf.mxu0
      %v2371 = vadd.f32 0.0, %v2370
      %v2372 = vpop.f32.mrf.mxu0
      %2373 = vmatprep.mubr.f32.mxu0 0.0
      %2374 = vmatmul.mubr.f32.gmra.mxu0 %v2238
      %v2375 = vpop.f32.mrf.mxu0
      %v2376 = vadd.f32 0.0, %v2375
      %v2377 = vpop.f32.mrf.mxu0
      %2378 = vmatprep.mubr.f32.mxu0 0.0
      %2379 = vmatmul.mubr.f32.gmra.mxu0 %v2241
      %v2380 = vpop.f32.mrf.mxu0
      %v2381 = vadd.f32 0.0, %v2380
      %v2382 = vpop.f32.mrf.mxu0
      %2383 = vmatprep.mubr.f32.mxu0 0.0
      %2384 = vmatmul.mubr.f32.gmra.mxu0 %v2244
      %v2385 = vpop.f32.mrf.mxu0
      %v2386 = vadd.f32 0.0, %v2385
      %v2387 = vpop.f32.mrf.mxu0
      %2388 = vmatprep.mubr.f32.mxu0 0.0
      %2389 = vmatmul.mubr.f32.gmra.mxu0 %v2247
      %v2390 = vpop.f32.mrf.mxu0
      %v2391 = vadd.f32 0.0, %v2390
      %v2392 = vpop.f32.mrf.mxu0
      %2393 = vmatprep.mubr.f32.mxu0 0.0
      %2394 = vmatmul.mubr.f32.gmra.mxu0 %v2250
      %v2395 = vpop.f32.mrf.mxu0
      %v2396 = vadd.f32 0.0, %v2395
      %v2397 = vpop.f32.mrf.mxu0
      %2398 = vdwg.mxu0
      %v2399 = vadd.f32 %v2154, %v2321
      %v2400 = vadd.f32 %v2155, %v2326
      %v2401 = vadd.f32 %v2156, %v2331
      %v2402 = vadd.f32 %v2157, %v2336
      %v2403 = vadd.f32 %v2158, %v2341
      %v2404 = vadd.f32 %v2159, %v2346
      %v2405 = vadd.f32 %v2160, %v2351
      %v2406 = vadd.f32 %v2161, %v2356
      %v2407 = vadd.f32 %v2162, %v2361
      %v2408 = vadd.f32 %v2163, %v2366
      %v2409 = vadd.f32 %v2164, %v2371
      %v2410 = vadd.f32 %v2165, %v2376
      %v2411 = vadd.f32 %v2166, %v2381
      %v2412 = vadd.f32 %v2167, %v2386
      %v2413 = vadd.f32 %v2168, %v2391
      %v2414 = vadd.f32 %v2169, %v2396
      %s2415 = scalar_lea.vmem %s1, 1152
      %v2416 = vld [vmem:[%s2415] sm:$0xff]
      %v2417 = vld [vmem:[%s2415 + $0x8] sm:$0xff]
      %v2418 = vld [vmem:[%s2415 + $0x10] sm:$0xff]
      %v2419 = vld [vmem:[%s2415 + $0x18] sm:$0xff]
      %v2420 = vld [vmem:[%s2415 + $0x20] sm:$0xff]
      %v2421 = vld [vmem:[%s2415 + $0x28] sm:$0xff]
      %v2422 = vld [vmem:[%s2415 + $0x30] sm:$0xff]
      %v2423 = vld [vmem:[%s2415 + $0x38] sm:$0xff]
      %v2424 = vld [vmem:[%s2415 + $0x40] sm:$0xff]
      %v2425 = vld [vmem:[%s2415 + $0x48] sm:$0xff]
      %v2426 = vld [vmem:[%s2415 + $0x50] sm:$0xff]
      %v2427 = vld [vmem:[%s2415 + $0x58] sm:$0xff]
      %v2428 = vld [vmem:[%s2415 + $0x60] sm:$0xff]
      %v2429 = vld [vmem:[%s2415 + $0x68] sm:$0xff]
      %v2430 = vld [vmem:[%s2415 + $0x70] sm:$0xff]
      %v2431 = vld [vmem:[%s2415 + $0x78] sm:$0xff]
      %2432 = vrot.lane.b32.xlu0 %v1440, 124
      %v2433 = vpop.permute.xlu0 %2432
      %2434 = vrot.lane.b32.xlu0 %v1441, 124
      %v2435 = vpop.permute.xlu0 %2434
      %2436 = vrot.lane.b32.xlu0 %v1442, 124
      %v2437 = vpop.permute.xlu0 %2436
      %2438 = vrot.lane.b32.xlu0 %v1443, 124
      %v2439 = vpop.permute.xlu0 %2438
      %2440 = vrot.lane.b32.xlu0 %v1444, 124
      %v2441 = vpop.permute.xlu0 %2440
      %2442 = vrot.lane.b32.xlu0 %v1445, 124
      %v2443 = vpop.permute.xlu0 %2442
      %v2450 = vsel %vm312, %v2416, 0
      %v2453 = vsel %vm312, %v2417, 0
      %v2456 = vsel %vm312, %v2418, 0
      %v2459 = vsel %vm312, %v2419, 0
      %v2462 = vsel %vm312, %v2420, 0
      %v2465 = vsel %vm312, %v2421, 0
      %v2468 = vsel %vm312, %v2422, 0
      %v2471 = vsel %vm312, %v2423, 0
      %v2474 = vsel %vm312, %v2424, 0
      %v2477 = vsel %vm312, %v2425, 0
      %v2480 = vsel %vm312, %v2426, 0
      %v2483 = vsel %vm312, %v2427, 0
      %v2486 = vsel %vm312, %v2428, 0
      %v2489 = vsel %vm312, %v2429, 0
      %v2492 = vsel %vm312, %v2430, 0
      %v2495 = vsel %vm312, %v2431, 0
      %v2497 = vsel %vm361, %v2443, 0
      %2499 = vmatprep.subr.mxu0 0.0
      %2500 = vmatpush1.msra.mxu0 0.0
      %2501 = vmatprep.subr.mxu0 0.0
      %2502 = vmatpush1.msra.mxu0 0.0
      %2503 = vmatprep.subr.mxu0 0.0
      %2504 = vmatpush1.msra.mxu0 0.0
      %2505 = vmatprep.subr.mxu0 0.0
      %2506 = vmatpush1.msra.mxu0 0.0
      %2507 = vmatprep.subr.mxu0 0.0
      %2508 = vmatpush1.msra.mxu0 0.0
      %2509 = vmatprep.subr.mxu0 0.0
      %2510 = vmatpush1.msra.mxu0 0.0
      %2511 = vmatprep.subr.mxu0 0.0
      %2512 = vmatpush1.msra.mxu0 0.0
      %2513 = vmatprep.subr.mxu0 0.0
      %2514 = vmatpush1.msra.mxu0 0.0
      %2515 = vmatprep.subr.mxu0 0.0
      %2516 = vmatpush1.msra.mxu0 0.0
      %2517 = vmatprep.subr.mxu0 0.0
      %2518 = vmatpush1.msra.mxu0 0.0
      %2519 = vmatprep.subr.mxu0 0.0
      %2520 = vmatpush1.msra.mxu0 %v2497
      %2521 = vmatprep.subr.mxu0 0.0
      %2522 = vmatpush1.msra.mxu0 %v2441
      %2523 = vmatprep.subr.mxu0 0.0
      %2524 = vmatpush1.msra.mxu0 %v2439
      %2525 = vmatprep.subr.mxu0 0.0
      %2526 = vmatpush1.msra.mxu0 %v2437
      %2527 = vmatprep.subr.mxu0 0.0
      %2528 = vmatpush1.msra.mxu0 %v2435
      %2529 = vmatprep.subr.mxu0 0.0
      %2530 = vmatpush1.msra.mxu0 %v2433
      %2531 = vmatprep.subr.mxu0 0.0
      %2532 = vmatpush2.msra.mxu0 0.0
      %2533 = vmatprep.subr.mxu0 0.0
      %2534 = vmatpush2.msra.mxu0 0.0
      %2535 = vmatprep.subr.mxu0 0.0
      %2536 = vmatpush2.msra.mxu0 0.0
      %2537 = vmatprep.subr.mxu0 0.0
      %2538 = vmatpush2.msra.mxu0 0.0
      %2539 = vmatprep.subr.mxu0 0.0
      %2540 = vmatpush2.msra.mxu0 0.0
      %2541 = vmatprep.subr.mxu0 0.0
      %2542 = vmatpush2.msra.mxu0 0.0
      %2543 = vmatprep.subr.mxu0 0.0
      %2544 = vmatpush2.msra.mxu0 0.0
      %2545 = vmatprep.subr.mxu0 0.0
      %2546 = vmatpush2.msra.mxu0 0.0
      %2547 = vmatprep.subr.mxu0 0.0
      %2548 = vmatpush2.msra.mxu0 0.0
      %2549 = vmatprep.subr.mxu0 0.0
      %2550 = vmatpush2.msra.mxu0 0.0
      %2551 = vmatprep.subr.mxu0 0.0
      %2552 = vmatpush2.msra.mxu0 0.0
      %2553 = vmatprep.subr.mxu0 0.0
      %2554 = vmatpush2.msra.mxu0 0.0
      %2555 = vmatprep.subr.mxu0 0.0
      %2556 = vmatpush2.msra.mxu0 0.0
      %2557 = vmatprep.subr.mxu0 0.0
      %2558 = vmatpush2.msra.mxu0 0.0
      %2559 = vmatprep.subr.mxu0 0.0
      %2560 = vmatpush2.msra.mxu0 0.0
      %2561 = vmatprep.subr.mxu0 0.0
      %2562 = vmatpush2.msra.mxu0 0.0
      %2563 = vmatprep.mubr.f32.mxu0 0.0
      %2564 = vmatmul.mubr.f32.gmra.mxu0 %v2450
      %v2565 = vpop.f32.mrf.mxu0
      %v2566 = vadd.f32 0.0, %v2565
      %v2567 = vpop.f32.mrf.mxu0
      %2568 = vmatprep.mubr.f32.mxu0 0.0
      %2569 = vmatmul.mubr.f32.gmra.mxu0 %v2453
      %v2570 = vpop.f32.mrf.mxu0
      %v2571 = vadd.f32 0.0, %v2570
      %v2572 = vpop.f32.mrf.mxu0
      %2573 = vmatprep.mubr.f32.mxu0 0.0
      %2574 = vmatmul.mubr.f32.gmra.mxu0 %v2456
      %v2575 = vpop.f32.mrf.mxu0
      %v2576 = vadd.f32 0.0, %v2575
      %v2577 = vpop.f32.mrf.mxu0
      %2578 = vmatprep.mubr.f32.mxu0 0.0
      %2579 = vmatmul.mubr.f32.gmra.mxu0 %v2459
      %v2580 = vpop.f32.mrf.mxu0
      %v2581 = vadd.f32 0.0, %v2580
      %v2582 = vpop.f32.mrf.mxu0
      %2583 = vmatprep.mubr.f32.mxu0 0.0
      %2584 = vmatmul.mubr.f32.gmra.mxu0 %v2462
      %v2585 = vpop.f32.mrf.mxu0
      %v2586 = vadd.f32 0.0, %v2585
      %v2587 = vpop.f32.mrf.mxu0
      %2588 = vmatprep.mubr.f32.mxu0 0.0
      %2589 = vmatmul.mubr.f32.gmra.mxu0 %v2465
      %v2590 = vpop.f32.mrf.mxu0
      %v2591 = vadd.f32 0.0, %v2590
      %v2592 = vpop.f32.mrf.mxu0
      %2593 = vmatprep.mubr.f32.mxu0 0.0
      %2594 = vmatmul.mubr.f32.gmra.mxu0 %v2468
      %v2595 = vpop.f32.mrf.mxu0
      %v2596 = vadd.f32 0.0, %v2595
      %v2597 = vpop.f32.mrf.mxu0
      %2598 = vmatprep.mubr.f32.mxu0 0.0
      %2599 = vmatmul.mubr.f32.gmra.mxu0 %v2471
      %v2600 = vpop.f32.mrf.mxu0
      %v2601 = vadd.f32 0.0, %v2600
      %v2602 = vpop.f32.mrf.mxu0
      %2603 = vmatprep.mubr.f32.mxu0 0.0
      %2604 = vmatmul.mubr.f32.gmra.mxu0 %v2474
      %v2605 = vpop.f32.mrf.mxu0
      %v2606 = vadd.f32 0.0, %v2605
      %v2607 = vpop.f32.mrf.mxu0
      %2608 = vmatprep.mubr.f32.mxu0 0.0
      %2609 = vmatmul.mubr.f32.gmra.mxu0 %v2477
      %v2610 = vpop.f32.mrf.mxu0
      %v2611 = vadd.f32 0.0, %v2610
      %v2612 = vpop.f32.mrf.mxu0
      %2613 = vmatprep.mubr.f32.mxu0 0.0
      %2614 = vmatmul.mubr.f32.gmra.mxu0 %v2480
      %v2615 = vpop.f32.mrf.mxu0
      %v2616 = vadd.f32 0.0, %v2615
      %v2617 = vpop.f32.mrf.mxu0
      %2618 = vmatprep.mubr.f32.mxu0 0.0
      %2619 = vmatmul.mubr.f32.gmra.mxu0 %v2483
      %v2620 = vpop.f32.mrf.mxu0
      %v2621 = vadd.f32 0.0, %v2620
      %v2622 = vpop.f32.mrf.mxu0
      %2623 = vmatprep.mubr.f32.mxu0 0.0
      %2624 = vmatmul.mubr.f32.gmra.mxu0 %v2486
      %v2625 = vpop.f32.mrf.mxu0
      %v2626 = vadd.f32 0.0, %v2625
      %v2627 = vpop.f32.mrf.mxu0
      %2628 = vmatprep.mubr.f32.mxu0 0.0
      %2629 = vmatmul.mubr.f32.gmra.mxu0 %v2489
      %v2630 = vpop.f32.mrf.mxu0
      %v2631 = vadd.f32 0.0, %v2630
      %v2632 = vpop.f32.mrf.mxu0
      %2633 = vmatprep.mubr.f32.mxu0 0.0
      %2634 = vmatmul.mubr.f32.gmra.mxu0 %v2492
      %v2635 = vpop.f32.mrf.mxu0
      %v2636 = vadd.f32 0.0, %v2635
      %v2637 = vpop.f32.mrf.mxu0
      %2638 = vmatprep.mubr.f32.mxu0 0.0
      %2639 = vmatmul.mubr.f32.gmra.mxu0 %v2495
      %v2640 = vpop.f32.mrf.mxu0
      %v2641 = vadd.f32 0.0, %v2640
      %v2642 = vpop.f32.mrf.mxu0
      %2643 = vdwg.mxu0
      %v2644 = vadd.f32 %v2399, %v2566
      %v2645 = vadd.f32 %v2400, %v2571
      %v2646 = vadd.f32 %v2401, %v2576
      %v2647 = vadd.f32 %v2402, %v2581
      %v2648 = vadd.f32 %v2403, %v2586
      %v2649 = vadd.f32 %v2404, %v2591
      %v2650 = vadd.f32 %v2405, %v2596
      %v2651 = vadd.f32 %v2406, %v2601
      %v2652 = vadd.f32 %v2407, %v2606
      %v2653 = vadd.f32 %v2408, %v2611
      %v2654 = vadd.f32 %v2409, %v2616
      %v2655 = vadd.f32 %v2410, %v2621
      %v2656 = vadd.f32 %v2411, %v2626
      %v2657 = vadd.f32 %v2412, %v2631
      %v2658 = vadd.f32 %v2413, %v2636
      %v2659 = vadd.f32 %v2414, %v2641
      %2661 = vset.pattern.permute.xlu0 0
      %2662 = vperm.xlu0 %2661, %v218
      %v2663 = vpop.permute.xlu0 %2662
      %2666 = vset.pattern.permute.xlu0 0
      %2667 = vperm.xlu0 %2666, %v219
      %v2668 = vpop.permute.xlu0 %2667
      %2671 = vset.pattern.permute.xlu0 0
      %2672 = vperm.xlu0 %2671, %v220
      %v2673 = vpop.permute.xlu0 %2672
      %2676 = vset.pattern.permute.xlu0 0
      %2677 = vperm.xlu0 %2676, %v221
      %v2678 = vpop.permute.xlu0 %2677
      %2681 = vset.pattern.permute.xlu0 0
      %2682 = vperm.xlu0 %2681, %v222
      %v2683 = vpop.permute.xlu0 %2682
      %2686 = vset.pattern.permute.xlu0 0
      %2687 = vperm.xlu0 %2686, %v223
      %v2688 = vpop.permute.xlu0 %2687
      %2691 = vset.pattern.permute.xlu0 0
      %2692 = vperm.xlu0 %2691, %v224
      %v2693 = vpop.permute.xlu0 %2692
      %2696 = vset.pattern.permute.xlu0 0
      %2697 = vperm.xlu0 %2696, %v225
      %v2698 = vpop.permute.xlu0 %2697
      %2701 = vset.pattern.permute.xlu0 0
      %2702 = vperm.xlu0 %2701, %v226
      %v2703 = vpop.permute.xlu0 %2702
      %2706 = vset.pattern.permute.xlu0 0
      %2707 = vperm.xlu0 %2706, %v227
      %v2708 = vpop.permute.xlu0 %2707
      %2711 = vset.pattern.permute.xlu0 0
      %2712 = vperm.xlu0 %2711, %v228
      %v2713 = vpop.permute.xlu0 %2712
      %2716 = vset.pattern.permute.xlu0 0
      %2717 = vperm.xlu0 %2716, %v229
      %v2718 = vpop.permute.xlu0 %2717
      %2721 = vset.pattern.permute.xlu0 0
      %2722 = vperm.xlu0 %2721, %v230
      %v2723 = vpop.permute.xlu0 %2722
      %2726 = vset.pattern.permute.xlu0 0
      %2727 = vperm.xlu0 %2726, %v231
      %v2728 = vpop.permute.xlu0 %2727
      %2731 = vset.pattern.permute.xlu0 0
      %2732 = vperm.xlu0 %2731, %v232
      %v2733 = vpop.permute.xlu0 %2732
      %2736 = vset.pattern.permute.xlu0 0
      %2737 = vperm.xlu0 %2736, %v233
      %v2738 = vpop.permute.xlu0 %2737
      %v2740 = vmul.f32 %v2644, %v2663
      %v2741 = vmul.f32 %v2645, %v2668
      %v2742 = vmul.f32 %v2646, %v2673
      %v2743 = vmul.f32 %v2647, %v2678
      %v2744 = vmul.f32 %v2648, %v2683
      %v2745 = vmul.f32 %v2649, %v2688
      %v2746 = vmul.f32 %v2650, %v2693
      %v2747 = vmul.f32 %v2651, %v2698
      %v2748 = vmul.f32 %v2652, %v2703
      %v2749 = vmul.f32 %v2653, %v2708
      %v2750 = vmul.f32 %v2654, %v2713
      %v2751 = vmul.f32 %v2655, %v2718
      %v2752 = vmul.f32 %v2656, %v2723
      %v2753 = vmul.f32 %v2657, %v2728
      %v2754 = vmul.f32 %v2658, %v2733
      %v2755 = vmul.f32 %v2659, %v2738
      %2757 = vset.pattern.permute.xlu0 0
      %2758 = vperm.xlu0 %2757, %v234
      %v2759 = vpop.permute.xlu0 %2758
      %2762 = vset.pattern.permute.xlu0 0
      %2763 = vperm.xlu0 %2762, %v235
      %v2764 = vpop.permute.xlu0 %2763
      %2767 = vset.pattern.permute.xlu0 0
      %2768 = vperm.xlu0 %2767, %v236
      %v2769 = vpop.permute.xlu0 %2768
      %2772 = vset.pattern.permute.xlu0 0
      %2773 = vperm.xlu0 %2772, %v237
      %v2774 = vpop.permute.xlu0 %2773
      %2777 = vset.pattern.permute.xlu0 0
      %2778 = vperm.xlu0 %2777, %v238
      %v2779 = vpop.permute.xlu0 %2778
      %2782 = vset.pattern.permute.xlu0 0
      %2783 = vperm.xlu0 %2782, %v239
      %v2784 = vpop.permute.xlu0 %2783
      %2787 = vset.pattern.permute.xlu0 0
      %2788 = vperm.xlu0 %2787, %v240
      %v2789 = vpop.permute.xlu0 %2788
      %2792 = vset.pattern.permute.xlu0 0
      %2793 = vperm.xlu0 %2792, %v241
      %v2794 = vpop.permute.xlu0 %2793
      %2797 = vset.pattern.permute.xlu0 0
      %2798 = vperm.xlu0 %2797, %v242
      %v2799 = vpop.permute.xlu0 %2798
      %2802 = vset.pattern.permute.xlu0 0
      %2803 = vperm.xlu0 %2802, %v243
      %v2804 = vpop.permute.xlu0 %2803
      %2807 = vset.pattern.permute.xlu0 0
      %2808 = vperm.xlu0 %2807, %v244
      %v2809 = vpop.permute.xlu0 %2808
      %2812 = vset.pattern.permute.xlu0 0
      %2813 = vperm.xlu0 %2812, %v245
      %v2814 = vpop.permute.xlu0 %2813
      %2817 = vset.pattern.permute.xlu0 0
      %2818 = vperm.xlu0 %2817, %v246
      %v2819 = vpop.permute.xlu0 %2818
      %2822 = vset.pattern.permute.xlu0 0
      %2823 = vperm.xlu0 %2822, %v247
      %v2824 = vpop.permute.xlu0 %2823
      %2827 = vset.pattern.permute.xlu0 0
      %2828 = vperm.xlu0 %2827, %v248
      %v2829 = vpop.permute.xlu0 %2828
      %2832 = vset.pattern.permute.xlu0 0
      %2833 = vperm.xlu0 %2832, %v249
      %v2834 = vpop.permute.xlu0 %2833
      %v2836 = vadd.f32 %v2740, %v2759
      %v2837 = vadd.f32 %v2741, %v2764
      %v2838 = vadd.f32 %v2742, %v2769
      %v2839 = vadd.f32 %v2743, %v2774
      %v2840 = vadd.f32 %v2744, %v2779
      %v2841 = vadd.f32 %v2745, %v2784
      %v2842 = vadd.f32 %v2746, %v2789
      %v2843 = vadd.f32 %v2747, %v2794
      %v2844 = vadd.f32 %v2748, %v2799
      %v2845 = vadd.f32 %v2749, %v2804
      %v2846 = vadd.f32 %v2750, %v2809
      %v2847 = vadd.f32 %v2751, %v2814
      %v2848 = vadd.f32 %v2752, %v2819
      %v2849 = vadd.f32 %v2753, %v2824
      %v2850 = vadd.f32 %v2754, %v2829
      %v2851 = vadd.f32 %v2755, %v2834
      %v2852 = vmul.f32 %v2836, 0.5
      %v2853 = vmul.f32 %v2837, 0.5
      %v2854 = vmul.f32 %v2838, 0.5
      %v2855 = vmul.f32 %v2839, 0.5
      %v2856 = vmul.f32 %v2840, 0.5
      %v2857 = vmul.f32 %v2841, 0.5
      %v2858 = vmul.f32 %v2842, 0.5
      %v2859 = vmul.f32 %v2843, 0.5
      %v2860 = vmul.f32 %v2844, 0.5
      %v2861 = vmul.f32 %v2845, 0.5
      %v2862 = vmul.f32 %v2846, 0.5
      %v2863 = vmul.f32 %v2847, 0.5
      %v2864 = vmul.f32 %v2848, 0.5
      %v2865 = vmul.f32 %v2849, 0.5
      %v2866 = vmul.f32 %v2850, 0.5
      %v2867 = vmul.f32 %v2851, 0.5
      %v2868 = vmul.f32 %v2836, 0.70710677
      %v2869 = vmul.f32 %v2837, 0.70710677
      %v2870 = vmul.f32 %v2838, 0.70710677
      %v2871 = vmul.f32 %v2839, 0.70710677
      %v2872 = vmul.f32 %v2840, 0.70710677
      %v2873 = vmul.f32 %v2841, 0.70710677
      %v2874 = vmul.f32 %v2842, 0.70710677
      %v2875 = vmul.f32 %v2843, 0.70710677
      %v2876 = vmul.f32 %v2844, 0.70710677
      %v2877 = vmul.f32 %v2845, 0.70710677
      %v2878 = vmul.f32 %v2846, 0.70710677
      %v2879 = vmul.f32 %v2847, 0.70710677
      %v2880 = vmul.f32 %v2848, 0.70710677
      %v2881 = vmul.f32 %v2849, 0.70710677
      %v2882 = vmul.f32 %v2850, 0.70710677
      %v2883 = vmul.f32 %v2851, 0.70710677
      %v2884 = verf.f32.pop %v2868
      %v2885 = verf.f32.pop %v2869
      %v2886 = verf.f32.pop %v2870
      %v2887 = verf.f32.pop %v2871
      %v2888 = verf.f32.pop %v2872
      %v2889 = verf.f32.pop %v2873
      %v2890 = verf.f32.pop %v2874
      %v2891 = verf.f32.pop %v2875
      %v2892 = verf.f32.pop %v2876
      %v2893 = verf.f32.pop %v2877
      %v2894 = verf.f32.pop %v2878
      %v2895 = verf.f32.pop %v2879
      %v2896 = verf.f32.pop %v2880
      %v2897 = verf.f32.pop %v2881
      %v2898 = verf.f32.pop %v2882
      %v2899 = verf.f32.pop %v2883
      %v2900 = vadd.f32 %v2884, 1.0
      %v2901 = vadd.f32 %v2885, 1.0
      %v2902 = vadd.f32 %v2886, 1.0
      %v2903 = vadd.f32 %v2887, 1.0
      %v2904 = vadd.f32 %v2888, 1.0
      %v2905 = vadd.f32 %v2889, 1.0
      %v2906 = vadd.f32 %v2890, 1.0
      %v2907 = vadd.f32 %v2891, 1.0
      %v2908 = vadd.f32 %v2892, 1.0
      %v2909 = vadd.f32 %v2893, 1.0
      %v2910 = vadd.f32 %v2894, 1.0
      %v2911 = vadd.f32 %v2895, 1.0
      %v2912 = vadd.f32 %v2896, 1.0
      %v2913 = vadd.f32 %v2897, 1.0
      %v2914 = vadd.f32 %v2898, 1.0
      %v2915 = vadd.f32 %v2899, 1.0
      %v2916 = vmul.f32 %v2852, %v2900
      %v2917 = vmul.f32 %v2853, %v2901
      %v2918 = vmul.f32 %v2854, %v2902
      %v2919 = vmul.f32 %v2855, %v2903
      %v2920 = vmul.f32 %v2856, %v2904
      %v2921 = vmul.f32 %v2857, %v2905
      %v2922 = vmul.f32 %v2858, %v2906
      %v2923 = vmul.f32 %v2859, %v2907
      %v2924 = vmul.f32 %v2860, %v2908
      %v2925 = vmul.f32 %v2861, %v2909
      %v2926 = vmul.f32 %v2862, %v2910
      %v2927 = vmul.f32 %v2863, %v2911
      %v2928 = vmul.f32 %v2864, %v2912
      %v2929 = vmul.f32 %v2865, %v2913
      %v2930 = vmul.f32 %v2866, %v2914
      %v2931 = vmul.f32 %v2867, %v2915
      %vm2932 = vcmask 72704
      %2933 = vst.msk [vmem:[%s217] sm:$0xff] %vm2932, %v2916
      %2934 = vst.msk [vmem:[%s217 + $0x8] sm:$0xff] %vm2932, %v2917
      %2935 = vst.msk [vmem:[%s217 + $0x10] sm:$0xff] %vm2932, %v2918
      %2936 = vst.msk [vmem:[%s217 + $0x18] sm:$0xff] %vm2932, %v2919
      %2937 = vst.msk [vmem:[%s217 + $0x20] sm:$0xff] %vm2932, %v2920
      %2938 = vst.msk [vmem:[%s217 + $0x28] sm:$0xff] %vm2932, %v2921
      %2939 = vst.msk [vmem:[%s217 + $0x30] sm:$0xff] %vm2932, %v2922
      %2940 = vst.msk [vmem:[%s217 + $0x38] sm:$0xff] %vm2932, %v2923
      %2941 = vst.msk [vmem:[%s217 + $0x40] sm:$0xff] %vm2932, %v2924
      %2942 = vst.msk [vmem:[%s217 + $0x48] sm:$0xff] %vm2932, %v2925
      %2943 = vst.msk [vmem:[%s217 + $0x50] sm:$0xff] %vm2932, %v2926
      %2944 = vst.msk [vmem:[%s217 + $0x58] sm:$0xff] %vm2932, %v2927
      %2945 = vst.msk [vmem:[%s217 + $0x60] sm:$0xff] %vm2932, %v2928
      %2946 = vst.msk [vmem:[%s217 + $0x68] sm:$0xff] %vm2932, %v2929
      %2947 = vst.msk [vmem:[%s217 + $0x70] sm:$0xff] %vm2932, %v2930
      %2948 = vst.msk [vmem:[%s217 + $0x78] sm:$0xff] %vm2932, %v2931
      %p2949 = scmp.lt.s32.totalorder %s19, 1
      %s2950 = scalar_select %p2949, %s19, 1
      %p2951 = scmp.lt.s32.totalorder %s20, 0
      %s2952 = scalar_select %p2951, %s20, 0
      %s2953 = smul.addr %s2950, 16
      %s2954 = sadd.s32 %s2952, %s2953
      %s2955 = smul.addr %s2954, 8
      %s2956 = scalar_lea.vmem %s4, %s2955
      // Predicated region
      $region37: #{cnn_block_forward.3} parent=35 // pred_check
        %p2957 = pneg %p136
      $region38: #{cnn_block_forward.3} parent=35 // pred_check_branch
        %2959 = sbr.rel (%p2957) target = $region40
      $region39: #{cnn_block_forward.3} parent=35 // pred_region
        _
      $region40: #{cnn_block_forward.3} parent=35 // pred_fallthru
        _
    $region36: #{cnn_block_forward.3} parent=5 // pred_fallthru
      _
    %p2960 = scmp.le.s32.totalorder 2, %s10
    // Predicated region
    $region41: #{cnn_block_forward.3} parent=5 // pred_check
      %p2961 = pneg %p2960
    $region42: #{cnn_block_forward.3} parent=5 // pred_check_branch
      %2963 = sbr.rel (%p2961) target = $region44
    $region43: #{cnn_block_forward.3} parent=5 // pred_region
      %s2964 = ssub.s32 %s10, 2
      // Predicated region
      $region45: #{cnn_block_forward.3} parent=43 // pred_check
        %p2965 = pneg %p142
      $region46: #{cnn_block_forward.3} parent=43 // pred_check_branch
        %2967 = sbr.rel (%p2965) target = $region48
      $region47: #{cnn_block_forward.3} parent=43 // pred_region
        %p2968 = scmp.lt.s32.totalorder %s21, 1
        %s2969 = scalar_select %p2968, %s21, 1
        %p2970 = scmp.lt.s32.totalorder %s22, 0
        %s2971 = scalar_select %p2970, %s22, 0
        %s2972 = smul.addr %s2969, 16
        %s2973 = sadd.s32 %s2971, %s2972
        %s2974 = smul.addr %s2973, 8
        %s2975 = scalar_lea.vmem %s4, %s2974
      $region48: #{cnn_block_forward.3} parent=43 // pred_fallthru
        _
    $region44: #{cnn_block_forward.3} parent=5 // pred_fallthru
      _
  $region6: #{cnn_block_forward.3} parent=0 // loop_footer
    %s14 = sadd.s32 1, %s10
  $region7: #{cnn_block_forward.3} parent=0 // loop_footer_branch
    %9 = sbr.rel target = $region3
  $region8: #{cnn_block_forward.3} parent=0 // loop_exit
    _

</llo_original>
